<compile_context>
chip_gen: v7x
topology: tpu7x:2x2x1
jax: 0.10.0
libtpu: 0.0.40
codegen_flags: <defaults>
</compile_context>

<pallas_src>
import functools

import jax
import jax.numpy as jnp
from jax.experimental import pallas as pl
from jax.experimental.pallas import tpu as pltpu


# -----------------------------------------------------------------------------
# Model config
# -----------------------------------------------------------------------------
C_IN = 3
C_FEAT = 16
N_ANCHOR = 3
N_CLASS = 5          # 4 foreground classes + background
HIDDEN = 32
ROI_SIZE = 7
FEAT_STRIDE = 1.0
N_ROIS = 32          # proposals kept (stand-in for n_post_nms)
KH = KW = 3


# -----------------------------------------------------------------------------
# Kernel 1: fused extractor conv3x3 + RPN conv3x3 + 1x1 [loc|score] heads.
# Grid is over the batch; everything for one image lives in VMEM.
# -----------------------------------------------------------------------------
def _backbone_rpn_kernel(x_ref, ew_ref, eb_ref, cw_ref, cb_ref, hw_ref, hb_ref,
                         h_out_ref, rpn_out_ref, xp_scr, hp_scr, *, H, W):
    Cin = x_ref.shape[-1]
    C = cw_ref.shape[-1]

    # ---- extractor: 3x3 "same" conv + bias + ReLU --------------------------
    # Zero-padded halo written in-kernel (no HBM padded copy).
    xp_scr[...] = jnp.zeros_like(xp_scr)
    xp_scr[1:H + 1, 1:W + 1, :] = x_ref[0]
    xp = xp_scr[...]                                          # (H+2, W+2, Cin)
    cols = [xp[i:i + H, j:j + W, :].reshape(H * W, Cin)
            for i in range(KH) for j in range(KW)]
    slab = jnp.concatenate(cols, axis=-1).astype(jnp.bfloat16)   # (HW, 9*Cin)
    h = jnp.dot(slab, ew_ref[...],
                preferred_element_type=jnp.float32) + eb_ref[...]
    h = jnp.maximum(h, 0.0)                                      # (HW, C) f32
    h_out_ref[0] = h.astype(h_out_ref.dtype)                     # bf16 out

    # ---- RPN: 3x3 conv + ReLU fused with the 1x1 [loc|score] heads ---------
    hp_scr[...] = jnp.zeros_like(hp_scr)
    hp_scr[1:H + 1, 1:W + 1, :] = h.reshape(H, W, C)
    hp = hp_scr[...]                                             # (H+2, W+2, C)
    cols2 = [hp[i:i + H, j:j + W, :].reshape(H * W, C)
             for i in range(KH) for j in range(KW)]
    slab2 = jnp.concatenate(cols2, axis=-1).astype(jnp.bfloat16)  # (HW, 9*C)
    mid = jnp.dot(slab2, cw_ref[...],
                  preferred_element_type=jnp.float32) + cb_ref[...]
    mid = jnp.maximum(mid, 0.0).astype(jnp.bfloat16)              # (HW, C)
    out = jnp.dot(mid, hw_ref[...],
                  preferred_element_type=jnp.float32) + hb_ref[...]
    rpn_out_ref[0] = out.astype(rpn_out_ref.dtype)                # (HW, 18)


def backbone_rpn(x_nhwc, pp):
    """x: (N,H,W,Cin) f32 -> (h (N,H*W,C) bf16, rpn_out (N,H*W,18) f32)."""
    N, H, W, Cin = x_nhwc.shape
    C = C_FEAT
    Hp, Wp = H + 2, W + 2
    No = pp["rpn_head_w"].shape[1]

    h_flat, rpn_flat = pl.pallas_call(
        functools.partial(_backbone_rpn_kernel, H=H, W=W),
        out_shape=(
            jax.ShapeDtypeStruct((N, H * W, C), jnp.bfloat16),
            jax.ShapeDtypeStruct((N, H * W, No), jnp.float32),
        ),
        grid=(N,),
        in_specs=[
            pl.BlockSpec((1, H, W, Cin), lambda n: (n, 0, 0, 0)),     # image
            pl.BlockSpec((KH * KW * Cin, C), lambda n: (0, 0)),       # ext w
            pl.BlockSpec((1, C), lambda n: (0, 0)),                   # ext b
            pl.BlockSpec((KH * KW * C, C), lambda n: (0, 0)),         # rpn conv w
            pl.BlockSpec((1, C), lambda n: (0, 0)),                   # rpn conv b
            pl.BlockSpec((C, No), lambda n: (0, 0)),                  # [loc|score] w
            pl.BlockSpec((1, No), lambda n: (0, 0)),                  # [loc|score] b
        ],
        out_specs=(
            pl.BlockSpec((1, H * W, C), lambda n: (n, 0, 0)),
            pl.BlockSpec((1, H * W, No), lambda n: (n, 0, 0)),
        ),
        scratch_shapes=[
            pltpu.VMEM((Hp, Wp, Cin), jnp.float32),   # padded image
            pltpu.VMEM((Hp, Wp, C), jnp.float32),     # padded extractor output
        ],
        compiler_params=pltpu.CompilerParams(dimension_semantics=("parallel",)),
    )(x_nhwc.astype(jnp.float32),
      pp["ext_w"], pp["ext_b"],
      pp["rpn_conv_w"], pp["rpn_conv_b"],
      pp["rpn_head_w"], pp["rpn_head_b"])
    return h_flat, rpn_flat


# -----------------------------------------------------------------------------
# Kernel 2: fused head = fc1+ReLU -> fc2+ReLU -> fused [cls_loc | score].
# Gridless pallas_call; everything fits in VMEM (R = 32 ROIs).
# -----------------------------------------------------------------------------
def _head_kernel(p_ref, w1_ref, b1_ref, w2_ref, b2_ref, w3_ref, b3_ref, o_ref):
    h1 = jnp.dot(p_ref[...], w1_ref[...],
                 preferred_element_type=jnp.float32) + b1_ref[...]
    h1 = jnp.maximum(h1, 0.0).astype(jnp.bfloat16)
    h2 = jnp.dot(h1, w2_ref[...],
                 preferred_element_type=jnp.float32) + b2_ref[...]
    h2 = jnp.maximum(h2, 0.0).astype(jnp.bfloat16)
    out = jnp.dot(h2, w3_ref[...],
                  preferred_element_type=jnp.float32) + b3_ref[...]
    o_ref[...] = out


def head_fused(pooled_bf16, pp):
    R = pooled_bf16.shape[0]
    N3 = pp["head_w"].shape[1]
    return pl.pallas_call(
        _head_kernel,
        out_shape=jax.ShapeDtypeStruct((R, N3), jnp.float32),
    )(pooled_bf16, pp["fc1_w"], pp["fc1_b"], pp["fc2_w"], pp["fc2_b"],
      pp["head_w"], pp["head_b"])


# -----------------------------------------------------------------------------
# Anchor / bbox utilities (plain JAX glue)
# -----------------------------------------------------------------------------
def generate_anchor_base(base_size=4.0, ratios=(0.5, 1.0, 2.0), scales=(2.0,)):
    py = px = base_size / 2.0
    rows = []
    for r in ratios:
        for s in scales:
            h = base_size * s * (r ** 0.5)
            w = base_size * s * ((1.0 / r) ** 0.5)
            rows.append([py - h / 2.0, px - w / 2.0, py + h / 2.0, px + w / 2.0])
    return jnp.asarray(rows, jnp.float32)


def enumerate_shifted_anchors(anchor_base, feat_stride, H, W):
    sy = jnp.arange(H, dtype=jnp.float32) * feat_stride
    sx = jnp.arange(W, dtype=jnp.float32) * feat_stride
    sy, sx = jnp.meshgrid(sy, sx, indexing="ij")
    shift = jnp.stack([sy.ravel(), sx.ravel(), sy.ravel(), sx.ravel()], axis=1)
    anchor = shift[:, None, :] + anchor_base[None, :, :]
    return anchor.reshape(H * W * anchor_base.shape[0], 4)


def loc2bbox(src_bbox, loc):
    sh = src_bbox[:, 2] - src_bbox[:, 0]
    sw = src_bbox[:, 3] - src_bbox[:, 1]
    scy = src_bbox[:, 0] + 0.5 * sh
    scx = src_bbox[:, 1] + 0.5 * sw
    dy, dx, dh, dw = loc[:, 0], loc[:, 1], loc[:, 2], loc[:, 3]
    cy = dy * sh + scy
    cx = dx * sw + scx
    h = jnp.exp(dh) * sh
    w = jnp.exp(dw) * sw
    return jnp.stack(
        [cy - 0.5 * h, cx - 0.5 * w, cy + 0.5 * h, cx + 0.5 * w], axis=1)


# -----------------------------------------------------------------------------
# Parameter init (raw, torch-layout) + one-time kernel-layout preparation
# -----------------------------------------------------------------------------
def init_params(key):
    ks = jax.random.split(key, 8)

    def nrm(k, shape, s):
        return (s * jax.random.normal(k, shape)).astype(jnp.float32)

    return {
        # extractor: single 3x3 conv + ReLU (synthetic stand-in for VGG trunk)
        "ext_w": nrm(ks[0], (C_FEAT, C_IN, 3, 3), 0.1),
        "ext_b": jnp.zeros((C_FEAT,), jnp.float32),
        # RPN
        "rpn_conv_w": nrm(ks[1], (C_FEAT, C_FEAT, 3, 3), 0.1),
        "rpn_conv_b": jnp.zeros((C_FEAT,), jnp.float32),
        "rpn_loc_w": nrm(ks[2], (N_ANCHOR * 4, C_FEAT, 1, 1), 0.1),
        "rpn_loc_b": jnp.zeros((N_ANCHOR * 4,), jnp.float32),
        "rpn_score_w": nrm(ks[3], (N_ANCHOR * 2, C_FEAT, 1, 1), 0.1),
        "rpn_score_b": jnp.zeros((N_ANCHOR * 2,), jnp.float32),
        # head (RoI pooled features -> two FC -> cls_loc / score)
        "fc1_w": nrm(ks[4], (ROI_SIZE * ROI_SIZE * C_FEAT, HIDDEN), 0.05),
        "fc1_b": jnp.zeros((HIDDEN,), jnp.float32),
        "fc2_w": nrm(ks[5], (HIDDEN, HIDDEN), 0.05),
        "fc2_b": jnp.zeros((HIDDEN,), jnp.float32),
        "cls_loc_w": nrm(ks[6], (HIDDEN, N_CLASS * 4), 0.01),
        "cls_loc_b": jnp.zeros((N_CLASS * 4,), jnp.float32),
        "score_w": nrm(ks[7], (HIDDEN, N_CLASS), 0.01),
        "score_b": jnp.zeros((N_CLASS,), jnp.float32),
        "anchor_base": generate_anchor_base(),
    }


def prepare_params(params):
    """One-time preprocessing of torch-layout params into kernel layout.

    Hoisted out of the jitted forward (perf feedback): transposes, bf16 casts,
    loc/score & cls_loc/score concatenations and bias reshapes happen once."""
    C = C_FEAT
    ext_w = jnp.transpose(params["ext_w"], (2, 3, 1, 0)).reshape(KH * KW * C_IN, C)
    rpn_cw = jnp.transpose(params["rpn_conv_w"], (2, 3, 1, 0)).reshape(KH * KW * C, C)
    w_loc = params["rpn_loc_w"].reshape(N_ANCHOR * 4, C).T        # (C, 12)
    w_sc = params["rpn_score_w"].reshape(N_ANCHOR * 2, C).T       # (C, 6)
    rpn_hw = jnp.concatenate([w_loc, w_sc], axis=1)               # (C, 18)
    rpn_hb = jnp.concatenate([params["rpn_loc_b"], params["rpn_score_b"]])
    head_w = jnp.concatenate([params["cls_loc_w"], params["score_w"]], axis=1)
    head_b = jnp.concatenate([params["cls_loc_b"], params["score_b"]])
    return {
        "ext_w": ext_w.astype(jnp.bfloat16),
        "ext_b": params["ext_b"].reshape(1, C).astype(jnp.float32),
        "rpn_conv_w": rpn_cw.astype(jnp.bfloat16),
        "rpn_conv_b": params["rpn_conv_b"].reshape(1, C).astype(jnp.float32),
        "rpn_head_w": rpn_hw.astype(jnp.bfloat16),
        "rpn_head_b": rpn_hb.reshape(1, -1).astype(jnp.float32),
        "fc1_w": params["fc1_w"].astype(jnp.bfloat16),
        "fc1_b": params["fc1_b"].reshape(1, -1).astype(jnp.float32),
        "fc2_w": params["fc2_w"].astype(jnp.bfloat16),
        "fc2_b": params["fc2_b"].reshape(1, -1).astype(jnp.float32),
        "head_w": head_w.astype(jnp.bfloat16),
        "head_b": head_b.reshape(1, -1).astype(jnp.float32),
        "anchor_base": params["anchor_base"],
    }


# -----------------------------------------------------------------------------
# RPN proposal layer (plain JAX glue on the fused kernel's output)
# -----------------------------------------------------------------------------
def rpn_forward(rpn_flat, H, W, img_size, scale, pp):
    Nb = rpn_flat.shape[0]
    # NHWC channel order already matches torch's permute(0,2,3,1).view(n,-1,4).
    rpn_locs = rpn_flat[..., : N_ANCHOR * 4].reshape(Nb, H * W * N_ANCHOR, 4)
    rpn_scores = rpn_flat[..., N_ANCHOR * 4:].reshape(Nb, H * W * N_ANCHOR, 2)

    anchor = enumerate_shifted_anchors(pp["anchor_base"], FEAT_STRIDE, H, W)

    # Proposal layer (batch size 1, matching simple-faster-rcnn):
    fg_prob = jax.nn.softmax(rpn_scores, axis=-1)[0, :, 1]
    roi = loc2bbox(anchor, rpn_locs[0])
    roi = jnp.stack(
        [
            jnp.clip(roi[:, 0], 0.0, img_size[0]),
            jnp.clip(roi[:, 1], 0.0, img_size[1]),
            jnp.clip(roi[:, 2], 0.0, img_size[0]),
            jnp.clip(roi[:, 3], 0.0, img_size[1]),
        ],
        axis=1,
    )
    # TODO(synk): proposal NMS + min_size*scale filtering have no clean static
    # Pallas/JAX equivalent here; we keep the top-K proposals by objectness.
    _, order = jax.lax.top_k(fg_prob, N_ROIS)
    rois = roi[order]
    roi_indices = jnp.zeros((N_ROIS,), jnp.int32)
    return rpn_locs, rpn_scores, rois, roi_indices, anchor


# -----------------------------------------------------------------------------
# Head (RoI pooling gather in XLA on bf16 features, FC stack in one kernel)
# -----------------------------------------------------------------------------
def head_forward(h_flat, H, W, rois, roi_indices, pp):
    Nb, HW, C = h_flat.shape
    R = rois.shape[0]
    spatial_scale = 1.0 / FEAT_STRIDE

    # TODO(synk): RoIPool max-pooling replaced by nearest-neighbor sampling at
    # the 7x7 bin centers (static-shape gather).
    y1 = rois[:, 0] * spatial_scale
    x1 = rois[:, 1] * spatial_scale
    y2 = rois[:, 2] * spatial_scale
    x2 = rois[:, 3] * spatial_scale
    centers = (jnp.arange(ROI_SIZE, dtype=jnp.float32) + 0.5) / ROI_SIZE
    ys = y1[:, None] + (y2 - y1)[:, None] * centers[None, :]        # (R, P)
    xs = x1[:, None] + (x2 - x1)[:, None] * centers[None, :]        # (R, P)
    yi = jnp.clip(jnp.floor(ys).astype(jnp.int32), 0, H - 1)
    xi = jnp.clip(jnp.floor(xs).astype(jnp.int32), 0, W - 1)
    flat_idx = (roi_indices[:, None, None] * (H * W)
                + yi[:, :, None] * W + xi[:, None, :])              # (R, P, P)
    feats = jnp.take(h_flat.reshape(Nb * HW, C),
                     flat_idx.reshape(R * ROI_SIZE * ROI_SIZE), axis=0)
    pooled = feats.reshape(R, ROI_SIZE * ROI_SIZE * C)              # bf16

    out = head_fused(pooled, pp)
    roi_cls_locs = out[:, : N_CLASS * 4]
    roi_scores = out[:, N_CLASS * 4:]
    return roi_cls_locs, roi_scores


# -----------------------------------------------------------------------------
# FasterRCNN.forward
# -----------------------------------------------------------------------------
def faster_rcnn_forward(pp, x_nchw, scale=1.0):
    img_size = x_nchw.shape[2:]                     # (H, W), like torch
    x = jnp.transpose(x_nchw, (0, 2, 3, 1))         # NCHW -> NHWC
    N, H, W, _ = x.shape
    h_flat, rpn_flat = backbone_rpn(x, pp)          # fused extractor + RPN
    rpn_locs, rpn_scores, rois, roi_indices, _anchor = rpn_forward(
        rpn_flat, H, W, img_size, scale, pp)
    roi_cls_locs, roi_scores = head_forward(h_flat, H, W, rois, roi_indices, pp)
    return roi_cls_locs, roi_scores, rois, roi_indices


if __name__ == "__main__":
    key = jax.random.PRNGKey(0)
    pkey, xkey = jax.random.split(key)
    raw_params = init_params(pkey)
    pp = prepare_params(raw_params)                 # one-time weight prep
    x = jax.random.normal(xkey, (1, C_IN, 16, 16), dtype=jnp.float32)

    fwd = jax.jit(faster_rcnn_forward)
    roi_cls_locs, roi_scores, rois, roi_indices = fwd(pp, x)
    jax.block_until_ready((roi_cls_locs, roi_scores, rois, roi_indices))

    assert roi_cls_locs.shape == (N_ROIS, N_CLASS * 4)
    assert roi_scores.shape == (N_ROIS, N_CLASS)
    assert rois.shape == (N_ROIS, 4)
    assert roi_indices.shape == (N_ROIS,)
    print("KERNEL_OK")
</pallas_src>

<mosaic_0001>
module attributes {stable_mosaic.version = 11 : i64} {
  func.func @_backbone_rpn_kernel(%arg0: i32, %arg1: memref<1x16x16x3xf32, #tpu.memory_space<vmem>>, %arg2: memref<27x16xbf16, #tpu.memory_space<vmem>>, %arg3: memref<1x16xf32, #tpu.memory_space<vmem>>, %arg4: memref<144x16xbf16, #tpu.memory_space<vmem>>, %arg5: memref<1x16xf32, #tpu.memory_space<vmem>>, %arg6: memref<16x18xbf16, #tpu.memory_space<vmem>>, %arg7: memref<1x18xf32, #tpu.memory_space<vmem>>, %arg8: memref<1x256x16xbf16, #tpu.memory_space<vmem>>, %arg9: memref<1x256x18xf32, #tpu.memory_space<vmem>>, %arg10: memref<18x18x3xf32, #tpu.memory_space<vmem>>, %arg11: memref<18x18x16xf32, #tpu.memory_space<vmem>>) attributes {dimension_semantics = [#tpu.dimension_semantics<parallel>], iteration_bounds = array<i64: 1>, scalar_prefetch = 0 : i64, scratch_operands = 2 : i64, tpu.core_type = #tpu.core_type<tc>, window_params = [{transform_indices = @transform_0, window_bounds = array<i64: 1, 16, 16, 3>}, {pipeline_mode = #tpu.pipeline_mode<synchronous>, transform_indices = @transform_1, window_bounds = array<i64: 27, 16>}, {pipeline_mode = #tpu.pipeline_mode<synchronous>, transform_indices = @transform_2, window_bounds = array<i64: 1, 16>}, {pipeline_mode = #tpu.pipeline_mode<synchronous>, transform_indices = @transform_3, window_bounds = array<i64: 144, 16>}, {pipeline_mode = #tpu.pipeline_mode<synchronous>, transform_indices = @transform_4, window_bounds = array<i64: 1, 16>}, {pipeline_mode = #tpu.pipeline_mode<synchronous>, transform_indices = @transform_5, window_bounds = array<i64: 16, 18>}, {pipeline_mode = #tpu.pipeline_mode<synchronous>, transform_indices = @transform_6, window_bounds = array<i64: 1, 18>}, {transform_indices = @transform_7, window_bounds = array<i64: 1, 256, 16>}, {transform_indices = @transform_8, window_bounds = array<i64: 1, 256, 18>}]} {
    %cst = arith.constant 0.000000e+00 : f32
    %0 = vector.broadcast %cst : f32 to vector<18x18x3xf32>
    %c0 = arith.constant 0 : index
    %c0_0 = arith.constant 0 : index
    %c0_1 = arith.constant 0 : index
    %1 = vector.load %arg10[%c0, %c0_0, %c0_1] : memref<18x18x3xf32, #tpu.memory_space<vmem>>, vector<18x18x3xf32>
    tpu.vector_store %arg10[%c0, %c0_0, %c0_1], %0 {strides = array<i32>} : memref<18x18x3xf32, #tpu.memory_space<vmem>>, vector<18x18x3xf32>,
    %c0_2 = arith.constant 0 : index
    %c0_3 = arith.constant 0 : index
    %c0_4 = arith.constant 0 : index
    %c0_5 = arith.constant 0 : index
    %2 = vector.load %arg1[%c0_2, %c0_3, %c0_4, %c0_5] : memref<1x16x16x3xf32, #tpu.memory_space<vmem>>, vector<1x16x16x3xf32>
    %3 = vector.shape_cast %2 : vector<1x16x16x3xf32> to vector<16x16x3xf32>
    %c1 = arith.constant 1 : index
    %c1_6 = arith.constant 1 : index
    %c0_7 = arith.constant 0 : index
    %4 = vector.load %arg10[%c1, %c1_6, %c0_7] : memref<18x18x3xf32, #tpu.memory_space<vmem>>, vector<16x16x3xf32>
    tpu.vector_store %arg10[%c1, %c1_6, %c0_7], %3 {strides = array<i32>} : memref<18x18x3xf32, #tpu.memory_space<vmem>>, vector<16x16x3xf32>,
    %c0_8 = arith.constant 0 : index
    %c0_9 = arith.constant 0 : index
    %c0_10 = arith.constant 0 : index
    %5 = vector.load %arg10[%c0_8, %c0_9, %c0_10] : memref<18x18x3xf32, #tpu.memory_space<vmem>>, vector<18x18x3xf32>
    %6 = vector.extract_strided_slice %5 {offsets = [0, 0, 0], sizes = [16, 16, 3], strides = [1, 1, 1]} : vector<18x18x3xf32> to vector<16x16x3xf32>
    %7 = vector.shape_cast %6 : vector<16x16x3xf32> to vector<256x3xf32>
    %8 = vector.extract_strided_slice %5 {offsets = [0, 1, 0], sizes = [16, 16, 3], strides = [1, 1, 1]} : vector<18x18x3xf32> to vector<16x16x3xf32>
    %9 = vector.shape_cast %8 : vector<16x16x3xf32> to vector<256x3xf32>
    %10 = vector.extract_strided_slice %5 {offsets = [0, 2, 0], sizes = [16, 16, 3], strides = [1, 1, 1]} : vector<18x18x3xf32> to vector<16x16x3xf32>
    %11 = vector.shape_cast %10 : vector<16x16x3xf32> to vector<256x3xf32>
    %12 = vector.extract_strided_slice %5 {offsets = [1, 0, 0], sizes = [16, 16, 3], strides = [1, 1, 1]} : vector<18x18x3xf32> to vector<16x16x3xf32>
    %13 = vector.shape_cast %12 : vector<16x16x3xf32> to vector<256x3xf32>
    %14 = vector.extract_strided_slice %5 {offsets = [1, 1, 0], sizes = [16, 16, 3], strides = [1, 1, 1]} : vector<18x18x3xf32> to vector<16x16x3xf32>
    %15 = vector.shape_cast %14 : vector<16x16x3xf32> to vector<256x3xf32>
    %16 = vector.extract_strided_slice %5 {offsets = [1, 2, 0], sizes = [16, 16, 3], strides = [1, 1, 1]} : vector<18x18x3xf32> to vector<16x16x3xf32>
    %17 = vector.shape_cast %16 : vector<16x16x3xf32> to vector<256x3xf32>
    %18 = vector.extract_strided_slice %5 {offsets = [2, 0, 0], sizes = [16, 16, 3], strides = [1, 1, 1]} : vector<18x18x3xf32> to vector<16x16x3xf32>
    %19 = vector.shape_cast %18 : vector<16x16x3xf32> to vector<256x3xf32>
    %20 = vector.extract_strided_slice %5 {offsets = [2, 1, 0], sizes = [16, 16, 3], strides = [1, 1, 1]} : vector<18x18x3xf32> to vector<16x16x3xf32>
    %21 = vector.shape_cast %20 : vector<16x16x3xf32> to vector<256x3xf32>
    %22 = vector.extract_strided_slice %5 {offsets = [2, 2, 0], sizes = [16, 16, 3], strides = [1, 1, 1]} : vector<18x18x3xf32> to vector<16x16x3xf32>
    %23 = vector.shape_cast %22 : vector<16x16x3xf32> to vector<256x3xf32>
    %24 = tpu.concatenate %7, %9, %11, %13, %15, %17, %19, %21, %23 in 1 : vector<256x3xf32>, vector<256x3xf32>, vector<256x3xf32>, vector<256x3xf32>, vector<256x3xf32>, vector<256x3xf32>, vector<256x3xf32>, vector<256x3xf32>, vector<256x3xf32> -> vector<256x27xf32>
    %25 = arith.truncf %24 : vector<256x27xf32> to vector<256x27xbf16>
    %c0_11 = arith.constant 0 : index
    %c0_12 = arith.constant 0 : index
    %26 = vector.load %arg2[%c0_11, %c0_12] : memref<27x16xbf16, #tpu.memory_space<vmem>>, vector<27x16xbf16>
    %cst_13 = arith.constant dense<0.000000e+00> : vector<256x16xf32>
    %27 = tpu.matmul %25, %26, %cst_13 {dimension_numbers = #tpu.dot_dimension_numbers<[1], [0], [0], [1], [0, 0, 1, 1], [], []>} : vector<256x27xbf16>, vector<27x16xbf16>, vector<256x16xf32> -> vector<256x16xf32>
    %c0_14 = arith.constant 0 : index
    %c0_15 = arith.constant 0 : index
    %28 = vector.load %arg3[%c0_14, %c0_15] : memref<1x16xf32, #tpu.memory_space<vmem>>, vector<1x16xf32>
    %29 = vector.broadcast %28 : vector<1x16xf32> to vector<256x16xf32>
    %30 = arith.addf %27, %29 : vector<256x16xf32>
    %cst_16 = arith.constant 0.000000e+00 : f32
    %31 = vector.broadcast %cst_16 : f32 to vector<256x16xf32>
    %32 = arith.maximumf %30, %31 : vector<256x16xf32>
    %33 = arith.truncf %32 : vector<256x16xf32> to vector<256x16xbf16>
    %c0_17 = arith.constant 0 : index
    %c0_18 = arith.constant 0 : index
    %c0_19 = arith.constant 0 : index
    %34 = vector.load %arg8[%c0_17, %c0_18, %c0_19] : memref<1x256x16xbf16, #tpu.memory_space<vmem>>, vector<1x256x16xbf16>
    %35 = vector.shape_cast %34 : vector<1x256x16xbf16> to vector<256x16xbf16>
    %36 = vector.shape_cast %33 : vector<256x16xbf16> to vector<1x256x16xbf16>
    tpu.vector_store %arg8[%c0_17, %c0_18, %c0_19], %36 {strides = array<i32>} : memref<1x256x16xbf16, #tpu.memory_space<vmem>>, vector<1x256x16xbf16>,
    %cst_20 = arith.constant 0.000000e+00 : f32
    %37 = vector.broadcast %cst_20 : f32 to vector<18x18x16xf32>
    %c0_21 = arith.constant 0 : index
    %c0_22 = arith.constant 0 : index
    %c0_23 = arith.constant 0 : index
    %38 = vector.load %arg11[%c0_21, %c0_22, %c0_23] : memref<18x18x16xf32, #tpu.memory_space<vmem>>, vector<18x18x16xf32>
    tpu.vector_store %arg11[%c0_21, %c0_22, %c0_23], %37 {strides = array<i32>} : memref<18x18x16xf32, #tpu.memory_space<vmem>>, vector<18x18x16xf32>,
    %39 = vector.shape_cast %32 : vector<256x16xf32> to vector<16x16x16xf32>
    %c1_24 = arith.constant 1 : index
    %c1_25 = arith.constant 1 : index
    %c0_26 = arith.constant 0 : index
    %40 = vector.load %arg11[%c1_24, %c1_25, %c0_26] : memref<18x18x16xf32, #tpu.memory_space<vmem>>, vector<16x16x16xf32>
    tpu.vector_store %arg11[%c1_24, %c1_25, %c0_26], %39 {strides = array<i32>} : memref<18x18x16xf32, #tpu.memory_space<vmem>>, vector<16x16x16xf32>,
    %c0_27 = arith.constant 0 : index
    %c0_28 = arith.constant 0 : index
    %c0_29 = arith.constant 0 : index
    %41 = vector.load %arg11[%c0_27, %c0_28, %c0_29] : memref<18x18x16xf32, #tpu.memory_space<vmem>>, vector<18x18x16xf32>
    %42 = vector.extract_strided_slice %41 {offsets = [0, 0, 0], sizes = [16, 16, 16], strides = [1, 1, 1]} : vector<18x18x16xf32> to vector<16x16x16xf32>
    %43 = vector.shape_cast %42 : vector<16x16x16xf32> to vector<256x16xf32>
    %44 = vector.extract_strided_slice %41 {offsets = [0, 1, 0], sizes = [16, 16, 16], strides = [1, 1, 1]} : vector<18x18x16xf32> to vector<16x16x16xf32>
    %45 = vector.shape_cast %44 : vector<16x16x16xf32> to vector<256x16xf32>
    %46 = vector.extract_strided_slice %41 {offsets = [0, 2, 0], sizes = [16, 16, 16], strides = [1, 1, 1]} : vector<18x18x16xf32> to vector<16x16x16xf32>
    %47 = vector.shape_cast %46 : vector<16x16x16xf32> to vector<256x16xf32>
    %48 = vector.extract_strided_slice %41 {offsets = [1, 0, 0], sizes = [16, 16, 16], strides = [1, 1, 1]} : vector<18x18x16xf32> to vector<16x16x16xf32>
    %49 = vector.shape_cast %48 : vector<16x16x16xf32> to vector<256x16xf32>
    %50 = vector.extract_strided_slice %41 {offsets = [1, 1, 0], sizes = [16, 16, 16], strides = [1, 1, 1]} : vector<18x18x16xf32> to vector<16x16x16xf32>
    %51 = vector.shape_cast %50 : vector<16x16x16xf32> to vector<256x16xf32>
    %52 = vector.extract_strided_slice %41 {offsets = [1, 2, 0], sizes = [16, 16, 16], strides = [1, 1, 1]} : vector<18x18x16xf32> to vector<16x16x16xf32>
    %53 = vector.shape_cast %52 : vector<16x16x16xf32> to vector<256x16xf32>
    %54 = vector.extract_strided_slice %41 {offsets = [2, 0, 0], sizes = [16, 16, 16], strides = [1, 1, 1]} : vector<18x18x16xf32> to vector<16x16x16xf32>
    %55 = vector.shape_cast %54 : vector<16x16x16xf32> to vector<256x16xf32>
    %56 = vector.extract_strided_slice %41 {offsets = [2, 1, 0], sizes = [16, 16, 16], strides = [1, 1, 1]} : vector<18x18x16xf32> to vector<16x16x16xf32>
    %57 = vector.shape_cast %56 : vector<16x16x16xf32> to vector<256x16xf32>
    %58 = vector.extract_strided_slice %41 {offsets = [2, 2, 0], sizes = [16, 16, 16], strides = [1, 1, 1]} : vector<18x18x16xf32> to vector<16x16x16xf32>
    %59 = vector.shape_cast %58 : vector<16x16x16xf32> to vector<256x16xf32>
    %60 = tpu.concatenate %43, %45, %47, %49, %51, %53, %55, %57, %59 in 1 : vector<256x16xf32>, vector<256x16xf32>, vector<256x16xf32>, vector<256x16xf32>, vector<256x16xf32>, vector<256x16xf32>, vector<256x16xf32>, vector<256x16xf32>, vector<256x16xf32> -> vector<256x144xf32>
    %61 = arith.truncf %60 : vector<256x144xf32> to vector<256x144xbf16>
    %c0_30 = arith.constant 0 : index
    %c0_31 = arith.constant 0 : index
    %62 = vector.load %arg4[%c0_30, %c0_31] : memref<144x16xbf16, #tpu.memory_space<vmem>>, vector<144x16xbf16>
    %cst_32 = arith.constant dense<0.000000e+00> : vector<256x16xf32>
    %63 = tpu.matmul %61, %62, %cst_32 {dimension_numbers = #tpu.dot_dimension_numbers<[1], [0], [0], [1], [0, 0, 1, 1], [], []>} : vector<256x144xbf16>, vector<144x16xbf16>, vector<256x16xf32> -> vector<256x16xf32>
    %c0_33 = arith.constant 0 : index
    %c0_34 = arith.constant 0 : index
    %64 = vector.load %arg5[%c0_33, %c0_34] : memref<1x16xf32, #tpu.memory_space<vmem>>, vector<1x16xf32>
    %65 = vector.broadcast %64 : vector<1x16xf32> to vector<256x16xf32>
    %66 = arith.addf %63, %65 : vector<256x16xf32>
    %cst_35 = arith.constant 0.000000e+00 : f32
    %67 = vector.broadcast %cst_35 : f32 to vector<256x16xf32>
    %68 = arith.maximumf %66, %67 : vector<256x16xf32>
    %69 = arith.truncf %68 : vector<256x16xf32> to vector<256x16xbf16>
    %c0_36 = arith.constant 0 : index
    %c0_37 = arith.constant 0 : index
    %70 = vector.load %arg6[%c0_36, %c0_37] : memref<16x18xbf16, #tpu.memory_space<vmem>>, vector<16x18xbf16>
    %cst_38 = arith.constant dense<0.000000e+00> : vector<256x18xf32>
    %71 = tpu.matmul %69, %70, %cst_38 {dimension_numbers = #tpu.dot_dimension_numbers<[1], [0], [0], [1], [0, 0, 1, 1], [], []>} : vector<256x16xbf16>, vector<16x18xbf16>, vector<256x18xf32> -> vector<256x18xf32>
    %c0_39 = arith.constant 0 : index
    %c0_40 = arith.constant 0 : index
    %72 = vector.load %arg7[%c0_39, %c0_40] : memref<1x18xf32, #tpu.memory_space<vmem>>, vector<1x18xf32>
    %73 = vector.broadcast %72 : vector<1x18xf32> to vector<256x18xf32>
    %74 = arith.addf %71, %73 : vector<256x18xf32>
    %c0_41 = arith.constant 0 : index
    %c0_42 = arith.constant 0 : index
    %c0_43 = arith.constant 0 : index
    %75 = vector.load %arg9[%c0_41, %c0_42, %c0_43] : memref<1x256x18xf32, #tpu.memory_space<vmem>>, vector<1x256x18xf32>
    %76 = vector.shape_cast %75 : vector<1x256x18xf32> to vector<256x18xf32>
    %77 = vector.shape_cast %74 : vector<256x18xf32> to vector<1x256x18xf32>
    tpu.vector_store %arg9[%c0_41, %c0_42, %c0_43], %77 {strides = array<i32>} : memref<1x256x18xf32, #tpu.memory_space<vmem>>, vector<1x256x18xf32>,
    return
  }
  func.func @transform_0(%arg0: i32) -> (i32, i32, i32, i32) {
    %c0_i32 = arith.constant 0 : i32
    %c0_i32_0 = arith.constant 0 : i32
    %c0_i32_1 = arith.constant 0 : i32
    %c0_i32_2 = arith.constant 0 : i32
    return %arg0, %c0_i32, %c0_i32_0, %c0_i32_1 : i32, i32, i32, i32
  }
  func.func @transform_1(%arg0: i32) -> (i32, i32) {
    %c0_i32 = arith.constant 0 : i32
    %c0_i32_0 = arith.constant 0 : i32
    %c0_i32_1 = arith.constant 0 : i32
    return %c0_i32, %c0_i32_0 : i32, i32
  }
  func.func @transform_2(%arg0: i32) -> (i32, i32) {
    %c0_i32 = arith.constant 0 : i32
    %c0_i32_0 = arith.constant 0 : i32
    %c0_i32_1 = arith.constant 0 : i32
    return %c0_i32, %c0_i32_0 : i32, i32
  }
  func.func @transform_3(%arg0: i32) -> (i32, i32) {
    %c0_i32 = arith.constant 0 : i32
    %c0_i32_0 = arith.constant 0 : i32
    %c0_i32_1 = arith.constant 0 : i32
    return %c0_i32, %c0_i32_0 : i32, i32
  }
  func.func @transform_4(%arg0: i32) -> (i32, i32) {
    %c0_i32 = arith.constant 0 : i32
    %c0_i32_0 = arith.constant 0 : i32
    %c0_i32_1 = arith.constant 0 : i32
    return %c0_i32, %c0_i32_0 : i32, i32
  }
  func.func @transform_5(%arg0: i32) -> (i32, i32) {
    %c0_i32 = arith.constant 0 : i32
    %c0_i32_0 = arith.constant 0 : i32
    %c0_i32_1 = arith.constant 0 : i32
    return %c0_i32, %c0_i32_0 : i32, i32
  }
  func.func @transform_6(%arg0: i32) -> (i32, i32) {
    %c0_i32 = arith.constant 0 : i32
    %c0_i32_0 = arith.constant 0 : i32
    %c0_i32_1 = arith.constant 0 : i32
    return %c0_i32, %c0_i32_0 : i32, i32
  }
  func.func @transform_7(%arg0: i32) -> (i32, i32, i32) {
    %c0_i32 = arith.constant 0 : i32
    %c0_i32_0 = arith.constant 0 : i32
    %c0_i32_1 = arith.constant 0 : i32
    return %arg0, %c0_i32, %c0_i32_0 : i32, i32, i32
  }
  func.func @transform_8(%arg0: i32) -> (i32, i32, i32) {
    %c0_i32 = arith.constant 0 : i32
    %c0_i32_0 = arith.constant 0 : i32
    %c0_i32_1 = arith.constant 0 : i32
    return %arg0, %c0_i32, %c0_i32_0 : i32, i32, i32
  }
}

module attributes {stable_mosaic.version = 11 : i64} {
  func.func @_head_kernel(%arg0: memref<32x784xbf16, #tpu.memory_space<vmem>>, %arg1: memref<784x32xbf16, #tpu.memory_space<vmem>>, %arg2: memref<1x32xf32, #tpu.memory_space<vmem>>, %arg3: memref<32x32xbf16, #tpu.memory_space<vmem>>, %arg4: memref<1x32xf32, #tpu.memory_space<vmem>>, %arg5: memref<32x25xbf16, #tpu.memory_space<vmem>>, %arg6: memref<1x25xf32, #tpu.memory_space<vmem>>, %arg7: memref<32x25xf32, #tpu.memory_space<vmem>>) attributes {dimension_semantics = [], scalar_prefetch = 0 : i64, scratch_operands = 0 : i64, tpu.core_type = #tpu.core_type<tc>} {
    %c0 = arith.constant 0 : index
    %c0_0 = arith.constant 0 : index
    %0 = vector.load %arg0[%c0, %c0_0] : memref<32x784xbf16, #tpu.memory_space<vmem>>, vector<32x784xbf16>
    %c0_1 = arith.constant 0 : index
    %c0_2 = arith.constant 0 : index
    %1 = vector.load %arg1[%c0_1, %c0_2] : memref<784x32xbf16, #tpu.memory_space<vmem>>, vector<784x32xbf16>
    %cst = arith.constant dense<0.000000e+00> : vector<32x32xf32>
    %2 = tpu.matmul %0, %1, %cst {dimension_numbers = #tpu.dot_dimension_numbers<[1], [0], [0], [1], [0, 0, 1, 1], [], []>} : vector<32x784xbf16>, vector<784x32xbf16>, vector<32x32xf32> -> vector<32x32xf32>
    %c0_3 = arith.constant 0 : index
    %c0_4 = arith.constant 0 : index
    %3 = vector.load %arg2[%c0_3, %c0_4] : memref<1x32xf32, #tpu.memory_space<vmem>>, vector<1x32xf32>
    %4 = vector.broadcast %3 : vector<1x32xf32> to vector<32x32xf32>
    %5 = arith.addf %2, %4 : vector<32x32xf32>
    %cst_5 = arith.constant 0.000000e+00 : f32
    %6 = vector.broadcast %cst_5 : f32 to vector<32x32xf32>
    %7 = arith.maximumf %5, %6 : vector<32x32xf32>
    %8 = arith.truncf %7 : vector<32x32xf32> to vector<32x32xbf16>
    %c0_6 = arith.constant 0 : index
    %c0_7 = arith.constant 0 : index
    %9 = vector.load %arg3[%c0_6, %c0_7] : memref<32x32xbf16, #tpu.memory_space<vmem>>, vector<32x32xbf16>
    %cst_8 = arith.constant dense<0.000000e+00> : vector<32x32xf32>
    %10 = tpu.matmul %8, %9, %cst_8 {dimension_numbers = #tpu.dot_dimension_numbers<[1], [0], [0], [1], [0, 0, 1, 1], [], []>} : vector<32x32xbf16>, vector<32x32xbf16>, vector<32x32xf32> -> vector<32x32xf32>
    %c0_9 = arith.constant 0 : index
    %c0_10 = arith.constant 0 : index
    %11 = vector.load %arg4[%c0_9, %c0_10] : memref<1x32xf32, #tpu.memory_space<vmem>>, vector<1x32xf32>
    %12 = vector.broadcast %11 : vector<1x32xf32> to vector<32x32xf32>
    %13 = arith.addf %10, %12 : vector<32x32xf32>
    %cst_11 = arith.constant 0.000000e+00 : f32
    %14 = vector.broadcast %cst_11 : f32 to vector<32x32xf32>
    %15 = arith.maximumf %13, %14 : vector<32x32xf32>
    %16 = arith.truncf %15 : vector<32x32xf32> to vector<32x32xbf16>
    %c0_12 = arith.constant 0 : index
    %c0_13 = arith.constant 0 : index
    %17 = vector.load %arg5[%c0_12, %c0_13] : memref<32x25xbf16, #tpu.memory_space<vmem>>, vector<32x25xbf16>
    %cst_14 = arith.constant dense<0.000000e+00> : vector<32x25xf32>
    %18 = tpu.matmul %16, %17, %cst_14 {dimension_numbers = #tpu.dot_dimension_numbers<[1], [0], [0], [1], [0, 0, 1, 1], [], []>} : vector<32x32xbf16>, vector<32x25xbf16>, vector<32x25xf32> -> vector<32x25xf32>
    %c0_15 = arith.constant 0 : index
    %c0_16 = arith.constant 0 : index
    %19 = vector.load %arg6[%c0_15, %c0_16] : memref<1x25xf32, #tpu.memory_space<vmem>>, vector<1x25xf32>
    %20 = vector.broadcast %19 : vector<1x25xf32> to vector<32x25xf32>
    %21 = arith.addf %18, %20 : vector<32x25xf32>
    %c0_17 = arith.constant 0 : index
    %c0_18 = arith.constant 0 : index
    %22 = vector.load %arg7[%c0_17, %c0_18] : memref<32x25xf32, #tpu.memory_space<vmem>>, vector<32x25xf32>
    tpu.vector_store %arg7[%c0_17, %c0_18], %21 {strides = array<i32>} : memref<32x25xf32, #tpu.memory_space<vmem>>, vector<32x25xf32>,
    return
  }
}

</mosaic_0001>

<llo_original>
// kernel: faster_rcnn_forward.2
$region0: #{faster_rcnn_forward.2}
  #allocation0 [shape = 'u32[]', space=smem, size = 0x4, offset = 0x4, fixed_abs, tag = 'smem constant byte address 0x4 - core index']
  #allocation1 [shape = 'u32[144,128]{1,0:T(1,128)}', space=vmem, size = 0x12000, scoped, tag = 'internal scratch']
  #allocation2 [shape = 'f32[18,18,3]{2,1,0:T(8,128)}', space=vmem, size = 0x36000, scoped, tag = 'scratch operand']
  #allocation3 [shape = 'f32[18,18,16]{2,1,0:T(8,128)}', space=vmem, size = 0x36000, scoped, tag = 'scratch operand']
  %s0 = inlined_call_operand.vmem [shape: f32[1,16,16,3], index: 0, kind: input, shape index: {}]
  %s1 = inlined_call_operand.vmem [shape: bf16[27,16], index: 1, kind: input, shape index: {}]
  %s2 = inlined_call_operand.vmem [shape: f32[1,16], index: 2, kind: input, shape index: {}]
  %s3 = inlined_call_operand.vmem [shape: bf16[144,16], index: 3, kind: input, shape index: {}]
  %s4 = inlined_call_operand.vmem [shape: f32[1,16], index: 4, kind: input, shape index: {}]
  %s5 = inlined_call_operand.vmem [shape: bf16[16,18], index: 5, kind: input, shape index: {}]
  %s6 = inlined_call_operand.vmem [shape: f32[1,18], index: 6, kind: input, shape index: {}]
  %s7 = inlined_call_operand.vmem [shape: bf16[1,256,16], index: 7, kind: output, shape index: {0}]
  %s8 = inlined_call_operand.vmem [shape: f32[1,256,18], index: 8, kind: output, shape index: {1}]
  %9 = xla_tuple %s7, %s8
  %s10 = sld [smem:[#allocation0]]
  $region46: #{faster_rcnn_forward.2} parent=0
    _
  %s12 = ssub.s32 1, %s10
  %s13 = scalar_select 0, %s12, %s10
  // Predicated region
  $region2: #{faster_rcnn_forward.2} parent=0 // pred_check
    _
  $region3: #{faster_rcnn_forward.2} parent=0 // pred_check_branch
    %15 = sbr.rel (0) target = $region5
  $region4: #{faster_rcnn_forward.2} parent=0 // pred_region
    _
  $region5: #{faster_rcnn_forward.2} parent=0 // pred_fallthru
    _
  // Predicated region
  $region6: #{faster_rcnn_forward.2} parent=0 // pred_check
    _
  $region7: #{faster_rcnn_forward.2} parent=0 // pred_check_branch
    %17 = sbr.rel (0) target = $region9
  $region8: #{faster_rcnn_forward.2} parent=0 // pred_region
    _
  $region9: #{faster_rcnn_forward.2} parent=0 // pred_fallthru
    _
  // Predicated region
  $region10: #{faster_rcnn_forward.2} parent=0 // pred_check
    _
  $region11: #{faster_rcnn_forward.2} parent=0 // pred_check_branch
    %19 = sbr.rel (0) target = $region13
  $region12: #{faster_rcnn_forward.2} parent=0 // pred_region
    _
  $region13: #{faster_rcnn_forward.2} parent=0 // pred_fallthru
    _
  // Predicated region
  $region14: #{faster_rcnn_forward.2} parent=0 // pred_check
    _
  $region15: #{faster_rcnn_forward.2} parent=0 // pred_check_branch
    %21 = sbr.rel (0) target = $region17
  $region16: #{faster_rcnn_forward.2} parent=0 // pred_region
    _
  $region17: #{faster_rcnn_forward.2} parent=0 // pred_fallthru
    _
  // Predicated region
  $region18: #{faster_rcnn_forward.2} parent=0 // pred_check
    _
  $region19: #{faster_rcnn_forward.2} parent=0 // pred_check_branch
    %23 = sbr.rel (0) target = $region21
  $region20: #{faster_rcnn_forward.2} parent=0 // pred_region
    _
  $region21: #{faster_rcnn_forward.2} parent=0 // pred_fallthru
    _
  // Predicated region
  $region22: #{faster_rcnn_forward.2} parent=0 // pred_check
    _
  $region23: #{faster_rcnn_forward.2} parent=0 // pred_check_branch
    %25 = sbr.rel (0) target = $region25
  $region24: #{faster_rcnn_forward.2} parent=0 // pred_region
    _
  $region25: #{faster_rcnn_forward.2} parent=0 // pred_fallthru
    _
  // Predicated region
  $region26: #{faster_rcnn_forward.2} parent=0 // pred_check
    _
  $region27: #{faster_rcnn_forward.2} parent=0 // pred_check_branch
    %27 = sbr.rel (0) target = $region29
  $region28: #{faster_rcnn_forward.2} parent=0 // pred_region
    _
  $region29: #{faster_rcnn_forward.2} parent=0 // pred_fallthru
    _
  %vm29 = vcmask 23552
  %30 = vst.msk [vmem:[#allocation2] sm:$0xff] %vm29, 0.0
  %31 = vst.msk [vmem:[#allocation2 + $0x8] sm:$0xff] %vm29, 0.0
  %vm32 = vcmask 17408
  %33 = vst.msk [vmem:[#allocation2 + $0x10] sm:$0x3] %vm32, 0.0
  %34 = vst.msk [vmem:[#allocation2 + $0x18] sm:$0xff] %vm29, 0.0
  %35 = vst.msk [vmem:[#allocation2 + $0x20] sm:$0xff] %vm29, 0.0
  %36 = vst.msk [vmem:[#allocation2 + $0x28] sm:$0x3] %vm32, 0.0
  %37 = vst.msk [vmem:[#allocation2 + $0x30] sm:$0xff] %vm29, 0.0
  %38 = vst.msk [vmem:[#allocation2 + $0x38] sm:$0xff] %vm29, 0.0
  %39 = vst.msk [vmem:[#allocation2 + $0x40] sm:$0x3] %vm32, 0.0
  %40 = vst.msk [vmem:[#allocation2 + $0x48] sm:$0xff] %vm29, 0.0
  %41 = vst.msk [vmem:[#allocation2 + $0x50] sm:$0xff] %vm29, 0.0
  %42 = vst.msk [vmem:[#allocation2 + $0x58] sm:$0x3] %vm32, 0.0
  %43 = vst.msk [vmem:[#allocation2 + $0x60] sm:$0xff] %vm29, 0.0
  %44 = vst.msk [vmem:[#allocation2 + $0x68] sm:$0xff] %vm29, 0.0
  %45 = vst.msk [vmem:[#allocation2 + $0x70] sm:$0x3] %vm32, 0.0
  %46 = vst.msk [vmem:[#allocation2 + $0x78] sm:$0xff] %vm29, 0.0
  %47 = vst.msk [vmem:[#allocation2 + $0x80] sm:$0xff] %vm29, 0.0
  %48 = vst.msk [vmem:[#allocation2 + $0x88] sm:$0x3] %vm32, 0.0
  %49 = vst.msk [vmem:[#allocation2 + $0x90] sm:$0xff] %vm29, 0.0
  %50 = vst.msk [vmem:[#allocation2 + $0x98] sm:$0xff] %vm29, 0.0
  %51 = vst.msk [vmem:[#allocation2 + $0xa0] sm:$0x3] %vm32, 0.0
  %52 = vst.msk [vmem:[#allocation2 + $0xa8] sm:$0xff] %vm29, 0.0
  %53 = vst.msk [vmem:[#allocation2 + $0xb0] sm:$0xff] %vm29, 0.0
  %54 = vst.msk [vmem:[#allocation2 + $0xb8] sm:$0x3] %vm32, 0.0
  %55 = vst.msk [vmem:[#allocation2 + $0xc0] sm:$0xff] %vm29, 0.0
  %56 = vst.msk [vmem:[#allocation2 + $0xc8] sm:$0xff] %vm29, 0.0
  %57 = vst.msk [vmem:[#allocation2 + $0xd0] sm:$0x3] %vm32, 0.0
  %58 = vst.msk [vmem:[#allocation2 + $0xd8] sm:$0xff] %vm29, 0.0
  %59 = vst.msk [vmem:[#allocation2 + $0xe0] sm:$0xff] %vm29, 0.0
  %60 = vst.msk [vmem:[#allocation2 + $0xe8] sm:$0x3] %vm32, 0.0
  %61 = vst.msk [vmem:[#allocation2 + $0xf0] sm:$0xff] %vm29, 0.0
  %62 = vst.msk [vmem:[#allocation2 + $0xf8] sm:$0xff] %vm29, 0.0
  %63 = vst.msk [vmem:[#allocation2 + $0x100] sm:$0x3] %vm32, 0.0
  %64 = vst.msk [vmem:[#allocation2 + $0x108] sm:$0xff] %vm29, 0.0
  %65 = vst.msk [vmem:[#allocation2 + $0x110] sm:$0xff] %vm29, 0.0
  %66 = vst.msk [vmem:[#allocation2 + $0x118] sm:$0x3] %vm32, 0.0
  %67 = vst.msk [vmem:[#allocation2 + $0x120] sm:$0xff] %vm29, 0.0
  %68 = vst.msk [vmem:[#allocation2 + $0x128] sm:$0xff] %vm29, 0.0
  %69 = vst.msk [vmem:[#allocation2 + $0x130] sm:$0x3] %vm32, 0.0
  %70 = vst.msk [vmem:[#allocation2 + $0x138] sm:$0xff] %vm29, 0.0
  %71 = vst.msk [vmem:[#allocation2 + $0x140] sm:$0xff] %vm29, 0.0
  %72 = vst.msk [vmem:[#allocation2 + $0x148] sm:$0x3] %vm32, 0.0
  %73 = vst.msk [vmem:[#allocation2 + $0x150] sm:$0xff] %vm29, 0.0
  %74 = vst.msk [vmem:[#allocation2 + $0x158] sm:$0xff] %vm29, 0.0
  %75 = vst.msk [vmem:[#allocation2 + $0x160] sm:$0x3] %vm32, 0.0
  %76 = vst.msk [vmem:[#allocation2 + $0x168] sm:$0xff] %vm29, 0.0
  %77 = vst.msk [vmem:[#allocation2 + $0x170] sm:$0xff] %vm29, 0.0
  %78 = vst.msk [vmem:[#allocation2 + $0x178] sm:$0x3] %vm32, 0.0
  %79 = vst.msk [vmem:[#allocation2 + $0x180] sm:$0xff] %vm29, 0.0
  %80 = vst.msk [vmem:[#allocation2 + $0x188] sm:$0xff] %vm29, 0.0
  %81 = vst.msk [vmem:[#allocation2 + $0x190] sm:$0x3] %vm32, 0.0
  %82 = vst.msk [vmem:[#allocation2 + $0x198] sm:$0xff] %vm29, 0.0
  %83 = vst.msk [vmem:[#allocation2 + $0x1a0] sm:$0xff] %vm29, 0.0
  %84 = vst.msk [vmem:[#allocation2 + $0x1a8] sm:$0x3] %vm32, 0.0
  %v85 = vld [vmem:[%s0] sm:$0xff]
  %v86 = vld [vmem:[%s0 + $0x8] sm:$0xff]
  %v87 = vld [vmem:[%s0 + $0x10] sm:$0xff]
  %v88 = vld [vmem:[%s0 + $0x18] sm:$0xff]
  %v89 = vld [vmem:[%s0 + $0x20] sm:$0xff]
  %v90 = vld [vmem:[%s0 + $0x28] sm:$0xff]
  %v91 = vld [vmem:[%s0 + $0x30] sm:$0xff]
  %v92 = vld [vmem:[%s0 + $0x38] sm:$0xff]
  %v93 = vld [vmem:[%s0 + $0x40] sm:$0xff]
  %v94 = vld [vmem:[%s0 + $0x48] sm:$0xff]
  %v95 = vld [vmem:[%s0 + $0x50] sm:$0xff]
  %v96 = vld [vmem:[%s0 + $0x58] sm:$0xff]
  %v97 = vld [vmem:[%s0 + $0x60] sm:$0xff]
  %v98 = vld [vmem:[%s0 + $0x68] sm:$0xff]
  %v99 = vld [vmem:[%s0 + $0x70] sm:$0xff]
  %v100 = vld [vmem:[%s0 + $0x78] sm:$0xff]
  %v101 = vld [vmem:[%s0 + $0x80] sm:$0xff]
  %v102 = vld [vmem:[%s0 + $0x88] sm:$0xff]
  %v103 = vld [vmem:[%s0 + $0x90] sm:$0xff]
  %v104 = vld [vmem:[%s0 + $0x98] sm:$0xff]
  %v105 = vld [vmem:[%s0 + $0xa0] sm:$0xff]
  %v106 = vld [vmem:[%s0 + $0xa8] sm:$0xff]
  %v107 = vld [vmem:[%s0 + $0xb0] sm:$0xff]
  %v108 = vld [vmem:[%s0 + $0xb8] sm:$0xff]
  %v109 = vld [vmem:[%s0 + $0xc0] sm:$0xff]
  %v110 = vld [vmem:[%s0 + $0xc8] sm:$0xff]
  %v111 = vld [vmem:[%s0 + $0xd0] sm:$0xff]
  %v112 = vld [vmem:[%s0 + $0xd8] sm:$0xff]
  %v113 = vld [vmem:[%s0 + $0xe0] sm:$0xff]
  %v114 = vld [vmem:[%s0 + $0xe8] sm:$0xff]
  %v115 = vld [vmem:[%s0 + $0xf0] sm:$0xff]
  %v116 = vld [vmem:[%s0 + $0xf8] sm:$0xff]
  %s117 = scalar_lea.vmem [#allocation2], 24
  %118 = vst.msk [vmem:[%s117 + $0x1] sm:$0xff] %vm29, %v85
  %119 = vst.msk [vmem:[%s117 + $0x9] sm:$0xff] %vm29, %v86
  %120 = vst.msk [vmem:[%s117 + $0x19] sm:$0xff] %vm29, %v87
  %121 = vst.msk [vmem:[%s117 + $0x21] sm:$0xff] %vm29, %v88
  %122 = vst.msk [vmem:[%s117 + $0x31] sm:$0xff] %vm29, %v89
  %123 = vst.msk [vmem:[%s117 + $0x39] sm:$0xff] %vm29, %v90
  %124 = vst.msk [vmem:[%s117 + $0x49] sm:$0xff] %vm29, %v91
  %125 = vst.msk [vmem:[%s117 + $0x51] sm:$0xff] %vm29, %v92
  %126 = vst.msk [vmem:[%s117 + $0x61] sm:$0xff] %vm29, %v93
  %127 = vst.msk [vmem:[%s117 + $0x69] sm:$0xff] %vm29, %v94
  %128 = vst.msk [vmem:[%s117 + $0x79] sm:$0xff] %vm29, %v95
  %129 = vst.msk [vmem:[%s117 + $0x81] sm:$0xff] %vm29, %v96
  %130 = vst.msk [vmem:[%s117 + $0x91] sm:$0xff] %vm29, %v97
  %131 = vst.msk [vmem:[%s117 + $0x99] sm:$0xff] %vm29, %v98
  %132 = vst.msk [vmem:[%s117 + $0xa9] sm:$0xff] %vm29, %v99
  %133 = vst.msk [vmem:[%s117 + $0xb1] sm:$0xff] %vm29, %v100
  %134 = vst.msk [vmem:[%s117 + $0xc1] sm:$0xff] %vm29, %v101
  %135 = vst.msk [vmem:[%s117 + $0xc9] sm:$0xff] %vm29, %v102
  %136 = vst.msk [vmem:[%s117 + $0xd9] sm:$0xff] %vm29, %v103
  %137 = vst.msk [vmem:[%s117 + $0xe1] sm:$0xff] %vm29, %v104
  %138 = vst.msk [vmem:[%s117 + $0xf1] sm:$0xff] %vm29, %v105
  %139 = vst.msk [vmem:[%s117 + $0xf9] sm:$0xff] %vm29, %v106
  %140 = vst.msk [vmem:[%s117 + $0x109] sm:$0xff] %vm29, %v107
  %141 = vst.msk [vmem:[%s117 + $0x111] sm:$0xff] %vm29, %v108
  %142 = vst.msk [vmem:[%s117 + $0x121] sm:$0xff] %vm29, %v109
  %143 = vst.msk [vmem:[%s117 + $0x129] sm:$0xff] %vm29, %v110
  %144 = vst.msk [vmem:[%s117 + $0x139] sm:$0xff] %vm29, %v111
  %145 = vst.msk [vmem:[%s117 + $0x141] sm:$0xff] %vm29, %v112
  %146 = vst.msk [vmem:[%s117 + $0x151] sm:$0xff] %vm29, %v113
  %147 = vst.msk [vmem:[%s117 + $0x159] sm:$0xff] %vm29, %v114
  %148 = vst.msk [vmem:[%s117 + $0x169] sm:$0xff] %vm29, %v115
  %149 = vst.msk [vmem:[%s117 + $0x171] sm:$0xff] %vm29, %v116
  %v150 = vld [vmem:[#allocation2] sm:$0xff]
  %v151 = vld [vmem:[#allocation2 + $0x8] sm:$0xff]
  %v152 = vld [vmem:[#allocation2 + $0x10] sm:$0x3]
  %v153 = vld [vmem:[#allocation2 + $0x18] sm:$0xff]
  %v154 = vld [vmem:[#allocation2 + $0x20] sm:$0xff]
  %v155 = vld [vmem:[#allocation2 + $0x28] sm:$0x3]
  %v156 = vld [vmem:[#allocation2 + $0x30] sm:$0xff]
  %v157 = vld [vmem:[#allocation2 + $0x38] sm:$0xff]
  %v158 = vld [vmem:[#allocation2 + $0x40] sm:$0x3]
  %v159 = vld [vmem:[#allocation2 + $0x48] sm:$0xff]
  %v160 = vld [vmem:[#allocation2 + $0x50] sm:$0xff]
  %v161 = vld [vmem:[#allocation2 + $0x58] sm:$0x3]
  %v162 = vld [vmem:[#allocation2 + $0x60] sm:$0xff]
  %v163 = vld [vmem:[#allocation2 + $0x68] sm:$0xff]
  %v164 = vld [vmem:[#allocation2 + $0x70] sm:$0x3]
  %v165 = vld [vmem:[#allocation2 + $0x78] sm:$0xff]
  %v166 = vld [vmem:[#allocation2 + $0x80] sm:$0xff]
  %v167 = vld [vmem:[#allocation2 + $0x88] sm:$0x3]
  %v168 = vld [vmem:[#allocation2 + $0x90] sm:$0xff]
  %v169 = vld [vmem:[#allocation2 + $0x98] sm:$0xff]
  %v170 = vld [vmem:[#allocation2 + $0xa0] sm:$0x3]
  %v171 = vld [vmem:[#allocation2 + $0xa8] sm:$0xff]
  %v172 = vld [vmem:[#allocation2 + $0xb0] sm:$0xff]
  %v173 = vld [vmem:[#allocation2 + $0xb8] sm:$0x3]
  %v174 = vld [vmem:[#allocation2 + $0xc0] sm:$0xff]
  %v175 = vld [vmem:[#allocation2 + $0xc8] sm:$0xff]
  %v176 = vld [vmem:[#allocation2 + $0xd0] sm:$0x3]
  %v177 = vld [vmem:[#allocation2 + $0xd8] sm:$0xff]
  %v178 = vld [vmem:[#allocation2 + $0xe0] sm:$0xff]
  %v179 = vld [vmem:[#allocation2 + $0xe8] sm:$0x3]
  %v180 = vld [vmem:[#allocation2 + $0xf0] sm:$0xff]
  %v181 = vld [vmem:[#allocation2 + $0xf8] sm:$0xff]
  %v182 = vld [vmem:[#allocation2 + $0x100] sm:$0x3]
  %v183 = vld [vmem:[#allocation2 + $0x108] sm:$0xff]
  %v184 = vld [vmem:[#allocation2 + $0x110] sm:$0xff]
  %v185 = vld [vmem:[#allocation2 + $0x118] sm:$0x3]
  %v186 = vld [vmem:[#allocation2 + $0x120] sm:$0xff]
  %v187 = vld [vmem:[#allocation2 + $0x128] sm:$0xff]
  %v188 = vld [vmem:[#allocation2 + $0x130] sm:$0x3]
  %v189 = vld [vmem:[#allocation2 + $0x138] sm:$0xff]
  %v190 = vld [vmem:[#allocation2 + $0x140] sm:$0xff]
  %v191 = vld [vmem:[#allocation2 + $0x148] sm:$0x3]
  %v192 = vld [vmem:[#allocation2 + $0x150] sm:$0xff]
  %v193 = vld [vmem:[#allocation2 + $0x158] sm:$0xff]
  %v194 = vld [vmem:[#allocation2 + $0x160] sm:$0x3]
  %v195 = vld [vmem:[#allocation2 + $0x168] sm:$0xff]
  %v196 = vld [vmem:[#allocation2 + $0x170] sm:$0xff]
  %v197 = vld [vmem:[#allocation2 + $0x178] sm:$0x3]
  %v198 = vld [vmem:[#allocation2 + $0x180] sm:$0xff]
  %v199 = vld [vmem:[#allocation2 + $0x188] sm:$0xff]
  %v200 = vld [vmem:[#allocation2 + $0x190] sm:$0x3]
  %v201 = vld [vmem:[#allocation2 + $0x198] sm:$0xff]
  %v202 = vld [vmem:[#allocation2 + $0x1a0] sm:$0xff]
  %v203 = vld [vmem:[#allocation2 + $0x1a8] sm:$0x3]
  %vm252 = vcmask 1046528
  %v253 = vrot.slane %v150, 1
  %v254 = vrot.slane %v151, 1
  %v255 = vsel %vm252, %v253, %v254
  %v256 = vrot.slane %v152, 1
  %v257 = vsel %vm252, %v254, %v256
  %v258 = vrot.slane %v153, 1
  %v259 = vrot.slane %v154, 1
  %v260 = vsel %vm252, %v258, %v259
  %v261 = vrot.slane %v155, 1
  %v262 = vsel %vm252, %v259, %v261
  %v263 = vrot.slane %v156, 1
  %v264 = vrot.slane %v157, 1
  %v265 = vsel %vm252, %v263, %v264
  %v266 = vrot.slane %v158, 1
  %v267 = vsel %vm252, %v264, %v266
  %v268 = vrot.slane %v159, 1
  %v269 = vrot.slane %v160, 1
  %v270 = vsel %vm252, %v268, %v269
  %v271 = vrot.slane %v161, 1
  %v272 = vsel %vm252, %v269, %v271
  %v273 = vrot.slane %v162, 1
  %v274 = vrot.slane %v163, 1
  %v275 = vsel %vm252, %v273, %v274
  %v276 = vrot.slane %v164, 1
  %v277 = vsel %vm252, %v274, %v276
  %v278 = vrot.slane %v165, 1
  %v279 = vrot.slane %v166, 1
  %v280 = vsel %vm252, %v278, %v279
  %v281 = vrot.slane %v167, 1
  %v282 = vsel %vm252, %v279, %v281
  %v283 = vrot.slane %v168, 1
  %v284 = vrot.slane %v169, 1
  %v285 = vsel %vm252, %v283, %v284
  %v286 = vrot.slane %v170, 1
  %v287 = vsel %vm252, %v284, %v286
  %v288 = vrot.slane %v171, 1
  %v289 = vrot.slane %v172, 1
  %v290 = vsel %vm252, %v288, %v289
  %v291 = vrot.slane %v173, 1
  %v292 = vsel %vm252, %v289, %v291
  %v293 = vrot.slane %v174, 1
  %v294 = vrot.slane %v175, 1
  %v295 = vsel %vm252, %v293, %v294
  %v296 = vrot.slane %v176, 1
  %v297 = vsel %vm252, %v294, %v296
  %v298 = vrot.slane %v177, 1
  %v299 = vrot.slane %v178, 1
  %v300 = vsel %vm252, %v298, %v299
  %v301 = vrot.slane %v179, 1
  %v302 = vsel %vm252, %v299, %v301
  %v303 = vrot.slane %v180, 1
  %v304 = vrot.slane %v181, 1
  %v305 = vsel %vm252, %v303, %v304
  %v306 = vrot.slane %v182, 1
  %v307 = vsel %vm252, %v304, %v306
  %v308 = vrot.slane %v183, 1
  %v309 = vrot.slane %v184, 1
  %v310 = vsel %vm252, %v308, %v309
  %v311 = vrot.slane %v185, 1
  %v312 = vsel %vm252, %v309, %v311
  %v313 = vrot.slane %v186, 1
  %v314 = vrot.slane %v187, 1
  %v315 = vsel %vm252, %v313, %v314
  %v316 = vrot.slane %v188, 1
  %v317 = vsel %vm252, %v314, %v316
  %v318 = vrot.slane %v189, 1
  %v319 = vrot.slane %v190, 1
  %v320 = vsel %vm252, %v318, %v319
  %v321 = vrot.slane %v191, 1
  %v322 = vsel %vm252, %v319, %v321
  %v323 = vrot.slane %v192, 1
  %v324 = vrot.slane %v193, 1
  %v325 = vsel %vm252, %v323, %v324
  %v326 = vrot.slane %v194, 1
  %v327 = vsel %vm252, %v324, %v326
  %v328 = vrot.slane %v195, 1
  %v329 = vrot.slane %v196, 1
  %v330 = vsel %vm252, %v328, %v329
  %v331 = vrot.slane %v197, 1
  %v332 = vsel %vm252, %v329, %v331
  %vm333 = vcmask 1045504
  %v334 = vrot.slane %v150, 2
  %v335 = vrot.slane %v151, 2
  %v336 = vsel %vm333, %v334, %v335
  %v337 = vrot.slane %v152, 2
  %v338 = vsel %vm333, %v335, %v337
  %v339 = vrot.slane %v153, 2
  %v340 = vrot.slane %v154, 2
  %v341 = vsel %vm333, %v339, %v340
  %v342 = vrot.slane %v155, 2
  %v343 = vsel %vm333, %v340, %v342
  %v344 = vrot.slane %v156, 2
  %v345 = vrot.slane %v157, 2
  %v346 = vsel %vm333, %v344, %v345
  %v347 = vrot.slane %v158, 2
  %v348 = vsel %vm333, %v345, %v347
  %v349 = vrot.slane %v159, 2
  %v350 = vrot.slane %v160, 2
  %v351 = vsel %vm333, %v349, %v350
  %v352 = vrot.slane %v161, 2
  %v353 = vsel %vm333, %v350, %v352
  %v354 = vrot.slane %v162, 2
  %v355 = vrot.slane %v163, 2
  %v356 = vsel %vm333, %v354, %v355
  %v357 = vrot.slane %v164, 2
  %v358 = vsel %vm333, %v355, %v357
  %v359 = vrot.slane %v165, 2
  %v360 = vrot.slane %v166, 2
  %v361 = vsel %vm333, %v359, %v360
  %v362 = vrot.slane %v167, 2
  %v363 = vsel %vm333, %v360, %v362
  %v364 = vrot.slane %v168, 2
  %v365 = vrot.slane %v169, 2
  %v366 = vsel %vm333, %v364, %v365
  %v367 = vrot.slane %v170, 2
  %v368 = vsel %vm333, %v365, %v367
  %v369 = vrot.slane %v171, 2
  %v370 = vrot.slane %v172, 2
  %v371 = vsel %vm333, %v369, %v370
  %v372 = vrot.slane %v173, 2
  %v373 = vsel %vm333, %v370, %v372
  %v374 = vrot.slane %v174, 2
  %v375 = vrot.slane %v175, 2
  %v376 = vsel %vm333, %v374, %v375
  %v377 = vrot.slane %v176, 2
  %v378 = vsel %vm333, %v375, %v377
  %v379 = vrot.slane %v177, 2
  %v380 = vrot.slane %v178, 2
  %v381 = vsel %vm333, %v379, %v380
  %v382 = vrot.slane %v179, 2
  %v383 = vsel %vm333, %v380, %v382
  %v384 = vrot.slane %v180, 2
  %v385 = vrot.slane %v181, 2
  %v386 = vsel %vm333, %v384, %v385
  %v387 = vrot.slane %v182, 2
  %v388 = vsel %vm333, %v385, %v387
  %v389 = vrot.slane %v183, 2
  %v390 = vrot.slane %v184, 2
  %v391 = vsel %vm333, %v389, %v390
  %v392 = vrot.slane %v185, 2
  %v393 = vsel %vm333, %v390, %v392
  %v394 = vrot.slane %v186, 2
  %v395 = vrot.slane %v187, 2
  %v396 = vsel %vm333, %v394, %v395
  %v397 = vrot.slane %v188, 2
  %v398 = vsel %vm333, %v395, %v397
  %v399 = vrot.slane %v189, 2
  %v400 = vrot.slane %v190, 2
  %v401 = vsel %vm333, %v399, %v400
  %v402 = vrot.slane %v191, 2
  %v403 = vsel %vm333, %v400, %v402
  %v404 = vrot.slane %v192, 2
  %v405 = vrot.slane %v193, 2
  %v406 = vsel %vm333, %v404, %v405
  %v407 = vrot.slane %v194, 2
  %v408 = vsel %vm333, %v405, %v407
  %v409 = vrot.slane %v195, 2
  %v410 = vrot.slane %v196, 2
  %v411 = vsel %vm333, %v409, %v410
  %v412 = vrot.slane %v197, 2
  %v413 = vsel %vm333, %v410, %v412
  %v417 = vrot.slane %v198, 1
  %v418 = vrot.slane %v199, 1
  %v419 = vsel %vm252, %v417, %v418
  %v420 = vrot.slane %v200, 1
  %v421 = vsel %vm252, %v418, %v420
  %v422 = vrot.slane %v198, 2
  %v423 = vrot.slane %v199, 2
  %v424 = vsel %vm333, %v422, %v423
  %v425 = vrot.slane %v200, 2
  %v426 = vsel %vm333, %v423, %v425
  %v430 = vrot.slane %v201, 1
  %v431 = vrot.slane %v202, 1
  %v432 = vsel %vm252, %v430, %v431
  %v433 = vrot.slane %v203, 1
  %v434 = vsel %vm252, %v431, %v433
  %v435 = vrot.slane %v201, 2
  %v436 = vrot.slane %v202, 2
  %v437 = vsel %vm333, %v435, %v436
  %v438 = vrot.slane %v203, 2
  %v439 = vsel %vm333, %v436, %v438
  %440 = vrot.lane.b32.xlu0 %v255, 3
  %v441 = vpop.permute.xlu0 %440
  %442 = vrot.lane.b32.xlu0 %v257, 3
  %v443 = vpop.permute.xlu0 %442
  %444 = vrot.lane.b32.xlu0 %v260, 3
  %v445 = vpop.permute.xlu0 %444
  %446 = vrot.lane.b32.xlu0 %v262, 3
  %v447 = vpop.permute.xlu0 %446
  %448 = vrot.lane.b32.xlu0 %v265, 3
  %v449 = vpop.permute.xlu0 %448
  %450 = vrot.lane.b32.xlu0 %v267, 3
  %v451 = vpop.permute.xlu0 %450
  %452 = vrot.lane.b32.xlu0 %v270, 3
  %v453 = vpop.permute.xlu0 %452
  %454 = vrot.lane.b32.xlu0 %v272, 3
  %v455 = vpop.permute.xlu0 %454
  %456 = vrot.lane.b32.xlu0 %v275, 3
  %v457 = vpop.permute.xlu0 %456
  %458 = vrot.lane.b32.xlu0 %v277, 3
  %v459 = vpop.permute.xlu0 %458
  %460 = vrot.lane.b32.xlu0 %v280, 3
  %v461 = vpop.permute.xlu0 %460
  %462 = vrot.lane.b32.xlu0 %v282, 3
  %v463 = vpop.permute.xlu0 %462
  %464 = vrot.lane.b32.xlu0 %v285, 3
  %v465 = vpop.permute.xlu0 %464
  %466 = vrot.lane.b32.xlu0 %v287, 3
  %v467 = vpop.permute.xlu0 %466
  %468 = vrot.lane.b32.xlu0 %v290, 3
  %v469 = vpop.permute.xlu0 %468
  %470 = vrot.lane.b32.xlu0 %v292, 3
  %v471 = vpop.permute.xlu0 %470
  %472 = vrot.lane.b32.xlu0 %v295, 3
  %v473 = vpop.permute.xlu0 %472
  %474 = vrot.lane.b32.xlu0 %v297, 3
  %v475 = vpop.permute.xlu0 %474
  %476 = vrot.lane.b32.xlu0 %v300, 3
  %v477 = vpop.permute.xlu0 %476
  %478 = vrot.lane.b32.xlu0 %v302, 3
  %v479 = vpop.permute.xlu0 %478
  %480 = vrot.lane.b32.xlu0 %v305, 3
  %v481 = vpop.permute.xlu0 %480
  %482 = vrot.lane.b32.xlu0 %v307, 3
  %v483 = vpop.permute.xlu0 %482
  %484 = vrot.lane.b32.xlu0 %v310, 3
  %v485 = vpop.permute.xlu0 %484
  %486 = vrot.lane.b32.xlu0 %v312, 3
  %v487 = vpop.permute.xlu0 %486
  %488 = vrot.lane.b32.xlu0 %v315, 3
  %v489 = vpop.permute.xlu0 %488
  %490 = vrot.lane.b32.xlu0 %v317, 3
  %v491 = vpop.permute.xlu0 %490
  %492 = vrot.lane.b32.xlu0 %v320, 3
  %v493 = vpop.permute.xlu0 %492
  %494 = vrot.lane.b32.xlu0 %v322, 3
  %v495 = vpop.permute.xlu0 %494
  %496 = vrot.lane.b32.xlu0 %v325, 3
  %v497 = vpop.permute.xlu0 %496
  %498 = vrot.lane.b32.xlu0 %v327, 3
  %v499 = vpop.permute.xlu0 %498
  %500 = vrot.lane.b32.xlu0 %v330, 3
  %v501 = vpop.permute.xlu0 %500
  %502 = vrot.lane.b32.xlu0 %v332, 3
  %v503 = vpop.permute.xlu0 %502
  %536 = vrot.lane.b32.xlu0 %v336, 6
  %v537 = vpop.permute.xlu0 %536
  %538 = vrot.lane.b32.xlu0 %v338, 6
  %v539 = vpop.permute.xlu0 %538
  %540 = vrot.lane.b32.xlu0 %v341, 6
  %v541 = vpop.permute.xlu0 %540
  %542 = vrot.lane.b32.xlu0 %v343, 6
  %v543 = vpop.permute.xlu0 %542
  %544 = vrot.lane.b32.xlu0 %v346, 6
  %v545 = vpop.permute.xlu0 %544
  %546 = vrot.lane.b32.xlu0 %v348, 6
  %v547 = vpop.permute.xlu0 %546
  %548 = vrot.lane.b32.xlu0 %v351, 6
  %v549 = vpop.permute.xlu0 %548
  %550 = vrot.lane.b32.xlu0 %v353, 6
  %v551 = vpop.permute.xlu0 %550
  %552 = vrot.lane.b32.xlu0 %v356, 6
  %v553 = vpop.permute.xlu0 %552
  %554 = vrot.lane.b32.xlu0 %v358, 6
  %v555 = vpop.permute.xlu0 %554
  %556 = vrot.lane.b32.xlu0 %v361, 6
  %v557 = vpop.permute.xlu0 %556
  %558 = vrot.lane.b32.xlu0 %v363, 6
  %v559 = vpop.permute.xlu0 %558
  %560 = vrot.lane.b32.xlu0 %v366, 6
  %v561 = vpop.permute.xlu0 %560
  %562 = vrot.lane.b32.xlu0 %v368, 6
  %v563 = vpop.permute.xlu0 %562
  %564 = vrot.lane.b32.xlu0 %v371, 6
  %v565 = vpop.permute.xlu0 %564
  %566 = vrot.lane.b32.xlu0 %v373, 6
  %v567 = vpop.permute.xlu0 %566
  %568 = vrot.lane.b32.xlu0 %v376, 6
  %v569 = vpop.permute.xlu0 %568
  %570 = vrot.lane.b32.xlu0 %v378, 6
  %v571 = vpop.permute.xlu0 %570
  %572 = vrot.lane.b32.xlu0 %v381, 6
  %v573 = vpop.permute.xlu0 %572
  %574 = vrot.lane.b32.xlu0 %v383, 6
  %v575 = vpop.permute.xlu0 %574
  %576 = vrot.lane.b32.xlu0 %v386, 6
  %v577 = vpop.permute.xlu0 %576
  %578 = vrot.lane.b32.xlu0 %v388, 6
  %v579 = vpop.permute.xlu0 %578
  %580 = vrot.lane.b32.xlu0 %v391, 6
  %v581 = vpop.permute.xlu0 %580
  %582 = vrot.lane.b32.xlu0 %v393, 6
  %v583 = vpop.permute.xlu0 %582
  %584 = vrot.lane.b32.xlu0 %v396, 6
  %v585 = vpop.permute.xlu0 %584
  %586 = vrot.lane.b32.xlu0 %v398, 6
  %v587 = vpop.permute.xlu0 %586
  %588 = vrot.lane.b32.xlu0 %v401, 6
  %v589 = vpop.permute.xlu0 %588
  %590 = vrot.lane.b32.xlu0 %v403, 6
  %v591 = vpop.permute.xlu0 %590
  %592 = vrot.lane.b32.xlu0 %v406, 6
  %v593 = vpop.permute.xlu0 %592
  %594 = vrot.lane.b32.xlu0 %v408, 6
  %v595 = vpop.permute.xlu0 %594
  %596 = vrot.lane.b32.xlu0 %v411, 6
  %v597 = vpop.permute.xlu0 %596
  %598 = vrot.lane.b32.xlu0 %v413, 6
  %v599 = vpop.permute.xlu0 %598
  %632 = vrot.lane.b32.xlu0 %v153, 9
  %v633 = vpop.permute.xlu0 %632
  %634 = vrot.lane.b32.xlu0 %v154, 9
  %v635 = vpop.permute.xlu0 %634
  %636 = vrot.lane.b32.xlu0 %v156, 9
  %v637 = vpop.permute.xlu0 %636
  %638 = vrot.lane.b32.xlu0 %v157, 9
  %v639 = vpop.permute.xlu0 %638
  %640 = vrot.lane.b32.xlu0 %v159, 9
  %v641 = vpop.permute.xlu0 %640
  %642 = vrot.lane.b32.xlu0 %v160, 9
  %v643 = vpop.permute.xlu0 %642
  %644 = vrot.lane.b32.xlu0 %v162, 9
  %v645 = vpop.permute.xlu0 %644
  %646 = vrot.lane.b32.xlu0 %v163, 9
  %v647 = vpop.permute.xlu0 %646
  %648 = vrot.lane.b32.xlu0 %v165, 9
  %v649 = vpop.permute.xlu0 %648
  %650 = vrot.lane.b32.xlu0 %v166, 9
  %v651 = vpop.permute.xlu0 %650
  %652 = vrot.lane.b32.xlu0 %v168, 9
  %v653 = vpop.permute.xlu0 %652
  %654 = vrot.lane.b32.xlu0 %v169, 9
  %v655 = vpop.permute.xlu0 %654
  %656 = vrot.lane.b32.xlu0 %v171, 9
  %v657 = vpop.permute.xlu0 %656
  %658 = vrot.lane.b32.xlu0 %v172, 9
  %v659 = vpop.permute.xlu0 %658
  %660 = vrot.lane.b32.xlu0 %v174, 9
  %v661 = vpop.permute.xlu0 %660
  %662 = vrot.lane.b32.xlu0 %v175, 9
  %v663 = vpop.permute.xlu0 %662
  %664 = vrot.lane.b32.xlu0 %v177, 9
  %v665 = vpop.permute.xlu0 %664
  %666 = vrot.lane.b32.xlu0 %v178, 9
  %v667 = vpop.permute.xlu0 %666
  %668 = vrot.lane.b32.xlu0 %v180, 9
  %v669 = vpop.permute.xlu0 %668
  %670 = vrot.lane.b32.xlu0 %v181, 9
  %v671 = vpop.permute.xlu0 %670
  %672 = vrot.lane.b32.xlu0 %v183, 9
  %v673 = vpop.permute.xlu0 %672
  %674 = vrot.lane.b32.xlu0 %v184, 9
  %v675 = vpop.permute.xlu0 %674
  %676 = vrot.lane.b32.xlu0 %v186, 9
  %v677 = vpop.permute.xlu0 %676
  %678 = vrot.lane.b32.xlu0 %v187, 9
  %v679 = vpop.permute.xlu0 %678
  %680 = vrot.lane.b32.xlu0 %v189, 9
  %v681 = vpop.permute.xlu0 %680
  %682 = vrot.lane.b32.xlu0 %v190, 9
  %v683 = vpop.permute.xlu0 %682
  %684 = vrot.lane.b32.xlu0 %v192, 9
  %v685 = vpop.permute.xlu0 %684
  %686 = vrot.lane.b32.xlu0 %v193, 9
  %v687 = vpop.permute.xlu0 %686
  %688 = vrot.lane.b32.xlu0 %v195, 9
  %v689 = vpop.permute.xlu0 %688
  %690 = vrot.lane.b32.xlu0 %v196, 9
  %v691 = vpop.permute.xlu0 %690
  %692 = vrot.lane.b32.xlu0 %v198, 9
  %v693 = vpop.permute.xlu0 %692
  %694 = vrot.lane.b32.xlu0 %v199, 9
  %v695 = vpop.permute.xlu0 %694
  %728 = vrot.lane.b32.xlu0 %v260, 12
  %v729 = vpop.permute.xlu0 %728
  %730 = vrot.lane.b32.xlu0 %v262, 12
  %v731 = vpop.permute.xlu0 %730
  %732 = vrot.lane.b32.xlu0 %v265, 12
  %v733 = vpop.permute.xlu0 %732
  %734 = vrot.lane.b32.xlu0 %v267, 12
  %v735 = vpop.permute.xlu0 %734
  %736 = vrot.lane.b32.xlu0 %v270, 12
  %v737 = vpop.permute.xlu0 %736
  %738 = vrot.lane.b32.xlu0 %v272, 12
  %v739 = vpop.permute.xlu0 %738
  %740 = vrot.lane.b32.xlu0 %v275, 12
  %v741 = vpop.permute.xlu0 %740
  %742 = vrot.lane.b32.xlu0 %v277, 12
  %v743 = vpop.permute.xlu0 %742
  %744 = vrot.lane.b32.xlu0 %v280, 12
  %v745 = vpop.permute.xlu0 %744
  %746 = vrot.lane.b32.xlu0 %v282, 12
  %v747 = vpop.permute.xlu0 %746
  %748 = vrot.lane.b32.xlu0 %v285, 12
  %v749 = vpop.permute.xlu0 %748
  %750 = vrot.lane.b32.xlu0 %v287, 12
  %v751 = vpop.permute.xlu0 %750
  %752 = vrot.lane.b32.xlu0 %v290, 12
  %v753 = vpop.permute.xlu0 %752
  %754 = vrot.lane.b32.xlu0 %v292, 12
  %v755 = vpop.permute.xlu0 %754
  %756 = vrot.lane.b32.xlu0 %v295, 12
  %v757 = vpop.permute.xlu0 %756
  %758 = vrot.lane.b32.xlu0 %v297, 12
  %v759 = vpop.permute.xlu0 %758
  %760 = vrot.lane.b32.xlu0 %v300, 12
  %v761 = vpop.permute.xlu0 %760
  %762 = vrot.lane.b32.xlu0 %v302, 12
  %v763 = vpop.permute.xlu0 %762
  %764 = vrot.lane.b32.xlu0 %v305, 12
  %v765 = vpop.permute.xlu0 %764
  %766 = vrot.lane.b32.xlu0 %v307, 12
  %v767 = vpop.permute.xlu0 %766
  %768 = vrot.lane.b32.xlu0 %v310, 12
  %v769 = vpop.permute.xlu0 %768
  %770 = vrot.lane.b32.xlu0 %v312, 12
  %v771 = vpop.permute.xlu0 %770
  %772 = vrot.lane.b32.xlu0 %v315, 12
  %v773 = vpop.permute.xlu0 %772
  %774 = vrot.lane.b32.xlu0 %v317, 12
  %v775 = vpop.permute.xlu0 %774
  %776 = vrot.lane.b32.xlu0 %v320, 12
  %v777 = vpop.permute.xlu0 %776
  %778 = vrot.lane.b32.xlu0 %v322, 12
  %v779 = vpop.permute.xlu0 %778
  %780 = vrot.lane.b32.xlu0 %v325, 12
  %v781 = vpop.permute.xlu0 %780
  %782 = vrot.lane.b32.xlu0 %v327, 12
  %v783 = vpop.permute.xlu0 %782
  %784 = vrot.lane.b32.xlu0 %v330, 12
  %v785 = vpop.permute.xlu0 %784
  %786 = vrot.lane.b32.xlu0 %v332, 12
  %v787 = vpop.permute.xlu0 %786
  %788 = vrot.lane.b32.xlu0 %v419, 12
  %v789 = vpop.permute.xlu0 %788
  %790 = vrot.lane.b32.xlu0 %v421, 12
  %v791 = vpop.permute.xlu0 %790
  %824 = vrot.lane.b32.xlu0 %v341, 15
  %v825 = vpop.permute.xlu0 %824
  %826 = vrot.lane.b32.xlu0 %v343, 15
  %v827 = vpop.permute.xlu0 %826
  %828 = vrot.lane.b32.xlu0 %v346, 15
  %v829 = vpop.permute.xlu0 %828
  %830 = vrot.lane.b32.xlu0 %v348, 15
  %v831 = vpop.permute.xlu0 %830
  %832 = vrot.lane.b32.xlu0 %v351, 15
  %v833 = vpop.permute.xlu0 %832
  %834 = vrot.lane.b32.xlu0 %v353, 15
  %v835 = vpop.permute.xlu0 %834
  %836 = vrot.lane.b32.xlu0 %v356, 15
  %v837 = vpop.permute.xlu0 %836
  %838 = vrot.lane.b32.xlu0 %v358, 15
  %v839 = vpop.permute.xlu0 %838
  %840 = vrot.lane.b32.xlu0 %v361, 15
  %v841 = vpop.permute.xlu0 %840
  %842 = vrot.lane.b32.xlu0 %v363, 15
  %v843 = vpop.permute.xlu0 %842
  %844 = vrot.lane.b32.xlu0 %v366, 15
  %v845 = vpop.permute.xlu0 %844
  %846 = vrot.lane.b32.xlu0 %v368, 15
  %v847 = vpop.permute.xlu0 %846
  %848 = vrot.lane.b32.xlu0 %v371, 15
  %v849 = vpop.permute.xlu0 %848
  %850 = vrot.lane.b32.xlu0 %v373, 15
  %v851 = vpop.permute.xlu0 %850
  %852 = vrot.lane.b32.xlu0 %v376, 15
  %v853 = vpop.permute.xlu0 %852
  %854 = vrot.lane.b32.xlu0 %v378, 15
  %v855 = vpop.permute.xlu0 %854
  %856 = vrot.lane.b32.xlu0 %v381, 15
  %v857 = vpop.permute.xlu0 %856
  %858 = vrot.lane.b32.xlu0 %v383, 15
  %v859 = vpop.permute.xlu0 %858
  %860 = vrot.lane.b32.xlu0 %v386, 15
  %v861 = vpop.permute.xlu0 %860
  %862 = vrot.lane.b32.xlu0 %v388, 15
  %v863 = vpop.permute.xlu0 %862
  %864 = vrot.lane.b32.xlu0 %v391, 15
  %v865 = vpop.permute.xlu0 %864
  %866 = vrot.lane.b32.xlu0 %v393, 15
  %v867 = vpop.permute.xlu0 %866
  %868 = vrot.lane.b32.xlu0 %v396, 15
  %v869 = vpop.permute.xlu0 %868
  %870 = vrot.lane.b32.xlu0 %v398, 15
  %v871 = vpop.permute.xlu0 %870
  %872 = vrot.lane.b32.xlu0 %v401, 15
  %v873 = vpop.permute.xlu0 %872
  %874 = vrot.lane.b32.xlu0 %v403, 15
  %v875 = vpop.permute.xlu0 %874
  %876 = vrot.lane.b32.xlu0 %v406, 15
  %v877 = vpop.permute.xlu0 %876
  %878 = vrot.lane.b32.xlu0 %v408, 15
  %v879 = vpop.permute.xlu0 %878
  %880 = vrot.lane.b32.xlu0 %v411, 15
  %v881 = vpop.permute.xlu0 %880
  %882 = vrot.lane.b32.xlu0 %v413, 15
  %v883 = vpop.permute.xlu0 %882
  %884 = vrot.lane.b32.xlu0 %v424, 15
  %v885 = vpop.permute.xlu0 %884
  %886 = vrot.lane.b32.xlu0 %v426, 15
  %v887 = vpop.permute.xlu0 %886
  %920 = vrot.lane.b32.xlu0 %v156, 18
  %v921 = vpop.permute.xlu0 %920
  %922 = vrot.lane.b32.xlu0 %v157, 18
  %v923 = vpop.permute.xlu0 %922
  %924 = vrot.lane.b32.xlu0 %v159, 18
  %v925 = vpop.permute.xlu0 %924
  %926 = vrot.lane.b32.xlu0 %v160, 18
  %v927 = vpop.permute.xlu0 %926
  %928 = vrot.lane.b32.xlu0 %v162, 18
  %v929 = vpop.permute.xlu0 %928
  %930 = vrot.lane.b32.xlu0 %v163, 18
  %v931 = vpop.permute.xlu0 %930
  %932 = vrot.lane.b32.xlu0 %v165, 18
  %v933 = vpop.permute.xlu0 %932
  %934 = vrot.lane.b32.xlu0 %v166, 18
  %v935 = vpop.permute.xlu0 %934
  %936 = vrot.lane.b32.xlu0 %v168, 18
  %v937 = vpop.permute.xlu0 %936
  %938 = vrot.lane.b32.xlu0 %v169, 18
  %v939 = vpop.permute.xlu0 %938
  %940 = vrot.lane.b32.xlu0 %v171, 18
  %v941 = vpop.permute.xlu0 %940
  %942 = vrot.lane.b32.xlu0 %v172, 18
  %v943 = vpop.permute.xlu0 %942
  %944 = vrot.lane.b32.xlu0 %v174, 18
  %v945 = vpop.permute.xlu0 %944
  %946 = vrot.lane.b32.xlu0 %v175, 18
  %v947 = vpop.permute.xlu0 %946
  %948 = vrot.lane.b32.xlu0 %v177, 18
  %v949 = vpop.permute.xlu0 %948
  %950 = vrot.lane.b32.xlu0 %v178, 18
  %v951 = vpop.permute.xlu0 %950
  %952 = vrot.lane.b32.xlu0 %v180, 18
  %v953 = vpop.permute.xlu0 %952
  %954 = vrot.lane.b32.xlu0 %v181, 18
  %v955 = vpop.permute.xlu0 %954
  %956 = vrot.lane.b32.xlu0 %v183, 18
  %v957 = vpop.permute.xlu0 %956
  %958 = vrot.lane.b32.xlu0 %v184, 18
  %v959 = vpop.permute.xlu0 %958
  %960 = vrot.lane.b32.xlu0 %v186, 18
  %v961 = vpop.permute.xlu0 %960
  %962 = vrot.lane.b32.xlu0 %v187, 18
  %v963 = vpop.permute.xlu0 %962
  %964 = vrot.lane.b32.xlu0 %v189, 18
  %v965 = vpop.permute.xlu0 %964
  %966 = vrot.lane.b32.xlu0 %v190, 18
  %v967 = vpop.permute.xlu0 %966
  %968 = vrot.lane.b32.xlu0 %v192, 18
  %v969 = vpop.permute.xlu0 %968
  %970 = vrot.lane.b32.xlu0 %v193, 18
  %v971 = vpop.permute.xlu0 %970
  %972 = vrot.lane.b32.xlu0 %v195, 18
  %v973 = vpop.permute.xlu0 %972
  %974 = vrot.lane.b32.xlu0 %v196, 18
  %v975 = vpop.permute.xlu0 %974
  %976 = vrot.lane.b32.xlu0 %v198, 18
  %v977 = vpop.permute.xlu0 %976
  %978 = vrot.lane.b32.xlu0 %v199, 18
  %v979 = vpop.permute.xlu0 %978
  %980 = vrot.lane.b32.xlu0 %v201, 18
  %v981 = vpop.permute.xlu0 %980
  %982 = vrot.lane.b32.xlu0 %v202, 18
  %v983 = vpop.permute.xlu0 %982
  %1016 = vrot.lane.b32.xlu0 %v265, 21
  %v1017 = vpop.permute.xlu0 %1016
  %1018 = vrot.lane.b32.xlu0 %v267, 21
  %v1019 = vpop.permute.xlu0 %1018
  %1020 = vrot.lane.b32.xlu0 %v270, 21
  %v1021 = vpop.permute.xlu0 %1020
  %1022 = vrot.lane.b32.xlu0 %v272, 21
  %v1023 = vpop.permute.xlu0 %1022
  %1024 = vrot.lane.b32.xlu0 %v275, 21
  %v1025 = vpop.permute.xlu0 %1024
  %1026 = vrot.lane.b32.xlu0 %v277, 21
  %v1027 = vpop.permute.xlu0 %1026
  %1028 = vrot.lane.b32.xlu0 %v280, 21
  %v1029 = vpop.permute.xlu0 %1028
  %1030 = vrot.lane.b32.xlu0 %v282, 21
  %v1031 = vpop.permute.xlu0 %1030
  %1032 = vrot.lane.b32.xlu0 %v285, 21
  %v1033 = vpop.permute.xlu0 %1032
  %1034 = vrot.lane.b32.xlu0 %v287, 21
  %v1035 = vpop.permute.xlu0 %1034
  %1036 = vrot.lane.b32.xlu0 %v290, 21
  %v1037 = vpop.permute.xlu0 %1036
  %1038 = vrot.lane.b32.xlu0 %v292, 21
  %v1039 = vpop.permute.xlu0 %1038
  %1040 = vrot.lane.b32.xlu0 %v295, 21
  %v1041 = vpop.permute.xlu0 %1040
  %1042 = vrot.lane.b32.xlu0 %v297, 21
  %v1043 = vpop.permute.xlu0 %1042
  %1044 = vrot.lane.b32.xlu0 %v300, 21
  %v1045 = vpop.permute.xlu0 %1044
  %1046 = vrot.lane.b32.xlu0 %v302, 21
  %v1047 = vpop.permute.xlu0 %1046
  %1048 = vrot.lane.b32.xlu0 %v305, 21
  %v1049 = vpop.permute.xlu0 %1048
  %1050 = vrot.lane.b32.xlu0 %v307, 21
  %v1051 = vpop.permute.xlu0 %1050
  %1052 = vrot.lane.b32.xlu0 %v310, 21
  %v1053 = vpop.permute.xlu0 %1052
  %1054 = vrot.lane.b32.xlu0 %v312, 21
  %v1055 = vpop.permute.xlu0 %1054
  %1056 = vrot.lane.b32.xlu0 %v315, 21
  %v1057 = vpop.permute.xlu0 %1056
  %1058 = vrot.lane.b32.xlu0 %v317, 21
  %v1059 = vpop.permute.xlu0 %1058
  %1060 = vrot.lane.b32.xlu0 %v320, 21
  %v1061 = vpop.permute.xlu0 %1060
  %1062 = vrot.lane.b32.xlu0 %v322, 21
  %v1063 = vpop.permute.xlu0 %1062
  %1064 = vrot.lane.b32.xlu0 %v325, 21
  %v1065 = vpop.permute.xlu0 %1064
  %1066 = vrot.lane.b32.xlu0 %v327, 21
  %v1067 = vpop.permute.xlu0 %1066
  %1068 = vrot.lane.b32.xlu0 %v330, 21
  %v1069 = vpop.permute.xlu0 %1068
  %1070 = vrot.lane.b32.xlu0 %v332, 21
  %v1071 = vpop.permute.xlu0 %1070
  %1072 = vrot.lane.b32.xlu0 %v419, 21
  %v1073 = vpop.permute.xlu0 %1072
  %1074 = vrot.lane.b32.xlu0 %v421, 21
  %v1075 = vpop.permute.xlu0 %1074
  %1076 = vrot.lane.b32.xlu0 %v432, 21
  %v1077 = vpop.permute.xlu0 %1076
  %1078 = vrot.lane.b32.xlu0 %v434, 21
  %v1079 = vpop.permute.xlu0 %1078
  %1112 = vrot.lane.b32.xlu0 %v346, 24
  %v1113 = vpop.permute.xlu0 %1112
  %1114 = vrot.lane.b32.xlu0 %v348, 24
  %v1115 = vpop.permute.xlu0 %1114
  %1116 = vrot.lane.b32.xlu0 %v351, 24
  %v1117 = vpop.permute.xlu0 %1116
  %1118 = vrot.lane.b32.xlu0 %v353, 24
  %v1119 = vpop.permute.xlu0 %1118
  %1120 = vrot.lane.b32.xlu0 %v356, 24
  %v1121 = vpop.permute.xlu0 %1120
  %1122 = vrot.lane.b32.xlu0 %v358, 24
  %v1123 = vpop.permute.xlu0 %1122
  %1124 = vrot.lane.b32.xlu0 %v361, 24
  %v1125 = vpop.permute.xlu0 %1124
  %1126 = vrot.lane.b32.xlu0 %v363, 24
  %v1127 = vpop.permute.xlu0 %1126
  %1128 = vrot.lane.b32.xlu0 %v366, 24
  %v1129 = vpop.permute.xlu0 %1128
  %1130 = vrot.lane.b32.xlu0 %v368, 24
  %v1131 = vpop.permute.xlu0 %1130
  %1132 = vrot.lane.b32.xlu0 %v371, 24
  %v1133 = vpop.permute.xlu0 %1132
  %1134 = vrot.lane.b32.xlu0 %v373, 24
  %v1135 = vpop.permute.xlu0 %1134
  %1136 = vrot.lane.b32.xlu0 %v376, 24
  %v1137 = vpop.permute.xlu0 %1136
  %1138 = vrot.lane.b32.xlu0 %v378, 24
  %v1139 = vpop.permute.xlu0 %1138
  %1140 = vrot.lane.b32.xlu0 %v381, 24
  %v1141 = vpop.permute.xlu0 %1140
  %1142 = vrot.lane.b32.xlu0 %v383, 24
  %v1143 = vpop.permute.xlu0 %1142
  %1144 = vrot.lane.b32.xlu0 %v386, 24
  %v1145 = vpop.permute.xlu0 %1144
  %1146 = vrot.lane.b32.xlu0 %v388, 24
  %v1147 = vpop.permute.xlu0 %1146
  %1148 = vrot.lane.b32.xlu0 %v391, 24
  %v1149 = vpop.permute.xlu0 %1148
  %1150 = vrot.lane.b32.xlu0 %v393, 24
  %v1151 = vpop.permute.xlu0 %1150
  %1152 = vrot.lane.b32.xlu0 %v396, 24
  %v1153 = vpop.permute.xlu0 %1152
  %1154 = vrot.lane.b32.xlu0 %v398, 24
  %v1155 = vpop.permute.xlu0 %1154
  %1156 = vrot.lane.b32.xlu0 %v401, 24
  %v1157 = vpop.permute.xlu0 %1156
  %1158 = vrot.lane.b32.xlu0 %v403, 24
  %v1159 = vpop.permute.xlu0 %1158
  %1160 = vrot.lane.b32.xlu0 %v406, 24
  %v1161 = vpop.permute.xlu0 %1160
  %1162 = vrot.lane.b32.xlu0 %v408, 24
  %v1163 = vpop.permute.xlu0 %1162
  %1164 = vrot.lane.b32.xlu0 %v411, 24
  %v1165 = vpop.permute.xlu0 %1164
  %1166 = vrot.lane.b32.xlu0 %v413, 24
  %v1167 = vpop.permute.xlu0 %1166
  %1168 = vrot.lane.b32.xlu0 %v424, 24
  %v1169 = vpop.permute.xlu0 %1168
  %1170 = vrot.lane.b32.xlu0 %v426, 24
  %v1171 = vpop.permute.xlu0 %1170
  %1172 = vrot.lane.b32.xlu0 %v437, 24
  %v1173 = vpop.permute.xlu0 %1172
  %1174 = vrot.lane.b32.xlu0 %v439, 24
  %v1175 = vpop.permute.xlu0 %1174
  %v1208 = vsel %vm29, %v150, %v441
  %v1209 = vsel %vm29, %v151, %v443
  %v1210 = vsel %vm29, %v153, %v445
  %v1211 = vsel %vm29, %v154, %v447
  %v1212 = vsel %vm29, %v156, %v449
  %v1213 = vsel %vm29, %v157, %v451
  %v1214 = vsel %vm29, %v159, %v453
  %v1215 = vsel %vm29, %v160, %v455
  %v1216 = vsel %vm29, %v162, %v457
  %v1217 = vsel %vm29, %v163, %v459
  %v1218 = vsel %vm29, %v165, %v461
  %v1219 = vsel %vm29, %v166, %v463
  %v1220 = vsel %vm29, %v168, %v465
  %v1221 = vsel %vm29, %v169, %v467
  %v1222 = vsel %vm29, %v171, %v469
  %v1223 = vsel %vm29, %v172, %v471
  %v1224 = vsel %vm29, %v174, %v473
  %v1225 = vsel %vm29, %v175, %v475
  %v1226 = vsel %vm29, %v177, %v477
  %v1227 = vsel %vm29, %v178, %v479
  %v1228 = vsel %vm29, %v180, %v481
  %v1229 = vsel %vm29, %v181, %v483
  %v1230 = vsel %vm29, %v183, %v485
  %v1231 = vsel %vm29, %v184, %v487
  %v1232 = vsel %vm29, %v186, %v489
  %v1233 = vsel %vm29, %v187, %v491
  %v1234 = vsel %vm29, %v189, %v493
  %v1235 = vsel %vm29, %v190, %v495
  %v1236 = vsel %vm29, %v192, %v497
  %v1237 = vsel %vm29, %v193, %v499
  %v1238 = vsel %vm29, %v195, %v501
  %v1239 = vsel %vm29, %v196, %v503
  %vm1240 = vcmask 48128
  %v1241 = vsel %vm1240, %v1208, %v537
  %v1242 = vsel %vm1240, %v1209, %v539
  %v1243 = vsel %vm1240, %v1210, %v541
  %v1244 = vsel %vm1240, %v1211, %v543
  %v1245 = vsel %vm1240, %v1212, %v545
  %v1246 = vsel %vm1240, %v1213, %v547
  %v1247 = vsel %vm1240, %v1214, %v549
  %v1248 = vsel %vm1240, %v1215, %v551
  %v1249 = vsel %vm1240, %v1216, %v553
  %v1250 = vsel %vm1240, %v1217, %v555
  %v1251 = vsel %vm1240, %v1218, %v557
  %v1252 = vsel %vm1240, %v1219, %v559
  %v1253 = vsel %vm1240, %v1220, %v561
  %v1254 = vsel %vm1240, %v1221, %v563
  %v1255 = vsel %vm1240, %v1222, %v565
  %v1256 = vsel %vm1240, %v1223, %v567
  %v1257 = vsel %vm1240, %v1224, %v569
  %v1258 = vsel %vm1240, %v1225, %v571
  %v1259 = vsel %vm1240, %v1226, %v573
  %v1260 = vsel %vm1240, %v1227, %v575
  %v1261 = vsel %vm1240, %v1228, %v577
  %v1262 = vsel %vm1240, %v1229, %v579
  %v1263 = vsel %vm1240, %v1230, %v581
  %v1264 = vsel %vm1240, %v1231, %v583
  %v1265 = vsel %vm1240, %v1232, %v585
  %v1266 = vsel %vm1240, %v1233, %v587
  %v1267 = vsel %vm1240, %v1234, %v589
  %v1268 = vsel %vm1240, %v1235, %v591
  %v1269 = vsel %vm1240, %v1236, %v593
  %v1270 = vsel %vm1240, %v1237, %v595
  %v1271 = vsel %vm1240, %v1238, %v597
  %v1272 = vsel %vm1240, %v1239, %v599
  %vm1273 = vcmask 72704
  %v1274 = vsel %vm1273, %v1241, %v633
  %v1275 = vsel %vm1273, %v1242, %v635
  %v1276 = vsel %vm1273, %v1243, %v637
  %v1277 = vsel %vm1273, %v1244, %v639
  %v1278 = vsel %vm1273, %v1245, %v641
  %v1279 = vsel %vm1273, %v1246, %v643
  %v1280 = vsel %vm1273, %v1247, %v645
  %v1281 = vsel %vm1273, %v1248, %v647
  %v1282 = vsel %vm1273, %v1249, %v649
  %v1283 = vsel %vm1273, %v1250, %v651
  %v1284 = vsel %vm1273, %v1251, %v653
  %v1285 = vsel %vm1273, %v1252, %v655
  %v1286 = vsel %vm1273, %v1253, %v657
  %v1287 = vsel %vm1273, %v1254, %v659
  %v1288 = vsel %vm1273, %v1255, %v661
  %v1289 = vsel %vm1273, %v1256, %v663
  %v1290 = vsel %vm1273, %v1257, %v665
  %v1291 = vsel %vm1273, %v1258, %v667
  %v1292 = vsel %vm1273, %v1259, %v669
  %v1293 = vsel %vm1273, %v1260, %v671
  %v1294 = vsel %vm1273, %v1261, %v673
  %v1295 = vsel %vm1273, %v1262, %v675
  %v1296 = vsel %vm1273, %v1263, %v677
  %v1297 = vsel %vm1273, %v1264, %v679
  %v1298 = vsel %vm1273, %v1265, %v681
  %v1299 = vsel %vm1273, %v1266, %v683
  %v1300 = vsel %vm1273, %v1267, %v685
  %v1301 = vsel %vm1273, %v1268, %v687
  %v1302 = vsel %vm1273, %v1269, %v689
  %v1303 = vsel %vm1273, %v1270, %v691
  %v1304 = vsel %vm1273, %v1271, %v693
  %v1305 = vsel %vm1273, %v1272, %v695
  %vm1306 = vcmask 97280
  %v1307 = vsel %vm1306, %v1274, %v729
  %v1308 = vsel %vm1306, %v1275, %v731
  %v1309 = vsel %vm1306, %v1276, %v733
  %v1310 = vsel %vm1306, %v1277, %v735
  %v1311 = vsel %vm1306, %v1278, %v737
  %v1312 = vsel %vm1306, %v1279, %v739
  %v1313 = vsel %vm1306, %v1280, %v741
  %v1314 = vsel %vm1306, %v1281, %v743
  %v1315 = vsel %vm1306, %v1282, %v745
  %v1316 = vsel %vm1306, %v1283, %v747
  %v1317 = vsel %vm1306, %v1284, %v749
  %v1318 = vsel %vm1306, %v1285, %v751
  %v1319 = vsel %vm1306, %v1286, %v753
  %v1320 = vsel %vm1306, %v1287, %v755
  %v1321 = vsel %vm1306, %v1288, %v757
  %v1322 = vsel %vm1306, %v1289, %v759
  %v1323 = vsel %vm1306, %v1290, %v761
  %v1324 = vsel %vm1306, %v1291, %v763
  %v1325 = vsel %vm1306, %v1292, %v765
  %v1326 = vsel %vm1306, %v1293, %v767
  %v1327 = vsel %vm1306, %v1294, %v769
  %v1328 = vsel %vm1306, %v1295, %v771
  %v1329 = vsel %vm1306, %v1296, %v773
  %v1330 = vsel %vm1306, %v1297, %v775
  %v1331 = vsel %vm1306, %v1298, %v777
  %v1332 = vsel %vm1306, %v1299, %v779
  %v1333 = vsel %vm1306, %v1300, %v781
  %v1334 = vsel %vm1306, %v1301, %v783
  %v1335 = vsel %vm1306, %v1302, %v785
  %v1336 = vsel %vm1306, %v1303, %v787
  %v1337 = vsel %vm1306, %v1304, %v789
  %v1338 = vsel %vm1306, %v1305, %v791
  %vm1339 = vcmask 121856
  %v1340 = vsel %vm1339, %v1307, %v825
  %v1341 = vsel %vm1339, %v1308, %v827
  %v1342 = vsel %vm1339, %v1309, %v829
  %v1343 = vsel %vm1339, %v1310, %v831
  %v1344 = vsel %vm1339, %v1311, %v833
  %v1345 = vsel %vm1339, %v1312, %v835
  %v1346 = vsel %vm1339, %v1313, %v837
  %v1347 = vsel %vm1339, %v1314, %v839
  %v1348 = vsel %vm1339, %v1315, %v841
  %v1349 = vsel %vm1339, %v1316, %v843
  %v1350 = vsel %vm1339, %v1317, %v845
  %v1351 = vsel %vm1339, %v1318, %v847
  %v1352 = vsel %vm1339, %v1319, %v849
  %v1353 = vsel %vm1339, %v1320, %v851
  %v1354 = vsel %vm1339, %v1321, %v853
  %v1355 = vsel %vm1339, %v1322, %v855
  %v1356 = vsel %vm1339, %v1323, %v857
  %v1357 = vsel %vm1339, %v1324, %v859
  %v1358 = vsel %vm1339, %v1325, %v861
  %v1359 = vsel %vm1339, %v1326, %v863
  %v1360 = vsel %vm1339, %v1327, %v865
  %v1361 = vsel %vm1339, %v1328, %v867
  %v1362 = vsel %vm1339, %v1329, %v869
  %v1363 = vsel %vm1339, %v1330, %v871
  %v1364 = vsel %vm1339, %v1331, %v873
  %v1365 = vsel %vm1339, %v1332, %v875
  %v1366 = vsel %vm1339, %v1333, %v877
  %v1367 = vsel %vm1339, %v1334, %v879
  %v1368 = vsel %vm1339, %v1335, %v881
  %v1369 = vsel %vm1339, %v1336, %v883
  %v1370 = vsel %vm1339, %v1337, %v885
  %v1371 = vsel %vm1339, %v1338, %v887
  %vm1372 = vcmask 146432
  %v1373 = vsel %vm1372, %v1340, %v921
  %v1374 = vsel %vm1372, %v1341, %v923
  %v1375 = vsel %vm1372, %v1342, %v925
  %v1376 = vsel %vm1372, %v1343, %v927
  %v1377 = vsel %vm1372, %v1344, %v929
  %v1378 = vsel %vm1372, %v1345, %v931
  %v1379 = vsel %vm1372, %v1346, %v933
  %v1380 = vsel %vm1372, %v1347, %v935
  %v1381 = vsel %vm1372, %v1348, %v937
  %v1382 = vsel %vm1372, %v1349, %v939
  %v1383 = vsel %vm1372, %v1350, %v941
  %v1384 = vsel %vm1372, %v1351, %v943
  %v1385 = vsel %vm1372, %v1352, %v945
  %v1386 = vsel %vm1372, %v1353, %v947
  %v1387 = vsel %vm1372, %v1354, %v949
  %v1388 = vsel %vm1372, %v1355, %v951
  %v1389 = vsel %vm1372, %v1356, %v953
  %v1390 = vsel %vm1372, %v1357, %v955
  %v1391 = vsel %vm1372, %v1358, %v957
  %v1392 = vsel %vm1372, %v1359, %v959
  %v1393 = vsel %vm1372, %v1360, %v961
  %v1394 = vsel %vm1372, %v1361, %v963
  %v1395 = vsel %vm1372, %v1362, %v965
  %v1396 = vsel %vm1372, %v1363, %v967
  %v1397 = vsel %vm1372, %v1364, %v969
  %v1398 = vsel %vm1372, %v1365, %v971
  %v1399 = vsel %vm1372, %v1366, %v973
  %v1400 = vsel %vm1372, %v1367, %v975
  %v1401 = vsel %vm1372, %v1368, %v977
  %v1402 = vsel %vm1372, %v1369, %v979
  %v1403 = vsel %vm1372, %v1370, %v981
  %v1404 = vsel %vm1372, %v1371, %v983
  %vm1405 = vcmask 171008
  %v1406 = vsel %vm1405, %v1373, %v1017
  %v1407 = vsel %vm1405, %v1374, %v1019
  %v1408 = vsel %vm1405, %v1375, %v1021
  %v1409 = vsel %vm1405, %v1376, %v1023
  %v1410 = vsel %vm1405, %v1377, %v1025
  %v1411 = vsel %vm1405, %v1378, %v1027
  %v1412 = vsel %vm1405, %v1379, %v1029
  %v1413 = vsel %vm1405, %v1380, %v1031
  %v1414 = vsel %vm1405, %v1381, %v1033
  %v1415 = vsel %vm1405, %v1382, %v1035
  %v1416 = vsel %vm1405, %v1383, %v1037
  %v1417 = vsel %vm1405, %v1384, %v1039
  %v1418 = vsel %vm1405, %v1385, %v1041
  %v1419 = vsel %vm1405, %v1386, %v1043
  %v1420 = vsel %vm1405, %v1387, %v1045
  %v1421 = vsel %vm1405, %v1388, %v1047
  %v1422 = vsel %vm1405, %v1389, %v1049
  %v1423 = vsel %vm1405, %v1390, %v1051
  %v1424 = vsel %vm1405, %v1391, %v1053
  %v1425 = vsel %vm1405, %v1392, %v1055
  %v1426 = vsel %vm1405, %v1393, %v1057
  %v1427 = vsel %vm1405, %v1394, %v1059
  %v1428 = vsel %vm1405, %v1395, %v1061
  %v1429 = vsel %vm1405, %v1396, %v1063
  %v1430 = vsel %vm1405, %v1397, %v1065
  %v1431 = vsel %vm1405, %v1398, %v1067
  %v1432 = vsel %vm1405, %v1399, %v1069
  %v1433 = vsel %vm1405, %v1400, %v1071
  %v1434 = vsel %vm1405, %v1401, %v1073
  %v1435 = vsel %vm1405, %v1402, %v1075
  %v1436 = vsel %vm1405, %v1403, %v1077
  %v1437 = vsel %vm1405, %v1404, %v1079
  %vm1438 = vcmask 195584
  %v1439 = vsel %vm1438, %v1406, %v1113
  %v1440 = vsel %vm1438, %v1407, %v1115
  %v1441 = vsel %vm1438, %v1408, %v1117
  %v1442 = vsel %vm1438, %v1409, %v1119
  %v1443 = vsel %vm1438, %v1410, %v1121
  %v1444 = vsel %vm1438, %v1411, %v1123
  %v1445 = vsel %vm1438, %v1412, %v1125
  %v1446 = vsel %vm1438, %v1413, %v1127
  %v1447 = vsel %vm1438, %v1414, %v1129
  %v1448 = vsel %vm1438, %v1415, %v1131
  %v1449 = vsel %vm1438, %v1416, %v1133
  %v1450 = vsel %vm1438, %v1417, %v1135
  %v1451 = vsel %vm1438, %v1418, %v1137
  %v1452 = vsel %vm1438, %v1419, %v1139
  %v1453 = vsel %vm1438, %v1420, %v1141
  %v1454 = vsel %vm1438, %v1421, %v1143
  %v1455 = vsel %vm1438, %v1422, %v1145
  %v1456 = vsel %vm1438, %v1423, %v1147
  %v1457 = vsel %vm1438, %v1424, %v1149
  %v1458 = vsel %vm1438, %v1425, %v1151
  %v1459 = vsel %vm1438, %v1426, %v1153
  %v1460 = vsel %vm1438, %v1427, %v1155
  %v1461 = vsel %vm1438, %v1428, %v1157
  %v1462 = vsel %vm1438, %v1429, %v1159
  %v1463 = vsel %vm1438, %v1430, %v1161
  %v1464 = vsel %vm1438, %v1431, %v1163
  %v1465 = vsel %vm1438, %v1432, %v1165
  %v1466 = vsel %vm1438, %v1433, %v1167
  %v1467 = vsel %vm1438, %v1434, %v1169
  %v1468 = vsel %vm1438, %v1435, %v1171
  %v1469 = vsel %vm1438, %v1436, %v1173
  %v1470 = vsel %vm1438, %v1437, %v1175
  %v1471 = vpack.c.bf16 %v1440, %v1439
  %v1472 = vpack.c.bf16 %v1442, %v1441
  %v1473 = vpack.c.bf16 %v1444, %v1443
  %v1474 = vpack.c.bf16 %v1446, %v1445
  %v1475 = vpack.c.bf16 %v1448, %v1447
  %v1476 = vpack.c.bf16 %v1450, %v1449
  %v1477 = vpack.c.bf16 %v1452, %v1451
  %v1478 = vpack.c.bf16 %v1454, %v1453
  %v1479 = vpack.c.bf16 %v1456, %v1455
  %v1480 = vpack.c.bf16 %v1458, %v1457
  %v1481 = vpack.c.bf16 %v1460, %v1459
  %v1482 = vpack.c.bf16 %v1462, %v1461
  %v1483 = vpack.c.bf16 %v1464, %v1463
  %v1484 = vpack.c.bf16 %v1466, %v1465
  %v1485 = vpack.c.bf16 %v1468, %v1467
  %v1486 = vpack.c.bf16 %v1470, %v1469
  %v1487 = vld [vmem:[%s1] sm:$0xf]
  %v1488 = vld [vmem:[%s1 + $0x4] sm:$0xf]
  %v1489 = vld [vmem:[%s1 + $0x8] sm:$0xf]
  %v1490 = vld [vmem:[%s1 + $0xc] sm:$0x3]
  %v1491 = vld [vmem:[%s2] sm:$0x1]
  %v1493 = vlaneseq
  %v1494 = vshrl.u32 %v1493, 7
  %v1495 = vsub.s32 0, %v1494
  %v1496 = vrot.slane %v1491, %v1495
  %v1502 = vunpack.c.l.b16 %v1487
  %v1503 = vunpack.c.l.b16 %v1488
  %v1504 = vunpack.c.l.b16 %v1489
  %v1505 = vunpack.c.l.b16 %v1490
  %v1506 = vpack.c.b16 %v1503, %v1502
  %v1507 = vpack.c.b16 %v1505, %v1504
  %vm1509 = vcmask 220160
  %v1511 = vsel %vm1509, %v1471, 0
  %v1514 = vsel %vm1509, %v1472, 0
  %v1517 = vsel %vm1509, %v1473, 0
  %v1520 = vsel %vm1509, %v1474, 0
  %v1523 = vsel %vm1509, %v1475, 0
  %v1526 = vsel %vm1509, %v1476, 0
  %v1529 = vsel %vm1509, %v1477, 0
  %v1532 = vsel %vm1509, %v1478, 0
  %v1535 = vsel %vm1509, %v1479, 0
  %v1538 = vsel %vm1509, %v1480, 0
  %v1541 = vsel %vm1509, %v1481, 0
  %v1544 = vsel %vm1509, %v1482, 0
  %v1547 = vsel %vm1509, %v1483, 0
  %v1550 = vsel %vm1509, %v1484, 0
  %v1553 = vsel %vm1509, %v1485, 0
  %v1556 = vsel %vm1509, %v1486, 0
  %vm1558 = vcmask 1044480
  %v1559 = vsel %vm1558, 4294967295, 65535
  %v1560 = vsel %vm333, %v1559, 0
  %v1562 = vand.u32 %v1507, %v1560
  %1564 = vmatprep.subr.bf16.mxu0 0
  %1565 = vmatpush1.bf16.msra.mxu0 %v1506
  %1566 = vmatprep.subr.bf16.mxu0 0
  %1567 = vmatpush1.bf16.msra.mxu0 %v1562
  %1568 = vmatprep.subr.bf16.mxu0 0
  %1569 = vmatpush1.bf16.msra.mxu0 0
  %1570 = vmatprep.subr.bf16.mxu0 0
  %1571 = vmatpush1.bf16.msra.mxu0 0
  %1572 = vmatprep.subr.bf16.mxu0 0
  %1573 = vmatpush1.bf16.msra.mxu0 0
  %1574 = vmatprep.subr.bf16.mxu0 0
  %1575 = vmatpush1.bf16.msra.mxu0 0
  %1576 = vmatprep.subr.bf16.mxu0 0
  %1577 = vmatpush1.bf16.msra.mxu0 0
  %1578 = vmatprep.subr.bf16.mxu0 0
  %1579 = vmatpush1.bf16.msra.mxu0 0
  %1580 = vmatprep.subr.bf16.mxu0 0
  %1581 = vmatpush1.bf16.msra.mxu0 0
  %1582 = vmatprep.subr.bf16.mxu0 0
  %1583 = vmatpush1.bf16.msra.mxu0 0
  %1584 = vmatprep.subr.bf16.mxu0 0
  %1585 = vmatpush1.bf16.msra.mxu0 0
  %1586 = vmatprep.subr.bf16.mxu0 0
  %1587 = vmatpush1.bf16.msra.mxu0 0
  %1588 = vmatprep.subr.bf16.mxu0 0
  %1589 = vmatpush1.bf16.msra.mxu0 0
  %1590 = vmatprep.subr.bf16.mxu0 0
  %1591 = vmatpush1.bf16.msra.mxu0 0
  %1592 = vmatprep.subr.bf16.mxu0 0
  %1593 = vmatpush1.bf16.msra.mxu0 0
  %1594 = vmatprep.subr.bf16.mxu0 0
  %1595 = vmatpush1.bf16.msra.mxu0 0
  %1596 = vmatprep.mubr.bf16.mxu0 0
  %1597 = vmatmul.mubr.bf16.gmra.mrb[0].mxu0 %v1511
  %v1598 = vpop.f32.mrb[0].mxu0
  %v1599 = vadd.f32 %v1496, %v1598
  %v1600 = vpop.f32.mrb[0].mxu0
  %v1601 = vpop.f32.mrb[0].mxu0
  %v1602 = vadd.f32 %v1496, %v1601
  %v1603 = vpop.f32.mrb[0].mxu0
  %1604 = vmatprep.mubr.bf16.mxu0 0
  %1605 = vmatmul.mubr.bf16.gmra.mrb[0].mxu0 %v1514
  %v1606 = vpop.f32.mrb[0].mxu0
  %v1607 = vadd.f32 %v1496, %v1606
  %v1608 = vpop.f32.mrb[0].mxu0
  %v1609 = vpop.f32.mrb[0].mxu0
  %v1610 = vadd.f32 %v1496, %v1609
  %v1611 = vpop.f32.mrb[0].mxu0
  %1612 = vmatprep.mubr.bf16.mxu0 0
  %1613 = vmatmul.mubr.bf16.gmra.mrb[0].mxu0 %v1517
  %v1614 = vpop.f32.mrb[0].mxu0
  %v1615 = vadd.f32 %v1496, %v1614
  %v1616 = vpop.f32.mrb[0].mxu0
  %v1617 = vpop.f32.mrb[0].mxu0
  %v1618 = vadd.f32 %v1496, %v1617
  %v1619 = vpop.f32.mrb[0].mxu0
  %1620 = vmatprep.mubr.bf16.mxu0 0
  %1621 = vmatmul.mubr.bf16.gmra.mrb[0].mxu0 %v1520
  %v1622 = vpop.f32.mrb[0].mxu0
  %v1623 = vadd.f32 %v1496, %v1622
  %v1624 = vpop.f32.mrb[0].mxu0
  %v1625 = vpop.f32.mrb[0].mxu0
  %v1626 = vadd.f32 %v1496, %v1625
  %v1627 = vpop.f32.mrb[0].mxu0
  %1628 = vmatprep.mubr.bf16.mxu0 0
  %1629 = vmatmul.mubr.bf16.gmra.mrb[0].mxu0 %v1523
  %v1630 = vpop.f32.mrb[0].mxu0
  %v1631 = vadd.f32 %v1496, %v1630
  %v1632 = vpop.f32.mrb[0].mxu0
  %v1633 = vpop.f32.mrb[0].mxu0
  %v1634 = vadd.f32 %v1496, %v1633
  %v1635 = vpop.f32.mrb[0].mxu0
  %1636 = vmatprep.mubr.bf16.mxu0 0
  %1637 = vmatmul.mubr.bf16.gmra.mrb[0].mxu0 %v1526
  %v1638 = vpop.f32.mrb[0].mxu0
  %v1639 = vadd.f32 %v1496, %v1638
  %v1640 = vpop.f32.mrb[0].mxu0
  %v1641 = vpop.f32.mrb[0].mxu0
  %v1642 = vadd.f32 %v1496, %v1641
  %v1643 = vpop.f32.mrb[0].mxu0
  %1644 = vmatprep.mubr.bf16.mxu0 0
  %1645 = vmatmul.mubr.bf16.gmra.mrb[0].mxu0 %v1529
  %v1646 = vpop.f32.mrb[0].mxu0
  %v1647 = vadd.f32 %v1496, %v1646
  %v1648 = vpop.f32.mrb[0].mxu0
  %v1649 = vpop.f32.mrb[0].mxu0
  %v1650 = vadd.f32 %v1496, %v1649
  %v1651 = vpop.f32.mrb[0].mxu0
  %1652 = vmatprep.mubr.bf16.mxu0 0
  %1653 = vmatmul.mubr.bf16.gmra.mrb[0].mxu0 %v1532
  %v1654 = vpop.f32.mrb[0].mxu0
  %v1655 = vadd.f32 %v1496, %v1654
  %v1656 = vpop.f32.mrb[0].mxu0
  %v1657 = vpop.f32.mrb[0].mxu0
  %v1658 = vadd.f32 %v1496, %v1657
  %v1659 = vpop.f32.mrb[0].mxu0
  %1660 = vmatprep.mubr.bf16.mxu0 0
  %1661 = vmatmul.mubr.bf16.gmra.mrb[0].mxu0 %v1535
  %v1662 = vpop.f32.mrb[0].mxu0
  %v1663 = vadd.f32 %v1496, %v1662
  %v1664 = vpop.f32.mrb[0].mxu0
  %v1665 = vpop.f32.mrb[0].mxu0
  %v1666 = vadd.f32 %v1496, %v1665
  %v1667 = vpop.f32.mrb[0].mxu0
  %1668 = vmatprep.mubr.bf16.mxu0 0
  %1669 = vmatmul.mubr.bf16.gmra.mrb[0].mxu0 %v1538
  %v1670 = vpop.f32.mrb[0].mxu0
  %v1671 = vadd.f32 %v1496, %v1670
  %v1672 = vpop.f32.mrb[0].mxu0
  %v1673 = vpop.f32.mrb[0].mxu0
  %v1674 = vadd.f32 %v1496, %v1673
  %v1675 = vpop.f32.mrb[0].mxu0
  %1676 = vmatprep.mubr.bf16.mxu0 0
  %1677 = vmatmul.mubr.bf16.gmra.mrb[0].mxu0 %v1541
  %v1678 = vpop.f32.mrb[0].mxu0
  %v1679 = vadd.f32 %v1496, %v1678
  %v1680 = vpop.f32.mrb[0].mxu0
  %v1681 = vpop.f32.mrb[0].mxu0
  %v1682 = vadd.f32 %v1496, %v1681
  %v1683 = vpop.f32.mrb[0].mxu0
  %1684 = vmatprep.mubr.bf16.mxu0 0
  %1685 = vmatmul.mubr.bf16.gmra.mrb[0].mxu0 %v1544
  %v1686 = vpop.f32.mrb[0].mxu0
  %v1687 = vadd.f32 %v1496, %v1686
  %v1688 = vpop.f32.mrb[0].mxu0
  %v1689 = vpop.f32.mrb[0].mxu0
  %v1690 = vadd.f32 %v1496, %v1689
  %v1691 = vpop.f32.mrb[0].mxu0
  %1692 = vmatprep.mubr.bf16.mxu0 0
  %1693 = vmatmul.mubr.bf16.gmra.mrb[0].mxu0 %v1547
  %v1694 = vpop.f32.mrb[0].mxu0
  %v1695 = vadd.f32 %v1496, %v1694
  %v1696 = vpop.f32.mrb[0].mxu0
  %v1697 = vpop.f32.mrb[0].mxu0
  %v1698 = vadd.f32 %v1496, %v1697
  %v1699 = vpop.f32.mrb[0].mxu0
  %1700 = vmatprep.mubr.bf16.mxu0 0
  %1701 = vmatmul.mubr.bf16.gmra.mrb[0].mxu0 %v1550
  %v1702 = vpop.f32.mrb[0].mxu0
  %v1703 = vadd.f32 %v1496, %v1702
  %v1704 = vpop.f32.mrb[0].mxu0
  %v1705 = vpop.f32.mrb[0].mxu0
  %v1706 = vadd.f32 %v1496, %v1705
  %v1707 = vpop.f32.mrb[0].mxu0
  %1708 = vmatprep.mubr.bf16.mxu0 0
  %1709 = vmatmul.mubr.bf16.gmra.mrb[0].mxu0 %v1553
  %v1710 = vpop.f32.mrb[0].mxu0
  %v1711 = vadd.f32 %v1496, %v1710
  %v1712 = vpop.f32.mrb[0].mxu0
  %v1713 = vpop.f32.mrb[0].mxu0
  %v1714 = vadd.f32 %v1496, %v1713
  %v1715 = vpop.f32.mrb[0].mxu0
  %1716 = vmatprep.mubr.bf16.mxu0 0
  %1717 = vmatmul.mubr.bf16.gmra.mrb[0].mxu0 %v1556
  %v1718 = vpop.f32.mrb[0].mxu0
  %v1719 = vadd.f32 %v1496, %v1718
  %v1720 = vpop.f32.mrb[0].mxu0
  %v1721 = vpop.f32.mrb[0].mxu0
  %v1722 = vadd.f32 %v1496, %v1721
  %v1723 = vpop.f32.mrb[0].mxu0
  %1724 = vdwg.mxu0
  %v1725 = vmax.f32 %v1599, 0.0
  %v1726 = vmax.f32 %v1602, 0.0
  %v1727 = vmax.f32 %v1607, 0.0
  %v1728 = vmax.f32 %v1610, 0.0
  %v1729 = vmax.f32 %v1615, 0.0
  %v1730 = vmax.f32 %v1618, 0.0
  %v1731 = vmax.f32 %v1623, 0.0
  %v1732 = vmax.f32 %v1626, 0.0
  %v1733 = vmax.f32 %v1631, 0.0
  %v1734 = vmax.f32 %v1634, 0.0
  %v1735 = vmax.f32 %v1639, 0.0
  %v1736 = vmax.f32 %v1642, 0.0
  %v1737 = vmax.f32 %v1647, 0.0
  %v1738 = vmax.f32 %v1650, 0.0
  %v1739 = vmax.f32 %v1655, 0.0
  %v1740 = vmax.f32 %v1658, 0.0
  %v1741 = vmax.f32 %v1663, 0.0
  %v1742 = vmax.f32 %v1666, 0.0
  %v1743 = vmax.f32 %v1671, 0.0
  %v1744 = vmax.f32 %v1674, 0.0
  %v1745 = vmax.f32 %v1679, 0.0
  %v1746 = vmax.f32 %v1682, 0.0
  %v1747 = vmax.f32 %v1687, 0.0
  %v1748 = vmax.f32 %v1690, 0.0
  %v1749 = vmax.f32 %v1695, 0.0
  %v1750 = vmax.f32 %v1698, 0.0
  %v1751 = vmax.f32 %v1703, 0.0
  %v1752 = vmax.f32 %v1706, 0.0
  %v1753 = vmax.f32 %v1711, 0.0
  %v1754 = vmax.f32 %v1714, 0.0
  %v1755 = vmax.f32 %v1719, 0.0
  %v1756 = vmax.f32 %v1722, 0.0
  %v1757 = vpack.c.bf16 %v1726, %v1725
  %v1758 = vpack.c.bf16 %v1728, %v1727
  %v1759 = vpack.c.bf16 %v1730, %v1729
  %v1760 = vpack.c.bf16 %v1732, %v1731
  %v1761 = vpack.c.bf16 %v1734, %v1733
  %v1762 = vpack.c.bf16 %v1736, %v1735
  %v1763 = vpack.c.bf16 %v1738, %v1737
  %v1764 = vpack.c.bf16 %v1740, %v1739
  %v1765 = vpack.c.bf16 %v1742, %v1741
  %v1766 = vpack.c.bf16 %v1744, %v1743
  %v1767 = vpack.c.bf16 %v1746, %v1745
  %v1768 = vpack.c.bf16 %v1748, %v1747
  %v1769 = vpack.c.bf16 %v1750, %v1749
  %v1770 = vpack.c.bf16 %v1752, %v1751
  %v1771 = vpack.c.bf16 %v1754, %v1753
  %v1772 = vpack.c.bf16 %v1756, %v1755
  %v1789 = vunpack.c.l.b16 %v1757
  %v1790 = vunpack.c.h.b16 %v1757
  %v1791 = vunpack.c.l.b16 %v1758
  %v1792 = vunpack.c.h.b16 %v1758
  %v1793 = vunpack.c.l.b16 %v1759
  %v1794 = vunpack.c.h.b16 %v1759
  %v1795 = vunpack.c.l.b16 %v1760
  %v1796 = vunpack.c.h.b16 %v1760
  %v1797 = vunpack.c.l.b16 %v1761
  %v1798 = vunpack.c.h.b16 %v1761
  %v1799 = vunpack.c.l.b16 %v1762
  %v1800 = vunpack.c.h.b16 %v1762
  %v1801 = vunpack.c.l.b16 %v1763
  %v1802 = vunpack.c.h.b16 %v1763
  %v1803 = vunpack.c.l.b16 %v1764
  %v1804 = vunpack.c.h.b16 %v1764
  %v1805 = vunpack.c.l.b16 %v1765
  %v1806 = vunpack.c.h.b16 %v1765
  %v1807 = vunpack.c.l.b16 %v1766
  %v1808 = vunpack.c.h.b16 %v1766
  %v1809 = vunpack.c.l.b16 %v1767
  %v1810 = vunpack.c.h.b16 %v1767
  %v1811 = vunpack.c.l.b16 %v1768
  %v1812 = vunpack.c.h.b16 %v1768
  %v1813 = vunpack.c.l.b16 %v1769
  %v1814 = vunpack.c.h.b16 %v1769
  %v1815 = vunpack.c.l.b16 %v1770
  %v1816 = vunpack.c.h.b16 %v1770
  %v1817 = vunpack.c.l.b16 %v1771
  %v1818 = vunpack.c.h.b16 %v1771
  %v1819 = vunpack.c.l.b16 %v1772
  %v1820 = vunpack.c.h.b16 %v1772
  %v1821 = vpack.c.b16 %v1789, %v1789
  %v1822 = vpack.c.b16 %v1790, %v1790
  %v1823 = vpack.c.b16 %v1791, %v1791
  %v1824 = vpack.c.b16 %v1792, %v1792
  %v1825 = vpack.c.b16 %v1793, %v1793
  %v1826 = vpack.c.b16 %v1794, %v1794
  %v1827 = vpack.c.b16 %v1795, %v1795
  %v1828 = vpack.c.b16 %v1796, %v1796
  %v1829 = vpack.c.b16 %v1797, %v1797
  %v1830 = vpack.c.b16 %v1798, %v1798
  %v1831 = vpack.c.b16 %v1799, %v1799
  %v1832 = vpack.c.b16 %v1800, %v1800
  %v1833 = vpack.c.b16 %v1801, %v1801
  %v1834 = vpack.c.b16 %v1802, %v1802
  %v1835 = vpack.c.b16 %v1803, %v1803
  %v1836 = vpack.c.b16 %v1804, %v1804
  %v1837 = vpack.c.b16 %v1805, %v1805
  %v1838 = vpack.c.b16 %v1806, %v1806
  %v1839 = vpack.c.b16 %v1807, %v1807
  %v1840 = vpack.c.b16 %v1808, %v1808
  %v1841 = vpack.c.b16 %v1809, %v1809
  %v1842 = vpack.c.b16 %v1810, %v1810
  %v1843 = vpack.c.b16 %v1811, %v1811
  %v1844 = vpack.c.b16 %v1812, %v1812
  %v1845 = vpack.c.b16 %v1813, %v1813
  %v1846 = vpack.c.b16 %v1814, %v1814
  %v1847 = vpack.c.b16 %v1815, %v1815
  %v1848 = vpack.c.b16 %v1816, %v1816
  %v1849 = vpack.c.b16 %v1817, %v1817
  %v1850 = vpack.c.b16 %v1818, %v1818
  %v1851 = vpack.c.b16 %v1819, %v1819
  %v1852 = vpack.c.b16 %v1820, %v1820
  %vm1885 = vcmask 125952
  %1886 = vst.msk [vmem:[%s7] sm:$0xf] %vm1885, %v1821
  %1887 = vst.msk [vmem:[%s7 + $0x4] sm:$0xf] %vm1885, %v1822
  %1888 = vst.msk [vmem:[%s7 + $0x8] sm:$0xf] %vm1885, %v1823
  %1889 = vst.msk [vmem:[%s7 + $0xc] sm:$0xf] %vm1885, %v1824
  %1890 = vst.msk [vmem:[%s7 + $0x10] sm:$0xf] %vm1885, %v1825
  %1891 = vst.msk [vmem:[%s7 + $0x14] sm:$0xf] %vm1885, %v1826
  %1892 = vst.msk [vmem:[%s7 + $0x18] sm:$0xf] %vm1885, %v1827
  %1893 = vst.msk [vmem:[%s7 + $0x1c] sm:$0xf] %vm1885, %v1828
  %1894 = vst.msk [vmem:[%s7 + $0x20] sm:$0xf] %vm1885, %v1829
  %1895 = vst.msk [vmem:[%s7 + $0x24] sm:$0xf] %vm1885, %v1830
  %1896 = vst.msk [vmem:[%s7 + $0x28] sm:$0xf] %vm1885, %v1831
  %1897 = vst.msk [vmem:[%s7 + $0x2c] sm:$0xf] %vm1885, %v1832
  %1898 = vst.msk [vmem:[%s7 + $0x30] sm:$0xf] %vm1885, %v1833
  %1899 = vst.msk [vmem:[%s7 + $0x34] sm:$0xf] %vm1885, %v1834
  %1900 = vst.msk [vmem:[%s7 + $0x38] sm:$0xf] %vm1885, %v1835
  %1901 = vst.msk [vmem:[%s7 + $0x3c] sm:$0xf] %vm1885, %v1836
  %1902 = vst.msk [vmem:[%s7 + $0x40] sm:$0xf] %vm1885, %v1837
  %1903 = vst.msk [vmem:[%s7 + $0x44] sm:$0xf] %vm1885, %v1838
  %1904 = vst.msk [vmem:[%s7 + $0x48] sm:$0xf] %vm1885, %v1839
  %1905 = vst.msk [vmem:[%s7 + $0x4c] sm:$0xf] %vm1885, %v1840
  %1906 = vst.msk [vmem:[%s7 + $0x50] sm:$0xf] %vm1885, %v1841
  %1907 = vst.msk [vmem:[%s7 + $0x54] sm:$0xf] %vm1885, %v1842
  %1908 = vst.msk [vmem:[%s7 + $0x58] sm:$0xf] %vm1885, %v1843
  %1909 = vst.msk [vmem:[%s7 + $0x5c] sm:$0xf] %vm1885, %v1844
  %1910 = vst.msk [vmem:[%s7 + $0x60] sm:$0xf] %vm1885, %v1845
  %1911 = vst.msk [vmem:[%s7 + $0x64] sm:$0xf] %vm1885, %v1846
  %1912 = vst.msk [vmem:[%s7 + $0x68] sm:$0xf] %vm1885, %v1847
  %1913 = vst.msk [vmem:[%s7 + $0x6c] sm:$0xf] %vm1885, %v1848
  %1914 = vst.msk [vmem:[%s7 + $0x70] sm:$0xf] %vm1885, %v1849
  %1915 = vst.msk [vmem:[%s7 + $0x74] sm:$0xf] %vm1885, %v1850
  %1916 = vst.msk [vmem:[%s7 + $0x78] sm:$0xf] %vm1885, %v1851
  %1917 = vst.msk [vmem:[%s7 + $0x7c] sm:$0xf] %vm1885, %v1852
  %vm1918 = vcmask 130048
  %1919 = vst.msk [vmem:[#allocation3] sm:$0xff] %vm1918, 0.0
  %1920 = vst.msk [vmem:[#allocation3 + $0x8] sm:$0xff] %vm1918, 0.0
  %vm1921 = vcmask 123904
  %1922 = vst.msk [vmem:[#allocation3 + $0x10] sm:$0x3] %vm1921, 0.0
  %1923 = vst.msk [vmem:[#allocation3 + $0x18] sm:$0xff] %vm1918, 0.0
  %1924 = vst.msk [vmem:[#allocation3 + $0x20] sm:$0xff] %vm1918, 0.0
  %1925 = vst.msk [vmem:[#allocation3 + $0x28] sm:$0x3] %vm1921, 0.0
  %1926 = vst.msk [vmem:[#allocation3 + $0x30] sm:$0xff] %vm1918, 0.0
  %1927 = vst.msk [vmem:[#allocation3 + $0x38] sm:$0xff] %vm1918, 0.0
  %1928 = vst.msk [vmem:[#allocation3 + $0x40] sm:$0x3] %vm1921, 0.0
  %1929 = vst.msk [vmem:[#allocation3 + $0x48] sm:$0xff] %vm1918, 0.0
  %1930 = vst.msk [vmem:[#allocation3 + $0x50] sm:$0xff] %vm1918, 0.0
  %1931 = vst.msk [vmem:[#allocation3 + $0x58] sm:$0x3] %vm1921, 0.0
  %1932 = vst.msk [vmem:[#allocation3 + $0x60] sm:$0xff] %vm1918, 0.0
  %1933 = vst.msk [vmem:[#allocation3 + $0x68] sm:$0xff] %vm1918, 0.0
  %1934 = vst.msk [vmem:[#allocation3 + $0x70] sm:$0x3] %vm1921, 0.0
  %1935 = vst.msk [vmem:[#allocation3 + $0x78] sm:$0xff] %vm1918, 0.0
  %1936 = vst.msk [vmem:[#allocation3 + $0x80] sm:$0xff] %vm1918, 0.0
  %1937 = vst.msk [vmem:[#allocation3 + $0x88] sm:$0x3] %vm1921, 0.0
  %1938 = vst.msk [vmem:[#allocation3 + $0x90] sm:$0xff] %vm1918, 0.0
  %1939 = vst.msk [vmem:[#allocation3 + $0x98] sm:$0xff] %vm1918, 0.0
  %1940 = vst.msk [vmem:[#allocation3 + $0xa0] sm:$0x3] %vm1921, 0.0
  %1941 = vst.msk [vmem:[#allocation3 + $0xa8] sm:$0xff] %vm1918, 0.0
  %1942 = vst.msk [vmem:[#allocation3 + $0xb0] sm:$0xff] %vm1918, 0.0
  %1943 = vst.msk [vmem:[#allocation3 + $0xb8] sm:$0x3] %vm1921, 0.0
  %1944 = vst.msk [vmem:[#allocation3 + $0xc0] sm:$0xff] %vm1918, 0.0
  %1945 = vst.msk [vmem:[#allocation3 + $0xc8] sm:$0xff] %vm1918, 0.0
  %1946 = vst.msk [vmem:[#allocation3 + $0xd0] sm:$0x3] %vm1921, 0.0
  %1947 = vst.msk [vmem:[#allocation3 + $0xd8] sm:$0xff] %vm1918, 0.0
  %1948 = vst.msk [vmem:[#allocation3 + $0xe0] sm:$0xff] %vm1918, 0.0
  %1949 = vst.msk [vmem:[#allocation3 + $0xe8] sm:$0x3] %vm1921, 0.0
  %1950 = vst.msk [vmem:[#allocation3 + $0xf0] sm:$0xff] %vm1918, 0.0
  %1951 = vst.msk [vmem:[#allocation3 + $0xf8] sm:$0xff] %vm1918, 0.0
  %1952 = vst.msk [vmem:[#allocation3 + $0x100] sm:$0x3] %vm1921, 0.0
  %1953 = vst.msk [vmem:[#allocation3 + $0x108] sm:$0xff] %vm1918, 0.0
  %1954 = vst.msk [vmem:[#allocation3 + $0x110] sm:$0xff] %vm1918, 0.0
  %1955 = vst.msk [vmem:[#allocation3 + $0x118] sm:$0x3] %vm1921, 0.0
  %1956 = vst.msk [vmem:[#allocation3 + $0x120] sm:$0xff] %vm1918, 0.0
  %1957 = vst.msk [vmem:[#allocation3 + $0x128] sm:$0xff] %vm1918, 0.0
  %1958 = vst.msk [vmem:[#allocation3 + $0x130] sm:$0x3] %vm1921, 0.0
  %1959 = vst.msk [vmem:[#allocation3 + $0x138] sm:$0xff] %vm1918, 0.0
  %1960 = vst.msk [vmem:[#allocation3 + $0x140] sm:$0xff] %vm1918, 0.0
  %1961 = vst.msk [vmem:[#allocation3 + $0x148] sm:$0x3] %vm1921, 0.0
  %1962 = vst.msk [vmem:[#allocation3 + $0x150] sm:$0xff] %vm1918, 0.0
  %1963 = vst.msk [vmem:[#allocation3 + $0x158] sm:$0xff] %vm1918, 0.0
  %1964 = vst.msk [vmem:[#allocation3 + $0x160] sm:$0x3] %vm1921, 0.0
  %1965 = vst.msk [vmem:[#allocation3 + $0x168] sm:$0xff] %vm1918, 0.0
  %1966 = vst.msk [vmem:[#allocation3 + $0x170] sm:$0xff] %vm1918, 0.0
  %1967 = vst.msk [vmem:[#allocation3 + $0x178] sm:$0x3] %vm1921, 0.0
  %1968 = vst.msk [vmem:[#allocation3 + $0x180] sm:$0xff] %vm1918, 0.0
  %1969 = vst.msk [vmem:[#allocation3 + $0x188] sm:$0xff] %vm1918, 0.0
  %1970 = vst.msk [vmem:[#allocation3 + $0x190] sm:$0x3] %vm1921, 0.0
  %1971 = vst.msk [vmem:[#allocation3 + $0x198] sm:$0xff] %vm1918, 0.0
  %1972 = vst.msk [vmem:[#allocation3 + $0x1a0] sm:$0xff] %vm1918, 0.0
  %1973 = vst.msk [vmem:[#allocation3 + $0x1a8] sm:$0x3] %vm1921, 0.0
  %s1974 = scalar_lea.vmem [#allocation3], 24
  %1975 = vst.msk [vmem:[%s1974 + $0x1] sm:$0xff] %vm1918, %v1725
  %1976 = vst.msk [vmem:[%s1974 + $0x9] sm:$0xff] %vm1918, %v1726
  %1977 = vst.msk [vmem:[%s1974 + $0x19] sm:$0xff] %vm1918, %v1727
  %1978 = vst.msk [vmem:[%s1974 + $0x21] sm:$0xff] %vm1918, %v1728
  %1979 = vst.msk [vmem:[%s1974 + $0x31] sm:$0xff] %vm1918, %v1729
  %1980 = vst.msk [vmem:[%s1974 + $0x39] sm:$0xff] %vm1918, %v1730
  %1981 = vst.msk [vmem:[%s1974 + $0x49] sm:$0xff] %vm1918, %v1731
  %1982 = vst.msk [vmem:[%s1974 + $0x51] sm:$0xff] %vm1918, %v1732
  %1983 = vst.msk [vmem:[%s1974 + $0x61] sm:$0xff] %vm1918, %v1733
  %1984 = vst.msk [vmem:[%s1974 + $0x69] sm:$0xff] %vm1918, %v1734
  %1985 = vst.msk [vmem:[%s1974 + $0x79] sm:$0xff] %vm1918, %v1735
  %1986 = vst.msk [vmem:[%s1974 + $0x81] sm:$0xff] %vm1918, %v1736
  %1987 = vst.msk [vmem:[%s1974 + $0x91] sm:$0xff] %vm1918, %v1737
  %1988 = vst.msk [vmem:[%s1974 + $0x99] sm:$0xff] %vm1918, %v1738
  %1989 = vst.msk [vmem:[%s1974 + $0xa9] sm:$0xff] %vm1918, %v1739
  %1990 = vst.msk [vmem:[%s1974 + $0xb1] sm:$0xff] %vm1918, %v1740
  %1991 = vst.msk [vmem:[%s1974 + $0xc1] sm:$0xff] %vm1918, %v1741
  %1992 = vst.msk [vmem:[%s1974 + $0xc9] sm:$0xff] %vm1918, %v1742
  %1993 = vst.msk [vmem:[%s1974 + $0xd9] sm:$0xff] %vm1918, %v1743
  %1994 = vst.msk [vmem:[%s1974 + $0xe1] sm:$0xff] %vm1918, %v1744
  %1995 = vst.msk [vmem:[%s1974 + $0xf1] sm:$0xff] %vm1918, %v1745
  %1996 = vst.msk [vmem:[%s1974 + $0xf9] sm:$0xff] %vm1918, %v1746
  %1997 = vst.msk [vmem:[%s1974 + $0x109] sm:$0xff] %vm1918, %v1747
  %1998 = vst.msk [vmem:[%s1974 + $0x111] sm:$0xff] %vm1918, %v1748
  %1999 = vst.msk [vmem:[%s1974 + $0x121] sm:$0xff] %vm1918, %v1749
  %2000 = vst.msk [vmem:[%s1974 + $0x129] sm:$0xff] %vm1918, %v1750
  %2001 = vst.msk [vmem:[%s1974 + $0x139] sm:$0xff] %vm1918, %v1751
  %2002 = vst.msk [vmem:[%s1974 + $0x141] sm:$0xff] %vm1918, %v1752
  %2003 = vst.msk [vmem:[%s1974 + $0x151] sm:$0xff] %vm1918, %v1753
  %2004 = vst.msk [vmem:[%s1974 + $0x159] sm:$0xff] %vm1918, %v1754
  %2005 = vst.msk [vmem:[%s1974 + $0x169] sm:$0xff] %vm1918, %v1755
  %2006 = vst.msk [vmem:[%s1974 + $0x171] sm:$0xff] %vm1918, %v1756
  %v2007 = vld [vmem:[#allocation3] sm:$0xff]
  %v2008 = vld [vmem:[#allocation3 + $0x8] sm:$0xff]
  %v2009 = vld [vmem:[#allocation3 + $0x10] sm:$0x3]
  %v2010 = vld [vmem:[#allocation3 + $0x18] sm:$0xff]
  %v2011 = vld [vmem:[#allocation3 + $0x20] sm:$0xff]
  %v2012 = vld [vmem:[#allocation3 + $0x28] sm:$0x3]
  %v2013 = vld [vmem:[#allocation3 + $0x30] sm:$0xff]
  %v2014 = vld [vmem:[#allocation3 + $0x38] sm:$0xff]
  %v2015 = vld [vmem:[#allocation3 + $0x40] sm:$0x3]
  %v2016 = vld [vmem:[#allocation3 + $0x48] sm:$0xff]
  %v2017 = vld [vmem:[#allocation3 + $0x50] sm:$0xff]
  %v2018 = vld [vmem:[#allocation3 + $0x58] sm:$0x3]
  %v2019 = vld [vmem:[#allocation3 + $0x60] sm:$0xff]
  %v2020 = vld [vmem:[#allocation3 + $0x68] sm:$0xff]
  %v2021 = vld [vmem:[#allocation3 + $0x70] sm:$0x3]
  %v2022 = vld [vmem:[#allocation3 + $0x78] sm:$0xff]
  %v2023 = vld [vmem:[#allocation3 + $0x80] sm:$0xff]
  %v2024 = vld [vmem:[#allocation3 + $0x88] sm:$0x3]
  %v2025 = vld [vmem:[#allocation3 + $0x90] sm:$0xff]
  %v2026 = vld [vmem:[#allocation3 + $0x98] sm:$0xff]
  %v2027 = vld [vmem:[#allocation3 + $0xa0] sm:$0x3]
  %v2028 = vld [vmem:[#allocation3 + $0xa8] sm:$0xff]
  %v2029 = vld [vmem:[#allocation3 + $0xb0] sm:$0xff]
  %v2030 = vld [vmem:[#allocation3 + $0xb8] sm:$0x3]
  %v2031 = vld [vmem:[#allocation3 + $0xc0] sm:$0xff]
  %v2032 = vld [vmem:[#allocation3 + $0xc8] sm:$0xff]
  %v2033 = vld [vmem:[#allocation3 + $0xd0] sm:$0x3]
  %v2034 = vld [vmem:[#allocation3 + $0xd8] sm:$0xff]
  %v2035 = vld [vmem:[#allocation3 + $0xe0] sm:$0xff]
  %v2036 = vld [vmem:[#allocation3 + $0xe8] sm:$0x3]
  %v2037 = vld [vmem:[#allocation3 + $0xf0] sm:$0xff]
  %v2038 = vld [vmem:[#allocation3 + $0xf8] sm:$0xff]
  %v2039 = vld [vmem:[#allocation3 + $0x100] sm:$0x3]
  %v2040 = vld [vmem:[#allocation3 + $0x108] sm:$0xff]
  %v2041 = vld [vmem:[#allocation3 + $0x110] sm:$0xff]
  %v2042 = vld [vmem:[#allocation3 + $0x118] sm:$0x3]
  %v2043 = vld [vmem:[#allocation3 + $0x120] sm:$0xff]
  %v2044 = vld [vmem:[#allocation3 + $0x128] sm:$0xff]
  %v2045 = vld [vmem:[#allocation3 + $0x130] sm:$0x3]
  %v2046 = vld [vmem:[#allocation3 + $0x138] sm:$0xff]
  %v2047 = vld [vmem:[#allocation3 + $0x140] sm:$0xff]
  %v2048 = vld [vmem:[#allocation3 + $0x148] sm:$0x3]
  %v2049 = vld [vmem:[#allocation3 + $0x150] sm:$0xff]
  %v2050 = vld [vmem:[#allocation3 + $0x158] sm:$0xff]
  %v2051 = vld [vmem:[#allocation3 + $0x160] sm:$0x3]
  %v2052 = vld [vmem:[#allocation3 + $0x168] sm:$0xff]
  %v2053 = vld [vmem:[#allocation3 + $0x170] sm:$0xff]
  %v2054 = vld [vmem:[#allocation3 + $0x178] sm:$0x3]
  %v2055 = vld [vmem:[#allocation3 + $0x180] sm:$0xff]
  %v2056 = vld [vmem:[#allocation3 + $0x188] sm:$0xff]
  %v2057 = vld [vmem:[#allocation3 + $0x190] sm:$0x3]
  %v2058 = vld [vmem:[#allocation3 + $0x198] sm:$0xff]
  %v2059 = vld [vmem:[#allocation3 + $0x1a0] sm:$0xff]
  %v2060 = vld [vmem:[#allocation3 + $0x1a8] sm:$0x3]
  %v2109 = vrot.slane %v2007, 1
  %v2110 = vrot.slane %v2008, 1
  %v2111 = vsel %vm252, %v2109, %v2110
  %v2112 = vrot.slane %v2009, 1
  %v2113 = vsel %vm252, %v2110, %v2112
  %v2114 = vrot.slane %v2010, 1
  %v2115 = vrot.slane %v2011, 1
  %v2116 = vsel %vm252, %v2114, %v2115
  %v2117 = vrot.slane %v2012, 1
  %v2118 = vsel %vm252, %v2115, %v2117
  %v2119 = vrot.slane %v2013, 1
  %v2120 = vrot.slane %v2014, 1
  %v2121 = vsel %vm252, %v2119, %v2120
  %v2122 = vrot.slane %v2015, 1
  %v2123 = vsel %vm252, %v2120, %v2122
  %v2124 = vrot.slane %v2016, 1
  %v2125 = vrot.slane %v2017, 1
  %v2126 = vsel %vm252, %v2124, %v2125
  %v2127 = vrot.slane %v2018, 1
  %v2128 = vsel %vm252, %v2125, %v2127
  %v2129 = vrot.slane %v2019, 1
  %v2130 = vrot.slane %v2020, 1
  %v2131 = vsel %vm252, %v2129, %v2130
  %v2132 = vrot.slane %v2021, 1
  %v2133 = vsel %vm252, %v2130, %v2132
  %v2134 = vrot.slane %v2022, 1
  %v2135 = vrot.slane %v2023, 1
  %v2136 = vsel %vm252, %v2134, %v2135
  %v2137 = vrot.slane %v2024, 1
  %v2138 = vsel %vm252, %v2135, %v2137
  %v2139 = vrot.slane %v2025, 1
  %v2140 = vrot.slane %v2026, 1
  %v2141 = vsel %vm252, %v2139, %v2140
  %v2142 = vrot.slane %v2027, 1
  %v2143 = vsel %vm252, %v2140, %v2142
  %v2144 = vrot.slane %v2028, 1
  %v2145 = vrot.slane %v2029, 1
  %v2146 = vsel %vm252, %v2144, %v2145
  %v2147 = vrot.slane %v2030, 1
  %v2148 = vsel %vm252, %v2145, %v2147
  %v2149 = vrot.slane %v2031, 1
  %v2150 = vrot.slane %v2032, 1
  %v2151 = vsel %vm252, %v2149, %v2150
  %v2152 = vrot.slane %v2033, 1
  %v2153 = vsel %vm252, %v2150, %v2152
  %v2154 = vrot.slane %v2034, 1
  %v2155 = vrot.slane %v2035, 1
  %v2156 = vsel %vm252, %v2154, %v2155
  %v2157 = vrot.slane %v2036, 1
  %v2158 = vsel %vm252, %v2155, %v2157
  %v2159 = vrot.slane %v2037, 1
  %v2160 = vrot.slane %v2038, 1
  %v2161 = vsel %vm252, %v2159, %v2160
  %v2162 = vrot.slane %v2039, 1
  %v2163 = vsel %vm252, %v2160, %v2162
  %v2164 = vrot.slane %v2040, 1
  %v2165 = vrot.slane %v2041, 1
  %v2166 = vsel %vm252, %v2164, %v2165
  %v2167 = vrot.slane %v2042, 1
  %v2168 = vsel %vm252, %v2165, %v2167
  %v2169 = vrot.slane %v2043, 1
  %v2170 = vrot.slane %v2044, 1
  %v2171 = vsel %vm252, %v2169, %v2170
  %v2172 = vrot.slane %v2045, 1
  %v2173 = vsel %vm252, %v2170, %v2172
  %v2174 = vrot.slane %v2046, 1
  %v2175 = vrot.slane %v2047, 1
  %v2176 = vsel %vm252, %v2174, %v2175
  %v2177 = vrot.slane %v2048, 1
  %v2178 = vsel %vm252, %v2175, %v2177
  %v2179 = vrot.slane %v2049, 1
  %v2180 = vrot.slane %v2050, 1
  %v2181 = vsel %vm252, %v2179, %v2180
  %v2182 = vrot.slane %v2051, 1
  %v2183 = vsel %vm252, %v2180, %v2182
  %v2184 = vrot.slane %v2052, 1
  %v2185 = vrot.slane %v2053, 1
  %v2186 = vsel %vm252, %v2184, %v2185
  %v2187 = vrot.slane %v2054, 1
  %v2188 = vsel %vm252, %v2185, %v2187
  %v2189 = vrot.slane %v2007, 2
  %v2190 = vrot.slane %v2008, 2
  %v2191 = vsel %vm333, %v2189, %v2190
  %v2192 = vrot.slane %v2009, 2
  %v2193 = vsel %vm333, %v2190, %v2192
  %v2194 = vrot.slane %v2010, 2
  %v2195 = vrot.slane %v2011, 2
  %v2196 = vsel %vm333, %v2194, %v2195
  %v2197 = vrot.slane %v2012, 2
  %v2198 = vsel %vm333, %v2195, %v2197
  %v2199 = vrot.slane %v2013, 2
  %v2200 = vrot.slane %v2014, 2
  %v2201 = vsel %vm333, %v2199, %v2200
  %v2202 = vrot.slane %v2015, 2
  %v2203 = vsel %vm333, %v2200, %v2202
  %v2204 = vrot.slane %v2016, 2
  %v2205 = vrot.slane %v2017, 2
  %v2206 = vsel %vm333, %v2204, %v2205
  %v2207 = vrot.slane %v2018, 2
  %v2208 = vsel %vm333, %v2205, %v2207
  %v2209 = vrot.slane %v2019, 2
  %v2210 = vrot.slane %v2020, 2
  %v2211 = vsel %vm333, %v2209, %v2210
  %v2212 = vrot.slane %v2021, 2
  %v2213 = vsel %vm333, %v2210, %v2212
  %v2214 = vrot.slane %v2022, 2
  %v2215 = vrot.slane %v2023, 2
  %v2216 = vsel %vm333, %v2214, %v2215
  %v2217 = vrot.slane %v2024, 2
  %v2218 = vsel %vm333, %v2215, %v2217
  %v2219 = vrot.slane %v2025, 2
  %v2220 = vrot.slane %v2026, 2
  %v2221 = vsel %vm333, %v2219, %v2220
  %v2222 = vrot.slane %v2027, 2
  %v2223 = vsel %vm333, %v2220, %v2222
  %v2224 = vrot.slane %v2028, 2
  %v2225 = vrot.slane %v2029, 2
  %v2226 = vsel %vm333, %v2224, %v2225
  %v2227 = vrot.slane %v2030, 2
  %v2228 = vsel %vm333, %v2225, %v2227
  %v2229 = vrot.slane %v2031, 2
  %v2230 = vrot.slane %v2032, 2
  %v2231 = vsel %vm333, %v2229, %v2230
  %v2232 = vrot.slane %v2033, 2
  %v2233 = vsel %vm333, %v2230, %v2232
  %v2234 = vrot.slane %v2034, 2
  %v2235 = vrot.slane %v2035, 2
  %v2236 = vsel %vm333, %v2234, %v2235
  %v2237 = vrot.slane %v2036, 2
  %v2238 = vsel %vm333, %v2235, %v2237
  %v2239 = vrot.slane %v2037, 2
  %v2240 = vrot.slane %v2038, 2
  %v2241 = vsel %vm333, %v2239, %v2240
  %v2242 = vrot.slane %v2039, 2
  %v2243 = vsel %vm333, %v2240, %v2242
  %v2244 = vrot.slane %v2040, 2
  %v2245 = vrot.slane %v2041, 2
  %v2246 = vsel %vm333, %v2244, %v2245
  %v2247 = vrot.slane %v2042, 2
  %v2248 = vsel %vm333, %v2245, %v2247
  %v2249 = vrot.slane %v2043, 2
  %v2250 = vrot.slane %v2044, 2
  %v2251 = vsel %vm333, %v2249, %v2250
  %v2252 = vrot.slane %v2045, 2
  %v2253 = vsel %vm333, %v2250, %v2252
  %v2254 = vrot.slane %v2046, 2
  %v2255 = vrot.slane %v2047, 2
  %v2256 = vsel %vm333, %v2254, %v2255
  %v2257 = vrot.slane %v2048, 2
  %v2258 = vsel %vm333, %v2255, %v2257
  %v2259 = vrot.slane %v2049, 2
  %v2260 = vrot.slane %v2050, 2
  %v2261 = vsel %vm333, %v2259, %v2260
  %v2262 = vrot.slane %v2051, 2
  %v2263 = vsel %vm333, %v2260, %v2262
  %v2264 = vrot.slane %v2052, 2
  %v2265 = vrot.slane %v2053, 2
  %v2266 = vsel %vm333, %v2264, %v2265
  %v2267 = vrot.slane %v2054, 2
  %v2268 = vsel %vm333, %v2265, %v2267
  %v2272 = vrot.slane %v2055, 1
  %v2273 = vrot.slane %v2056, 1
  %v2274 = vsel %vm252, %v2272, %v2273
  %v2275 = vrot.slane %v2057, 1
  %v2276 = vsel %vm252, %v2273, %v2275
  %v2277 = vrot.slane %v2055, 2
  %v2278 = vrot.slane %v2056, 2
  %v2279 = vsel %vm333, %v2277, %v2278
  %v2280 = vrot.slane %v2057, 2
  %v2281 = vsel %vm333, %v2278, %v2280
  %v2285 = vrot.slane %v2058, 1
  %v2286 = vrot.slane %v2059, 1
  %v2287 = vsel %vm252, %v2285, %v2286
  %v2288 = vrot.slane %v2060, 1
  %v2289 = vsel %vm252, %v2286, %v2288
  %v2290 = vrot.slane %v2058, 2
  %v2291 = vrot.slane %v2059, 2
  %v2292 = vsel %vm333, %v2290, %v2291
  %v2293 = vrot.slane %v2060, 2
  %v2294 = vsel %vm333, %v2291, %v2293
  %2327 = vrot.lane.b32.xlu0 %v2111, 16
  %v2328 = vpop.permute.xlu0 %2327
  %2329 = vrot.lane.b32.xlu0 %v2113, 16
  %v2330 = vpop.permute.xlu0 %2329
  %2331 = vrot.lane.b32.xlu0 %v2116, 16
  %v2332 = vpop.permute.xlu0 %2331
  %2333 = vrot.lane.b32.xlu0 %v2118, 16
  %v2334 = vpop.permute.xlu0 %2333
  %2335 = vrot.lane.b32.xlu0 %v2121, 16
  %v2336 = vpop.permute.xlu0 %2335
  %2337 = vrot.lane.b32.xlu0 %v2123, 16
  %v2338 = vpop.permute.xlu0 %2337
  %2339 = vrot.lane.b32.xlu0 %v2126, 16
  %v2340 = vpop.permute.xlu0 %2339
  %2341 = vrot.lane.b32.xlu0 %v2128, 16
  %v2342 = vpop.permute.xlu0 %2341
  %2343 = vrot.lane.b32.xlu0 %v2131, 16
  %v2344 = vpop.permute.xlu0 %2343
  %2345 = vrot.lane.b32.xlu0 %v2133, 16
  %v2346 = vpop.permute.xlu0 %2345
  %2347 = vrot.lane.b32.xlu0 %v2136, 16
  %v2348 = vpop.permute.xlu0 %2347
  %2349 = vrot.lane.b32.xlu0 %v2138, 16
  %v2350 = vpop.permute.xlu0 %2349
  %2351 = vrot.lane.b32.xlu0 %v2141, 16
  %v2352 = vpop.permute.xlu0 %2351
  %2353 = vrot.lane.b32.xlu0 %v2143, 16
  %v2354 = vpop.permute.xlu0 %2353
  %2355 = vrot.lane.b32.xlu0 %v2146, 16
  %v2356 = vpop.permute.xlu0 %2355
  %2357 = vrot.lane.b32.xlu0 %v2148, 16
  %v2358 = vpop.permute.xlu0 %2357
  %2359 = vrot.lane.b32.xlu0 %v2151, 16
  %v2360 = vpop.permute.xlu0 %2359
  %2361 = vrot.lane.b32.xlu0 %v2153, 16
  %v2362 = vpop.permute.xlu0 %2361
  %2363 = vrot.lane.b32.xlu0 %v2156, 16
  %v2364 = vpop.permute.xlu0 %2363
  %2365 = vrot.lane.b32.xlu0 %v2158, 16
  %v2366 = vpop.permute.xlu0 %2365
  %2367 = vrot.lane.b32.xlu0 %v2161, 16
  %v2368 = vpop.permute.xlu0 %2367
  %2369 = vrot.lane.b32.xlu0 %v2163, 16
  %v2370 = vpop.permute.xlu0 %2369
  %2371 = vrot.lane.b32.xlu0 %v2166, 16
  %v2372 = vpop.permute.xlu0 %2371
  %2373 = vrot.lane.b32.xlu0 %v2168, 16
  %v2374 = vpop.permute.xlu0 %2373
  %2375 = vrot.lane.b32.xlu0 %v2171, 16
  %v2376 = vpop.permute.xlu0 %2375
  %2377 = vrot.lane.b32.xlu0 %v2173, 16
  %v2378 = vpop.permute.xlu0 %2377
  %2379 = vrot.lane.b32.xlu0 %v2176, 16
  %v2380 = vpop.permute.xlu0 %2379
  %2381 = vrot.lane.b32.xlu0 %v2178, 16
  %v2382 = vpop.permute.xlu0 %2381
  %2383 = vrot.lane.b32.xlu0 %v2181, 16
  %v2384 = vpop.permute.xlu0 %2383
  %2385 = vrot.lane.b32.xlu0 %v2183, 16
  %v2386 = vpop.permute.xlu0 %2385
  %2387 = vrot.lane.b32.xlu0 %v2186, 16
  %v2388 = vpop.permute.xlu0 %2387
  %2389 = vrot.lane.b32.xlu0 %v2188, 16
  %v2390 = vpop.permute.xlu0 %2389
  %2423 = vrot.lane.b32.xlu0 %v2191, 32
  %v2424 = vpop.permute.xlu0 %2423
  %2425 = vrot.lane.b32.xlu0 %v2193, 32
  %v2426 = vpop.permute.xlu0 %2425
  %2427 = vrot.lane.b32.xlu0 %v2196, 32
  %v2428 = vpop.permute.xlu0 %2427
  %2429 = vrot.lane.b32.xlu0 %v2198, 32
  %v2430 = vpop.permute.xlu0 %2429
  %2431 = vrot.lane.b32.xlu0 %v2201, 32
  %v2432 = vpop.permute.xlu0 %2431
  %2433 = vrot.lane.b32.xlu0 %v2203, 32
  %v2434 = vpop.permute.xlu0 %2433
  %2435 = vrot.lane.b32.xlu0 %v2206, 32
  %v2436 = vpop.permute.xlu0 %2435
  %2437 = vrot.lane.b32.xlu0 %v2208, 32
  %v2438 = vpop.permute.xlu0 %2437
  %2439 = vrot.lane.b32.xlu0 %v2211, 32
  %v2440 = vpop.permute.xlu0 %2439
  %2441 = vrot.lane.b32.xlu0 %v2213, 32
  %v2442 = vpop.permute.xlu0 %2441
  %2443 = vrot.lane.b32.xlu0 %v2216, 32
  %v2444 = vpop.permute.xlu0 %2443
  %2445 = vrot.lane.b32.xlu0 %v2218, 32
  %v2446 = vpop.permute.xlu0 %2445
  %2447 = vrot.lane.b32.xlu0 %v2221, 32
  %v2448 = vpop.permute.xlu0 %2447
  %2449 = vrot.lane.b32.xlu0 %v2223, 32
  %v2450 = vpop.permute.xlu0 %2449
  %2451 = vrot.lane.b32.xlu0 %v2226, 32
  %v2452 = vpop.permute.xlu0 %2451
  %2453 = vrot.lane.b32.xlu0 %v2228, 32
  %v2454 = vpop.permute.xlu0 %2453
  %2455 = vrot.lane.b32.xlu0 %v2231, 32
  %v2456 = vpop.permute.xlu0 %2455
  %2457 = vrot.lane.b32.xlu0 %v2233, 32
  %v2458 = vpop.permute.xlu0 %2457
  %2459 = vrot.lane.b32.xlu0 %v2236, 32
  %v2460 = vpop.permute.xlu0 %2459
  %2461 = vrot.lane.b32.xlu0 %v2238, 32
  %v2462 = vpop.permute.xlu0 %2461
  %2463 = vrot.lane.b32.xlu0 %v2241, 32
  %v2464 = vpop.permute.xlu0 %2463
  %2465 = vrot.lane.b32.xlu0 %v2243, 32
  %v2466 = vpop.permute.xlu0 %2465
  %2467 = vrot.lane.b32.xlu0 %v2246, 32
  %v2468 = vpop.permute.xlu0 %2467
  %2469 = vrot.lane.b32.xlu0 %v2248, 32
  %v2470 = vpop.permute.xlu0 %2469
  %2471 = vrot.lane.b32.xlu0 %v2251, 32
  %v2472 = vpop.permute.xlu0 %2471
  %2473 = vrot.lane.b32.xlu0 %v2253, 32
  %v2474 = vpop.permute.xlu0 %2473
  %2475 = vrot.lane.b32.xlu0 %v2256, 32
  %v2476 = vpop.permute.xlu0 %2475
  %2477 = vrot.lane.b32.xlu0 %v2258, 32
  %v2478 = vpop.permute.xlu0 %2477
  %2479 = vrot.lane.b32.xlu0 %v2261, 32
  %v2480 = vpop.permute.xlu0 %2479
  %2481 = vrot.lane.b32.xlu0 %v2263, 32
  %v2482 = vpop.permute.xlu0 %2481
  %2483 = vrot.lane.b32.xlu0 %v2266, 32
  %v2484 = vpop.permute.xlu0 %2483
  %2485 = vrot.lane.b32.xlu0 %v2268, 32
  %v2486 = vpop.permute.xlu0 %2485
  %2519 = vrot.lane.b32.xlu0 %v2010, 48
  %v2520 = vpop.permute.xlu0 %2519
  %2521 = vrot.lane.b32.xlu0 %v2011, 48
  %v2522 = vpop.permute.xlu0 %2521
  %2523 = vrot.lane.b32.xlu0 %v2013, 48
  %v2524 = vpop.permute.xlu0 %2523
  %2525 = vrot.lane.b32.xlu0 %v2014, 48
  %v2526 = vpop.permute.xlu0 %2525
  %2527 = vrot.lane.b32.xlu0 %v2016, 48
  %v2528 = vpop.permute.xlu0 %2527
  %2529 = vrot.lane.b32.xlu0 %v2017, 48
  %v2530 = vpop.permute.xlu0 %2529
  %2531 = vrot.lane.b32.xlu0 %v2019, 48
  %v2532 = vpop.permute.xlu0 %2531
  %2533 = vrot.lane.b32.xlu0 %v2020, 48
  %v2534 = vpop.permute.xlu0 %2533
  %2535 = vrot.lane.b32.xlu0 %v2022, 48
  %v2536 = vpop.permute.xlu0 %2535
  %2537 = vrot.lane.b32.xlu0 %v2023, 48
  %v2538 = vpop.permute.xlu0 %2537
  %2539 = vrot.lane.b32.xlu0 %v2025, 48
  %v2540 = vpop.permute.xlu0 %2539
  %2541 = vrot.lane.b32.xlu0 %v2026, 48
  %v2542 = vpop.permute.xlu0 %2541
  %2543 = vrot.lane.b32.xlu0 %v2028, 48
  %v2544 = vpop.permute.xlu0 %2543
  %2545 = vrot.lane.b32.xlu0 %v2029, 48
  %v2546 = vpop.permute.xlu0 %2545
  %2547 = vrot.lane.b32.xlu0 %v2031, 48
  %v2548 = vpop.permute.xlu0 %2547
  %2549 = vrot.lane.b32.xlu0 %v2032, 48
  %v2550 = vpop.permute.xlu0 %2549
  %2551 = vrot.lane.b32.xlu0 %v2034, 48
  %v2552 = vpop.permute.xlu0 %2551
  %2553 = vrot.lane.b32.xlu0 %v2035, 48
  %v2554 = vpop.permute.xlu0 %2553
  %2555 = vrot.lane.b32.xlu0 %v2037, 48
  %v2556 = vpop.permute.xlu0 %2555
  %2557 = vrot.lane.b32.xlu0 %v2038, 48
  %v2558 = vpop.permute.xlu0 %2557
  %2559 = vrot.lane.b32.xlu0 %v2040, 48
  %v2560 = vpop.permute.xlu0 %2559
  %2561 = vrot.lane.b32.xlu0 %v2041, 48
  %v2562 = vpop.permute.xlu0 %2561
  %2563 = vrot.lane.b32.xlu0 %v2043, 48
  %v2564 = vpop.permute.xlu0 %2563
  %2565 = vrot.lane.b32.xlu0 %v2044, 48
  %v2566 = vpop.permute.xlu0 %2565
  %2567 = vrot.lane.b32.xlu0 %v2046, 48
  %v2568 = vpop.permute.xlu0 %2567
  %2569 = vrot.lane.b32.xlu0 %v2047, 48
  %v2570 = vpop.permute.xlu0 %2569
  %2571 = vrot.lane.b32.xlu0 %v2049, 48
  %v2572 = vpop.permute.xlu0 %2571
  %2573 = vrot.lane.b32.xlu0 %v2050, 48
  %v2574 = vpop.permute.xlu0 %2573
  %2575 = vrot.lane.b32.xlu0 %v2052, 48
  %v2576 = vpop.permute.xlu0 %2575
  %2577 = vrot.lane.b32.xlu0 %v2053, 48
  %v2578 = vpop.permute.xlu0 %2577
  %2579 = vrot.lane.b32.xlu0 %v2055, 48
  %v2580 = vpop.permute.xlu0 %2579
  %2581 = vrot.lane.b32.xlu0 %v2056, 48
  %v2582 = vpop.permute.xlu0 %2581
  %2615 = vrot.lane.b32.xlu0 %v2116, 64
  %v2616 = vpop.permute.xlu0 %2615
  %2617 = vrot.lane.b32.xlu0 %v2118, 64
  %v2618 = vpop.permute.xlu0 %2617
  %2619 = vrot.lane.b32.xlu0 %v2121, 64
  %v2620 = vpop.permute.xlu0 %2619
  %2621 = vrot.lane.b32.xlu0 %v2123, 64
  %v2622 = vpop.permute.xlu0 %2621
  %2623 = vrot.lane.b32.xlu0 %v2126, 64
  %v2624 = vpop.permute.xlu0 %2623
  %2625 = vrot.lane.b32.xlu0 %v2128, 64
  %v2626 = vpop.permute.xlu0 %2625
  %2627 = vrot.lane.b32.xlu0 %v2131, 64
  %v2628 = vpop.permute.xlu0 %2627
  %2629 = vrot.lane.b32.xlu0 %v2133, 64
  %v2630 = vpop.permute.xlu0 %2629
  %2631 = vrot.lane.b32.xlu0 %v2136, 64
  %v2632 = vpop.permute.xlu0 %2631
  %2633 = vrot.lane.b32.xlu0 %v2138, 64
  %v2634 = vpop.permute.xlu0 %2633
  %2635 = vrot.lane.b32.xlu0 %v2141, 64
  %v2636 = vpop.permute.xlu0 %2635
  %2637 = vrot.lane.b32.xlu0 %v2143, 64
  %v2638 = vpop.permute.xlu0 %2637
  %2639 = vrot.lane.b32.xlu0 %v2146, 64
  %v2640 = vpop.permute.xlu0 %2639
  %2641 = vrot.lane.b32.xlu0 %v2148, 64
  %v2642 = vpop.permute.xlu0 %2641
  %2643 = vrot.lane.b32.xlu0 %v2151, 64
  %v2644 = vpop.permute.xlu0 %2643
  %2645 = vrot.lane.b32.xlu0 %v2153, 64
  %v2646 = vpop.permute.xlu0 %2645
  %2647 = vrot.lane.b32.xlu0 %v2156, 64
  %v2648 = vpop.permute.xlu0 %2647
  %2649 = vrot.lane.b32.xlu0 %v2158, 64
  %v2650 = vpop.permute.xlu0 %2649
  %2651 = vrot.lane.b32.xlu0 %v2161, 64
  %v2652 = vpop.permute.xlu0 %2651
  %2653 = vrot.lane.b32.xlu0 %v2163, 64
  %v2654 = vpop.permute.xlu0 %2653
  %2655 = vrot.lane.b32.xlu0 %v2166, 64
  %v2656 = vpop.permute.xlu0 %2655
  %2657 = vrot.lane.b32.xlu0 %v2168, 64
  %v2658 = vpop.permute.xlu0 %2657
  %2659 = vrot.lane.b32.xlu0 %v2171, 64
  %v2660 = vpop.permute.xlu0 %2659
  %2661 = vrot.lane.b32.xlu0 %v2173, 64
  %v2662 = vpop.permute.xlu0 %2661
  %2663 = vrot.lane.b32.xlu0 %v2176, 64
  %v2664 = vpop.permute.xlu0 %2663
  %2665 = vrot.lane.b32.xlu0 %v2178, 64
  %v2666 = vpop.permute.xlu0 %2665
  %2667 = vrot.lane.b32.xlu0 %v2181, 64
  %v2668 = vpop.permute.xlu0 %2667
  %2669 = vrot.lane.b32.xlu0 %v2183, 64
  %v2670 = vpop.permute.xlu0 %2669
  %2671 = vrot.lane.b32.xlu0 %v2186, 64
  %v2672 = vpop.permute.xlu0 %2671
  %2673 = vrot.lane.b32.xlu0 %v2188, 64
  %v2674 = vpop.permute.xlu0 %2673
  %2675 = vrot.lane.b32.xlu0 %v2274, 64
  %v2676 = vpop.permute.xlu0 %2675
  %2677 = vrot.lane.b32.xlu0 %v2276, 64
  %v2678 = vpop.permute.xlu0 %2677
  %2711 = vrot.lane.b32.xlu0 %v2196, 80
  %v2712 = vpop.permute.xlu0 %2711
  %2713 = vrot.lane.b32.xlu0 %v2198, 80
  %v2714 = vpop.permute.xlu0 %2713
  %2715 = vrot.lane.b32.xlu0 %v2201, 80
  %v2716 = vpop.permute.xlu0 %2715
  %2717 = vrot.lane.b32.xlu0 %v2203, 80
  %v2718 = vpop.permute.xlu0 %2717
  %2719 = vrot.lane.b32.xlu0 %v2206, 80
  %v2720 = vpop.permute.xlu0 %2719
  %2721 = vrot.lane.b32.xlu0 %v2208, 80
  %v2722 = vpop.permute.xlu0 %2721
  %2723 = vrot.lane.b32.xlu0 %v2211, 80
  %v2724 = vpop.permute.xlu0 %2723
  %2725 = vrot.lane.b32.xlu0 %v2213, 80
  %v2726 = vpop.permute.xlu0 %2725
  %2727 = vrot.lane.b32.xlu0 %v2216, 80
  %v2728 = vpop.permute.xlu0 %2727
  %2729 = vrot.lane.b32.xlu0 %v2218, 80
  %v2730 = vpop.permute.xlu0 %2729
  %2731 = vrot.lane.b32.xlu0 %v2221, 80
  %v2732 = vpop.permute.xlu0 %2731
  %2733 = vrot.lane.b32.xlu0 %v2223, 80
  %v2734 = vpop.permute.xlu0 %2733
  %2735 = vrot.lane.b32.xlu0 %v2226, 80
  %v2736 = vpop.permute.xlu0 %2735
  %2737 = vrot.lane.b32.xlu0 %v2228, 80
  %v2738 = vpop.permute.xlu0 %2737
  %2739 = vrot.lane.b32.xlu0 %v2231, 80
  %v2740 = vpop.permute.xlu0 %2739
  %2741 = vrot.lane.b32.xlu0 %v2233, 80
  %v2742 = vpop.permute.xlu0 %2741
  %2743 = vrot.lane.b32.xlu0 %v2236, 80
  %v2744 = vpop.permute.xlu0 %2743
  %2745 = vrot.lane.b32.xlu0 %v2238, 80
  %v2746 = vpop.permute.xlu0 %2745
  %2747 = vrot.lane.b32.xlu0 %v2241, 80
  %v2748 = vpop.permute.xlu0 %2747
  %2749 = vrot.lane.b32.xlu0 %v2243, 80
  %v2750 = vpop.permute.xlu0 %2749
  %2751 = vrot.lane.b32.xlu0 %v2246, 80
  %v2752 = vpop.permute.xlu0 %2751
  %2753 = vrot.lane.b32.xlu0 %v2248, 80
  %v2754 = vpop.permute.xlu0 %2753
  %2755 = vrot.lane.b32.xlu0 %v2251, 80
  %v2756 = vpop.permute.xlu0 %2755
  %2757 = vrot.lane.b32.xlu0 %v2253, 80
  %v2758 = vpop.permute.xlu0 %2757
  %2759 = vrot.lane.b32.xlu0 %v2256, 80
  %v2760 = vpop.permute.xlu0 %2759
  %2761 = vrot.lane.b32.xlu0 %v2258, 80
  %v2762 = vpop.permute.xlu0 %2761
  %2763 = vrot.lane.b32.xlu0 %v2261, 80
  %v2764 = vpop.permute.xlu0 %2763
  %2765 = vrot.lane.b32.xlu0 %v2263, 80
  %v2766 = vpop.permute.xlu0 %2765
  %2767 = vrot.lane.b32.xlu0 %v2266, 80
  %v2768 = vpop.permute.xlu0 %2767
  %2769 = vrot.lane.b32.xlu0 %v2268, 80
  %v2770 = vpop.permute.xlu0 %2769
  %2771 = vrot.lane.b32.xlu0 %v2279, 80
  %v2772 = vpop.permute.xlu0 %2771
  %2773 = vrot.lane.b32.xlu0 %v2281, 80
  %v2774 = vpop.permute.xlu0 %2773
  %2807 = vrot.lane.b32.xlu0 %v2013, 96
  %v2808 = vpop.permute.xlu0 %2807
  %2809 = vrot.lane.b32.xlu0 %v2014, 96
  %v2810 = vpop.permute.xlu0 %2809
  %2811 = vrot.lane.b32.xlu0 %v2016, 96
  %v2812 = vpop.permute.xlu0 %2811
  %2813 = vrot.lane.b32.xlu0 %v2017, 96
  %v2814 = vpop.permute.xlu0 %2813
  %2815 = vrot.lane.b32.xlu0 %v2019, 96
  %v2816 = vpop.permute.xlu0 %2815
  %2817 = vrot.lane.b32.xlu0 %v2020, 96
  %v2818 = vpop.permute.xlu0 %2817
  %2819 = vrot.lane.b32.xlu0 %v2022, 96
  %v2820 = vpop.permute.xlu0 %2819
  %2821 = vrot.lane.b32.xlu0 %v2023, 96
  %v2822 = vpop.permute.xlu0 %2821
  %2823 = vrot.lane.b32.xlu0 %v2025, 96
  %v2824 = vpop.permute.xlu0 %2823
  %2825 = vrot.lane.b32.xlu0 %v2026, 96
  %v2826 = vpop.permute.xlu0 %2825
  %2827 = vrot.lane.b32.xlu0 %v2028, 96
  %v2828 = vpop.permute.xlu0 %2827
  %2829 = vrot.lane.b32.xlu0 %v2029, 96
  %v2830 = vpop.permute.xlu0 %2829
  %2831 = vrot.lane.b32.xlu0 %v2031, 96
  %v2832 = vpop.permute.xlu0 %2831
  %2833 = vrot.lane.b32.xlu0 %v2032, 96
  %v2834 = vpop.permute.xlu0 %2833
  %2835 = vrot.lane.b32.xlu0 %v2034, 96
  %v2836 = vpop.permute.xlu0 %2835
  %2837 = vrot.lane.b32.xlu0 %v2035, 96
  %v2838 = vpop.permute.xlu0 %2837
  %2839 = vrot.lane.b32.xlu0 %v2037, 96
  %v2840 = vpop.permute.xlu0 %2839
  %2841 = vrot.lane.b32.xlu0 %v2038, 96
  %v2842 = vpop.permute.xlu0 %2841
  %2843 = vrot.lane.b32.xlu0 %v2040, 96
  %v2844 = vpop.permute.xlu0 %2843
  %2845 = vrot.lane.b32.xlu0 %v2041, 96
  %v2846 = vpop.permute.xlu0 %2845
  %2847 = vrot.lane.b32.xlu0 %v2043, 96
  %v2848 = vpop.permute.xlu0 %2847
  %2849 = vrot.lane.b32.xlu0 %v2044, 96
  %v2850 = vpop.permute.xlu0 %2849
  %2851 = vrot.lane.b32.xlu0 %v2046, 96
  %v2852 = vpop.permute.xlu0 %2851
  %2853 = vrot.lane.b32.xlu0 %v2047, 96
  %v2854 = vpop.permute.xlu0 %2853
  %2855 = vrot.lane.b32.xlu0 %v2049, 96
  %v2856 = vpop.permute.xlu0 %2855
  %2857 = vrot.lane.b32.xlu0 %v2050, 96
  %v2858 = vpop.permute.xlu0 %2857
  %2859 = vrot.lane.b32.xlu0 %v2052, 96
  %v2860 = vpop.permute.xlu0 %2859
  %2861 = vrot.lane.b32.xlu0 %v2053, 96
  %v2862 = vpop.permute.xlu0 %2861
  %2863 = vrot.lane.b32.xlu0 %v2055, 96
  %v2864 = vpop.permute.xlu0 %2863
  %2865 = vrot.lane.b32.xlu0 %v2056, 96
  %v2866 = vpop.permute.xlu0 %2865
  %2867 = vrot.lane.b32.xlu0 %v2058, 96
  %v2868 = vpop.permute.xlu0 %2867
  %2869 = vrot.lane.b32.xlu0 %v2059, 96
  %v2870 = vpop.permute.xlu0 %2869
  %2903 = vrot.lane.b32.xlu0 %v2121, 112
  %v2904 = vpop.permute.xlu0 %2903
  %2905 = vrot.lane.b32.xlu0 %v2123, 112
  %v2906 = vpop.permute.xlu0 %2905
  %2907 = vrot.lane.b32.xlu0 %v2126, 112
  %v2908 = vpop.permute.xlu0 %2907
  %2909 = vrot.lane.b32.xlu0 %v2128, 112
  %v2910 = vpop.permute.xlu0 %2909
  %2911 = vrot.lane.b32.xlu0 %v2131, 112
  %v2912 = vpop.permute.xlu0 %2911
  %2913 = vrot.lane.b32.xlu0 %v2133, 112
  %v2914 = vpop.permute.xlu0 %2913
  %2915 = vrot.lane.b32.xlu0 %v2136, 112
  %v2916 = vpop.permute.xlu0 %2915
  %2917 = vrot.lane.b32.xlu0 %v2138, 112
  %v2918 = vpop.permute.xlu0 %2917
  %2919 = vrot.lane.b32.xlu0 %v2141, 112
  %v2920 = vpop.permute.xlu0 %2919
  %2921 = vrot.lane.b32.xlu0 %v2143, 112
  %v2922 = vpop.permute.xlu0 %2921
  %2923 = vrot.lane.b32.xlu0 %v2146, 112
  %v2924 = vpop.permute.xlu0 %2923
  %2925 = vrot.lane.b32.xlu0 %v2148, 112
  %v2926 = vpop.permute.xlu0 %2925
  %2927 = vrot.lane.b32.xlu0 %v2151, 112
  %v2928 = vpop.permute.xlu0 %2927
  %2929 = vrot.lane.b32.xlu0 %v2153, 112
  %v2930 = vpop.permute.xlu0 %2929
  %2931 = vrot.lane.b32.xlu0 %v2156, 112
  %v2932 = vpop.permute.xlu0 %2931
  %2933 = vrot.lane.b32.xlu0 %v2158, 112
  %v2934 = vpop.permute.xlu0 %2933
  %2935 = vrot.lane.b32.xlu0 %v2161, 112
  %v2936 = vpop.permute.xlu0 %2935
  %2937 = vrot.lane.b32.xlu0 %v2163, 112
  %v2938 = vpop.permute.xlu0 %2937
  %2939 = vrot.lane.b32.xlu0 %v2166, 112
  %v2940 = vpop.permute.xlu0 %2939
  %2941 = vrot.lane.b32.xlu0 %v2168, 112
  %v2942 = vpop.permute.xlu0 %2941
  %2943 = vrot.lane.b32.xlu0 %v2171, 112
  %v2944 = vpop.permute.xlu0 %2943
  %2945 = vrot.lane.b32.xlu0 %v2173, 112
  %v2946 = vpop.permute.xlu0 %2945
  %2947 = vrot.lane.b32.xlu0 %v2176, 112
  %v2948 = vpop.permute.xlu0 %2947
  %2949 = vrot.lane.b32.xlu0 %v2178, 112
  %v2950 = vpop.permute.xlu0 %2949
  %2951 = vrot.lane.b32.xlu0 %v2181, 112
  %v2952 = vpop.permute.xlu0 %2951
  %2953 = vrot.lane.b32.xlu0 %v2183, 112
  %v2954 = vpop.permute.xlu0 %2953
  %2955 = vrot.lane.b32.xlu0 %v2186, 112
  %v2956 = vpop.permute.xlu0 %2955
  %2957 = vrot.lane.b32.xlu0 %v2188, 112
  %v2958 = vpop.permute.xlu0 %2957
  %2959 = vrot.lane.b32.xlu0 %v2274, 112
  %v2960 = vpop.permute.xlu0 %2959
  %2961 = vrot.lane.b32.xlu0 %v2276, 112
  %v2962 = vpop.permute.xlu0 %2961
  %2963 = vrot.lane.b32.xlu0 %v2287, 112
  %v2964 = vpop.permute.xlu0 %2963
  %2965 = vrot.lane.b32.xlu0 %v2289, 112
  %v2966 = vpop.permute.xlu0 %2965
  %v2999 = vsel %vm1918, %v2007, %v2328
  %v3000 = vsel %vm1918, %v2008, %v2330
  %v3001 = vsel %vm1918, %v2010, %v2332
  %v3002 = vsel %vm1918, %v2011, %v2334
  %v3003 = vsel %vm1918, %v2013, %v2336
  %v3004 = vsel %vm1918, %v2014, %v2338
  %v3005 = vsel %vm1918, %v2016, %v2340
  %v3006 = vsel %vm1918, %v2017, %v2342
  %v3007 = vsel %vm1918, %v2019, %v2344
  %v3008 = vsel %vm1918, %v2020, %v2346
  %v3009 = vsel %vm1918, %v2022, %v2348
  %v3010 = vsel %vm1918, %v2023, %v2350
  %v3011 = vsel %vm1918, %v2025, %v2352
  %v3012 = vsel %vm1918, %v2026, %v2354
  %v3013 = vsel %vm1918, %v2028, %v2356
  %v3014 = vsel %vm1918, %v2029, %v2358
  %v3015 = vsel %vm1918, %v2031, %v2360
  %v3016 = vsel %vm1918, %v2032, %v2362
  %v3017 = vsel %vm1918, %v2034, %v2364
  %v3018 = vsel %vm1918, %v2035, %v2366
  %v3019 = vsel %vm1918, %v2037, %v2368
  %v3020 = vsel %vm1918, %v2038, %v2370
  %v3021 = vsel %vm1918, %v2040, %v2372
  %v3022 = vsel %vm1918, %v2041, %v2374
  %v3023 = vsel %vm1918, %v2043, %v2376
  %v3024 = vsel %vm1918, %v2044, %v2378
  %v3025 = vsel %vm1918, %v2046, %v2380
  %v3026 = vsel %vm1918, %v2047, %v2382
  %v3027 = vsel %vm1918, %v2049, %v2384
  %v3028 = vsel %vm1918, %v2050, %v2386
  %v3029 = vsel %vm1918, %v2052, %v2388
  %v3030 = vsel %vm1918, %v2053, %v2390
  %vm3031 = vcmask 261120
  %v3032 = vsel %vm3031, %v2999, %v2424
  %v3033 = vsel %vm3031, %v3000, %v2426
  %v3034 = vsel %vm3031, %v3001, %v2428
  %v3035 = vsel %vm3031, %v3002, %v2430
  %v3036 = vsel %vm3031, %v3003, %v2432
  %v3037 = vsel %vm3031, %v3004, %v2434
  %v3038 = vsel %vm3031, %v3005, %v2436
  %v3039 = vsel %vm3031, %v3006, %v2438
  %v3040 = vsel %vm3031, %v3007, %v2440
  %v3041 = vsel %vm3031, %v3008, %v2442
  %v3042 = vsel %vm3031, %v3009, %v2444
  %v3043 = vsel %vm3031, %v3010, %v2446
  %v3044 = vsel %vm3031, %v3011, %v2448
  %v3045 = vsel %vm3031, %v3012, %v2450
  %v3046 = vsel %vm3031, %v3013, %v2452
  %v3047 = vsel %vm3031, %v3014, %v2454
  %v3048 = vsel %vm3031, %v3015, %v2456
  %v3049 = vsel %vm3031, %v3016, %v2458
  %v3050 = vsel %vm3031, %v3017, %v2460
  %v3051 = vsel %vm3031, %v3018, %v2462
  %v3052 = vsel %vm3031, %v3019, %v2464
  %v3053 = vsel %vm3031, %v3020, %v2466
  %v3054 = vsel %vm3031, %v3021, %v2468
  %v3055 = vsel %vm3031, %v3022, %v2470
  %v3056 = vsel %vm3031, %v3023, %v2472
  %v3057 = vsel %vm3031, %v3024, %v2474
  %v3058 = vsel %vm3031, %v3025, %v2476
  %v3059 = vsel %vm3031, %v3026, %v2478
  %v3060 = vsel %vm3031, %v3027, %v2480
  %v3061 = vsel %vm3031, %v3028, %v2482
  %v3062 = vsel %vm3031, %v3029, %v2484
  %v3063 = vsel %vm3031, %v3030, %v2486
  %vm3064 = vcmask 392192
  %v3065 = vsel %vm3064, %v3032, %v2520
  %v3066 = vsel %vm3064, %v3033, %v2522
  %v3067 = vsel %vm3064, %v3034, %v2524
  %v3068 = vsel %vm3064, %v3035, %v2526
  %v3069 = vsel %vm3064, %v3036, %v2528
  %v3070 = vsel %vm3064, %v3037, %v2530
  %v3071 = vsel %vm3064, %v3038, %v2532
  %v3072 = vsel %vm3064, %v3039, %v2534
  %v3073 = vsel %vm3064, %v3040, %v2536
  %v3074 = vsel %vm3064, %v3041, %v2538
  %v3075 = vsel %vm3064, %v3042, %v2540
  %v3076 = vsel %vm3064, %v3043, %v2542
  %v3077 = vsel %vm3064, %v3044, %v2544
  %v3078 = vsel %vm3064, %v3045, %v2546
  %v3079 = vsel %vm3064, %v3046, %v2548
  %v3080 = vsel %vm3064, %v3047, %v2550
  %v3081 = vsel %vm3064, %v3048, %v2552
  %v3082 = vsel %vm3064, %v3049, %v2554
  %v3083 = vsel %vm3064, %v3050, %v2556
  %v3084 = vsel %vm3064, %v3051, %v2558
  %v3085 = vsel %vm3064, %v3052, %v2560
  %v3086 = vsel %vm3064, %v3053, %v2562
  %v3087 = vsel %vm3064, %v3054, %v2564
  %v3088 = vsel %vm3064, %v3055, %v2566
  %v3089 = vsel %vm3064, %v3056, %v2568
  %v3090 = vsel %vm3064, %v3057, %v2570
  %v3091 = vsel %vm3064, %v3058, %v2572
  %v3092 = vsel %vm3064, %v3059, %v2574
  %v3093 = vsel %vm3064, %v3060, %v2576
  %v3094 = vsel %vm3064, %v3061, %v2578
  %v3095 = vsel %vm3064, %v3062, %v2580
  %v3096 = vsel %vm3064, %v3063, %v2582
  %vm3097 = vcmask 523264
  %v3098 = vsel %vm3097, %v3065, %v2616
  %v3099 = vsel %vm3097, %v3066, %v2618
  %v3100 = vsel %vm3097, %v3067, %v2620
  %v3101 = vsel %vm3097, %v3068, %v2622
  %v3102 = vsel %vm3097, %v3069, %v2624
  %v3103 = vsel %vm3097, %v3070, %v2626
  %v3104 = vsel %vm3097, %v3071, %v2628
  %v3105 = vsel %vm3097, %v3072, %v2630
  %v3106 = vsel %vm3097, %v3073, %v2632
  %v3107 = vsel %vm3097, %v3074, %v2634
  %v3108 = vsel %vm3097, %v3075, %v2636
  %v3109 = vsel %vm3097, %v3076, %v2638
  %v3110 = vsel %vm3097, %v3077, %v2640
  %v3111 = vsel %vm3097, %v3078, %v2642
  %v3112 = vsel %vm3097, %v3079, %v2644
  %v3113 = vsel %vm3097, %v3080, %v2646
  %v3114 = vsel %vm3097, %v3081, %v2648
  %v3115 = vsel %vm3097, %v3082, %v2650
  %v3116 = vsel %vm3097, %v3083, %v2652
  %v3117 = vsel %vm3097, %v3084, %v2654
  %v3118 = vsel %vm3097, %v3085, %v2656
  %v3119 = vsel %vm3097, %v3086, %v2658
  %v3120 = vsel %vm3097, %v3087, %v2660
  %v3121 = vsel %vm3097, %v3088, %v2662
  %v3122 = vsel %vm3097, %v3089, %v2664
  %v3123 = vsel %vm3097, %v3090, %v2666
  %v3124 = vsel %vm3097, %v3091, %v2668
  %v3125 = vsel %vm3097, %v3092, %v2670
  %v3126 = vsel %vm3097, %v3093, %v2672
  %v3127 = vsel %vm3097, %v3094, %v2674
  %v3128 = vsel %vm3097, %v3095, %v2676
  %v3129 = vsel %vm3097, %v3096, %v2678
  %vm3130 = vcmask 654336
  %v3131 = vsel %vm3130, %v3098, %v2712
  %v3132 = vsel %vm3130, %v3099, %v2714
  %v3133 = vsel %vm3130, %v3100, %v2716
  %v3134 = vsel %vm3130, %v3101, %v2718
  %v3135 = vsel %vm3130, %v3102, %v2720
  %v3136 = vsel %vm3130, %v3103, %v2722
  %v3137 = vsel %vm3130, %v3104, %v2724
  %v3138 = vsel %vm3130, %v3105, %v2726
  %v3139 = vsel %vm3130, %v3106, %v2728
  %v3140 = vsel %vm3130, %v3107, %v2730
  %v3141 = vsel %vm3130, %v3108, %v2732
  %v3142 = vsel %vm3130, %v3109, %v2734
  %v3143 = vsel %vm3130, %v3110, %v2736
  %v3144 = vsel %vm3130, %v3111, %v2738
  %v3145 = vsel %vm3130, %v3112, %v2740
  %v3146 = vsel %vm3130, %v3113, %v2742
  %v3147 = vsel %vm3130, %v3114, %v2744
  %v3148 = vsel %vm3130, %v3115, %v2746
  %v3149 = vsel %vm3130, %v3116, %v2748
  %v3150 = vsel %vm3130, %v3117, %v2750
  %v3151 = vsel %vm3130, %v3118, %v2752
  %v3152 = vsel %vm3130, %v3119, %v2754
  %v3153 = vsel %vm3130, %v3120, %v2756
  %v3154 = vsel %vm3130, %v3121, %v2758
  %v3155 = vsel %vm3130, %v3122, %v2760
  %v3156 = vsel %vm3130, %v3123, %v2762
  %v3157 = vsel %vm3130, %v3124, %v2764
  %v3158 = vsel %vm3130, %v3125, %v2766
  %v3159 = vsel %vm3130, %v3126, %v2768
  %v3160 = vsel %vm3130, %v3127, %v2770
  %v3161 = vsel %vm3130, %v3128, %v2772
  %v3162 = vsel %vm3130, %v3129, %v2774
  %vm3163 = vcmask 785408
  %v3164 = vsel %vm3163, %v3131, %v2808
  %v3165 = vsel %vm3163, %v3132, %v2810
  %v3166 = vsel %vm3163, %v3133, %v2812
  %v3167 = vsel %vm3163, %v3134, %v2814
  %v3168 = vsel %vm3163, %v3135, %v2816
  %v3169 = vsel %vm3163, %v3136, %v2818
  %v3170 = vsel %vm3163, %v3137, %v2820
  %v3171 = vsel %vm3163, %v3138, %v2822
  %v3172 = vsel %vm3163, %v3139, %v2824
  %v3173 = vsel %vm3163, %v3140, %v2826
  %v3174 = vsel %vm3163, %v3141, %v2828
  %v3175 = vsel %vm3163, %v3142, %v2830
  %v3176 = vsel %vm3163, %v3143, %v2832
  %v3177 = vsel %vm3163, %v3144, %v2834
  %v3178 = vsel %vm3163, %v3145, %v2836
  %v3179 = vsel %vm3163, %v3146, %v2838
  %v3180 = vsel %vm3163, %v3147, %v2840
  %v3181 = vsel %vm3163, %v3148, %v2842
  %v3182 = vsel %vm3163, %v3149, %v2844
  %v3183 = vsel %vm3163, %v3150, %v2846
  %v3184 = vsel %vm3163, %v3151, %v2848
  %v3185 = vsel %vm3163, %v3152, %v2850
  %v3186 = vsel %vm3163, %v3153, %v2852
  %v3187 = vsel %vm3163, %v3154, %v2854
  %v3188 = vsel %vm3163, %v3155, %v2856
  %v3189 = vsel %vm3163, %v3156, %v2858
  %v3190 = vsel %vm3163, %v3157, %v2860
  %v3191 = vsel %vm3163, %v3158, %v2862
  %v3192 = vsel %vm3163, %v3159, %v2864
  %v3193 = vsel %vm3163, %v3160, %v2866
  %v3194 = vsel %vm3163, %v3161, %v2868
  %v3195 = vsel %vm3163, %v3162, %v2870
  %vm3196 = vcmask 916480
  %v3197 = vsel %vm3196, %v3164, %v2904
  %v3198 = vsel %vm3196, %v3165, %v2906
  %v3199 = vsel %vm3196, %v3166, %v2908
  %v3200 = vsel %vm3196, %v3167, %v2910
  %v3201 = vsel %vm3196, %v3168, %v2912
  %v3202 = vsel %vm3196, %v3169, %v2914
  %v3203 = vsel %vm3196, %v3170, %v2916
  %v3204 = vsel %vm3196, %v3171, %v2918
  %v3205 = vsel %vm3196, %v3172, %v2920
  %v3206 = vsel %vm3196, %v3173, %v2922
  %v3207 = vsel %vm3196, %v3174, %v2924
  %v3208 = vsel %vm3196, %v3175, %v2926
  %v3209 = vsel %vm3196, %v3176, %v2928
  %v3210 = vsel %vm3196, %v3177, %v2930
  %v3211 = vsel %vm3196, %v3178, %v2932
  %v3212 = vsel %vm3196, %v3179, %v2934
  %v3213 = vsel %vm3196, %v3180, %v2936
  %v3214 = vsel %vm3196, %v3181, %v2938
  %v3215 = vsel %vm3196, %v3182, %v2940
  %v3216 = vsel %vm3196, %v3183, %v2942
  %v3217 = vsel %vm3196, %v3184, %v2944
  %v3218 = vsel %vm3196, %v3185, %v2946
  %v3219 = vsel %vm3196, %v3186, %v2948
  %v3220 = vsel %vm3196, %v3187, %v2950
  %v3221 = vsel %vm3196, %v3188, %v2952
  %v3222 = vsel %vm3196, %v3189, %v2954
  %v3223 = vsel %vm3196, %v3190, %v2956
  %v3224 = vsel %vm3196, %v3191, %v2958
  %v3225 = vsel %vm3196, %v3192, %v2960
  %v3226 = vsel %vm3196, %v3193, %v2962
  %v3227 = vsel %vm3196, %v3194, %v2964
  %v3228 = vsel %vm3196, %v3195, %v2966
  %v3229 = vpack.c.bf16 %v3198, %v3197
  %v3230 = vpack.c.bf16 %v2203, %v2201
  %v3231 = vpack.c.bf16 %v3200, %v3199
  %v3232 = vpack.c.bf16 %v2208, %v2206
  %v3233 = vpack.c.bf16 %v3202, %v3201
  %v3234 = vpack.c.bf16 %v2213, %v2211
  %v3235 = vpack.c.bf16 %v3204, %v3203
  %v3236 = vpack.c.bf16 %v2218, %v2216
  %v3237 = vpack.c.bf16 %v3206, %v3205
  %v3238 = vpack.c.bf16 %v2223, %v2221
  %v3239 = vpack.c.bf16 %v3208, %v3207
  %v3240 = vpack.c.bf16 %v2228, %v2226
  %v3241 = vpack.c.bf16 %v3210, %v3209
  %v3242 = vpack.c.bf16 %v2233, %v2231
  %v3243 = vpack.c.bf16 %v3212, %v3211
  %v3244 = vpack.c.bf16 %v2238, %v2236
  %v3245 = vpack.c.bf16 %v3214, %v3213
  %v3246 = vpack.c.bf16 %v2243, %v2241
  %v3247 = vpack.c.bf16 %v3216, %v3215
  %v3248 = vpack.c.bf16 %v2248, %v2246
  %v3249 = vpack.c.bf16 %v3218, %v3217
  %v3250 = vpack.c.bf16 %v2253, %v2251
  %v3251 = vpack.c.bf16 %v3220, %v3219
  %v3252 = vpack.c.bf16 %v2258, %v2256
  %v3253 = vpack.c.bf16 %v3222, %v3221
  %v3254 = vpack.c.bf16 %v2263, %v2261
  %v3255 = vpack.c.bf16 %v3224, %v3223
  %v3256 = vpack.c.bf16 %v2268, %v2266
  %v3257 = vpack.c.bf16 %v3226, %v3225
  %v3258 = vpack.c.bf16 %v2281, %v2279
  %v3259 = vpack.c.bf16 %v3228, %v3227
  %v3260 = vpack.c.bf16 %v2294, %v2292
  %v3261 = vld [vmem:[%s3] sm:$0xf]
  %v3262 = vld [vmem:[%s3 + $0x4] sm:$0xf]
  %v3263 = vld [vmem:[%s3 + $0x8] sm:$0xf]
  %v3264 = vld [vmem:[%s3 + $0xc] sm:$0xf]
  %v3265 = vld [vmem:[%s3 + $0x10] sm:$0xf]
  %v3266 = vld [vmem:[%s3 + $0x14] sm:$0xf]
  %v3267 = vld [vmem:[%s3 + $0x18] sm:$0xf]
  %v3268 = vld [vmem:[%s3 + $0x1c] sm:$0xf]
  %v3269 = vld [vmem:[%s3 + $0x20] sm:$0xf]
  %v3270 = vld [vmem:[%s3 + $0x24] sm:$0xf]
  %v3271 = vld [vmem:[%s3 + $0x28] sm:$0xf]
  %v3272 = vld [vmem:[%s3 + $0x2c] sm:$0xf]
  %v3273 = vld [vmem:[%s3 + $0x30] sm:$0xf]
  %v3274 = vld [vmem:[%s3 + $0x34] sm:$0xf]
  %v3275 = vld [vmem:[%s3 + $0x38] sm:$0xf]
  %v3276 = vld [vmem:[%s3 + $0x3c] sm:$0xf]
  %v3277 = vld [vmem:[%s3 + $0x40] sm:$0xf]
  %v3278 = vld [vmem:[%s3 + $0x44] sm:$0xf]
  %v3279 = vld [vmem:[%s4] sm:$0x1]
  %v3281 = vlaneseq
  %v3282 = vshrl.u32 %v3281, 7
  %v3283 = vsub.s32 0, %v3282
  %v3284 = vrot.slane %v3279, %v3283
  %v3304 = vunpack.c.l.b16 %v3261
  %v3305 = vunpack.c.l.b16 %v3262
  %v3306 = vunpack.c.l.b16 %v3263
  %v3307 = vunpack.c.l.b16 %v3264
  %v3308 = vunpack.c.l.b16 %v3265
  %v3309 = vunpack.c.l.b16 %v3266
  %v3310 = vunpack.c.l.b16 %v3267
  %v3311 = vunpack.c.l.b16 %v3268
  %v3312 = vunpack.c.l.b16 %v3269
  %v3313 = vunpack.c.l.b16 %v3270
  %v3314 = vunpack.c.l.b16 %v3271
  %v3315 = vunpack.c.l.b16 %v3272
  %v3316 = vunpack.c.l.b16 %v3273
  %v3317 = vunpack.c.l.b16 %v3274
  %v3318 = vunpack.c.l.b16 %v3275
  %v3319 = vunpack.c.l.b16 %v3276
  %v3320 = vunpack.c.l.b16 %v3277
  %v3321 = vunpack.c.l.b16 %v3278
  %v3322 = vpack.c.b16 %v3305, %v3304
  %v3323 = vpack.c.b16 %v3307, %v3306
  %v3324 = vpack.c.b16 %v3309, %v3308
  %v3325 = vpack.c.b16 %v3311, %v3310
  %v3326 = vpack.c.b16 %v3313, %v3312
  %v3327 = vpack.c.b16 %v3315, %v3314
  %v3328 = vpack.c.b16 %v3317, %v3316
  %v3329 = vpack.c.b16 %v3319, %v3318
  %v3330 = vpack.c.b16 %v3321, %v3320
  %v3341 = vsel %vm1918, %v3230, 0
  %v3344 = vsel %vm1918, %v3232, 0
  %v3347 = vsel %vm1918, %v3234, 0
  %v3350 = vsel %vm1918, %v3236, 0
  %v3353 = vsel %vm1918, %v3238, 0
  %v3356 = vsel %vm1918, %v3240, 0
  %v3359 = vsel %vm1918, %v3242, 0
  %v3362 = vsel %vm1918, %v3244, 0
  %v3365 = vsel %vm1918, %v3246, 0
  %v3368 = vsel %vm1918, %v3248, 0
  %v3371 = vsel %vm1918, %v3250, 0
  %v3374 = vsel %vm1918, %v3252, 0
  %v3377 = vsel %vm1918, %v3254, 0
  %v3380 = vsel %vm1918, %v3256, 0
  %v3383 = vsel %vm1918, %v3258, 0
  %v3386 = vsel %vm1918, %v3260, 0
  %3388 = vmatprep.subr.bf16.mxu0 0
  %3389 = vmatpush1.bf16.msra.mxu0 %v3322
  %3390 = vmatprep.subr.bf16.mxu0 0
  %3391 = vmatpush1.bf16.msra.mxu0 %v3323
  %3392 = vmatprep.subr.bf16.mxu0 0
  %3393 = vmatpush1.bf16.msra.mxu0 %v3324
  %3394 = vmatprep.subr.bf16.mxu0 0
  %3395 = vmatpush1.bf16.msra.mxu0 %v3325
  %3396 = vmatprep.subr.bf16.mxu0 0
  %3397 = vmatpush1.bf16.msra.mxu0 %v3326
  %3398 = vmatprep.subr.bf16.mxu0 0
  %3399 = vmatpush1.bf16.msra.mxu0 %v3327
  %3400 = vmatprep.subr.bf16.mxu0 0
  %3401 = vmatpush1.bf16.msra.mxu0 %v3328
  %3402 = vmatprep.subr.bf16.mxu0 0
  %3403 = vmatpush1.bf16.msra.mxu0 %v3329
  %3404 = vmatprep.subr.bf16.mxu0 0
  %3405 = vmatpush1.bf16.msra.mxu0 %v3330
  %3406 = vmatprep.subr.bf16.mxu0 0
  %3407 = vmatpush1.bf16.msra.mxu0 0
  %3408 = vmatprep.subr.bf16.mxu0 0
  %3409 = vmatpush1.bf16.msra.mxu0 0
  %3410 = vmatprep.subr.bf16.mxu0 0
  %3411 = vmatpush1.bf16.msra.mxu0 0
  %3412 = vmatprep.subr.bf16.mxu0 0
  %3413 = vmatpush1.bf16.msra.mxu0 0
  %3414 = vmatprep.subr.bf16.mxu0 0
  %3415 = vmatpush1.bf16.msra.mxu0 0
  %3416 = vmatprep.subr.bf16.mxu0 0
  %3417 = vmatpush1.bf16.msra.mxu0 0
  %3418 = vmatprep.subr.bf16.mxu0 0
  %3419 = vmatpush1.bf16.msra.mxu0 0
  %3420 = vmatprep.mubr.bf16.mxu0 %v3341
  %3421 = vmatmul.mubr.bf16.gmra.mrb[0].mxu0 %v3229
  %v3422 = vpop.f32.mrb[0].mxu0
  %v3423 = vadd.f32 %v3284, %v3422
  %v3424 = vpop.f32.mrb[0].mxu0
  %v3425 = vpop.f32.mrb[0].mxu0
  %v3426 = vadd.f32 %v3284, %v3425
  %v3427 = vpop.f32.mrb[0].mxu0
  %3428 = vmatprep.mubr.bf16.mxu0 %v3344
  %3429 = vmatmul.mubr.bf16.gmra.mrb[0].mxu0 %v3231
  %v3430 = vpop.f32.mrb[0].mxu0
  %v3431 = vadd.f32 %v3284, %v3430
  %v3432 = vpop.f32.mrb[0].mxu0
  %v3433 = vpop.f32.mrb[0].mxu0
  %v3434 = vadd.f32 %v3284, %v3433
  %v3435 = vpop.f32.mrb[0].mxu0
  %3436 = vmatprep.mubr.bf16.mxu0 %v3347
  %3437 = vmatmul.mubr.bf16.gmra.mrb[0].mxu0 %v3233
  %v3438 = vpop.f32.mrb[0].mxu0
  %v3439 = vadd.f32 %v3284, %v3438
  %v3440 = vpop.f32.mrb[0].mxu0
  %v3441 = vpop.f32.mrb[0].mxu0
  %v3442 = vadd.f32 %v3284, %v3441
  %v3443 = vpop.f32.mrb[0].mxu0
  %3444 = vmatprep.mubr.bf16.mxu0 %v3350
  %3445 = vmatmul.mubr.bf16.gmra.mrb[0].mxu0 %v3235
  %v3446 = vpop.f32.mrb[0].mxu0
  %v3447 = vadd.f32 %v3284, %v3446
  %v3448 = vpop.f32.mrb[0].mxu0
  %v3449 = vpop.f32.mrb[0].mxu0
  %v3450 = vadd.f32 %v3284, %v3449
  %v3451 = vpop.f32.mrb[0].mxu0
  %3452 = vmatprep.mubr.bf16.mxu0 %v3353
  %3453 = vmatmul.mubr.bf16.gmra.mrb[0].mxu0 %v3237
  %v3454 = vpop.f32.mrb[0].mxu0
  %v3455 = vadd.f32 %v3284, %v3454
  %v3456 = vpop.f32.mrb[0].mxu0
  %v3457 = vpop.f32.mrb[0].mxu0
  %v3458 = vadd.f32 %v3284, %v3457
  %v3459 = vpop.f32.mrb[0].mxu0
  %3460 = vmatprep.mubr.bf16.mxu0 %v3356
  %3461 = vmatmul.mubr.bf16.gmra.mrb[0].mxu0 %v3239
  %v3462 = vpop.f32.mrb[0].mxu0
  %v3463 = vadd.f32 %v3284, %v3462
  %v3464 = vpop.f32.mrb[0].mxu0
  %v3465 = vpop.f32.mrb[0].mxu0
  %v3466 = vadd.f32 %v3284, %v3465
  %v3467 = vpop.f32.mrb[0].mxu0
  %3468 = vmatprep.mubr.bf16.mxu0 %v3359
  %3469 = vmatmul.mubr.bf16.gmra.mrb[0].mxu0 %v3241
  %v3470 = vpop.f32.mrb[0].mxu0
  %v3471 = vadd.f32 %v3284, %v3470
  %v3472 = vpop.f32.mrb[0].mxu0
  %v3473 = vpop.f32.mrb[0].mxu0
  %v3474 = vadd.f32 %v3284, %v3473
  %v3475 = vpop.f32.mrb[0].mxu0
  %3476 = vmatprep.mubr.bf16.mxu0 %v3362
  %3477 = vmatmul.mubr.bf16.gmra.mrb[0].mxu0 %v3243
  %v3478 = vpop.f32.mrb[0].mxu0
  %v3479 = vadd.f32 %v3284, %v3478
  %v3480 = vpop.f32.mrb[0].mxu0
  %v3481 = vpop.f32.mrb[0].mxu0
  %v3482 = vadd.f32 %v3284, %v3481
  %v3483 = vpop.f32.mrb[0].mxu0
  %3484 = vmatprep.mubr.bf16.mxu0 %v3365
  %3485 = vmatmul.mubr.bf16.gmra.mrb[0].mxu0 %v3245
  %v3486 = vpop.f32.mrb[0].mxu0
  %v3487 = vadd.f32 %v3284, %v3486
  %v3488 = vpop.f32.mrb[0].mxu0
  %v3489 = vpop.f32.mrb[0].mxu0
  %v3490 = vadd.f32 %v3284, %v3489
  %v3491 = vpop.f32.mrb[0].mxu0
  %3492 = vmatprep.mubr.bf16.mxu0 %v3368
  %3493 = vmatmul.mubr.bf16.gmra.mrb[0].mxu0 %v3247
  %v3494 = vpop.f32.mrb[0].mxu0
  %v3495 = vadd.f32 %v3284, %v3494
  %v3496 = vpop.f32.mrb[0].mxu0
  %v3497 = vpop.f32.mrb[0].mxu0
  %v3498 = vadd.f32 %v3284, %v3497
  %v3499 = vpop.f32.mrb[0].mxu0
  %3500 = vmatprep.mubr.bf16.mxu0 %v3371
  %3501 = vmatmul.mubr.bf16.gmra.mrb[0].mxu0 %v3249
  %v3502 = vpop.f32.mrb[0].mxu0
  %v3503 = vadd.f32 %v3284, %v3502
  %v3504 = vpop.f32.mrb[0].mxu0
  %v3505 = vpop.f32.mrb[0].mxu0
  %v3506 = vadd.f32 %v3284, %v3505
  %v3507 = vpop.f32.mrb[0].mxu0
  %3508 = vmatprep.mubr.bf16.mxu0 %v3374
  %3509 = vmatmul.mubr.bf16.gmra.mrb[0].mxu0 %v3251
  %v3510 = vpop.f32.mrb[0].mxu0
  %v3511 = vadd.f32 %v3284, %v3510
  %v3512 = vpop.f32.mrb[0].mxu0
  %v3513 = vpop.f32.mrb[0].mxu0
  %v3514 = vadd.f32 %v3284, %v3513
  %v3515 = vpop.f32.mrb[0].mxu0
  %3516 = vmatprep.mubr.bf16.mxu0 %v3377
  %3517 = vmatmul.mubr.bf16.gmra.mrb[0].mxu0 %v3253
  %v3518 = vpop.f32.mrb[0].mxu0
  %v3519 = vadd.f32 %v3284, %v3518
  %v3520 = vpop.f32.mrb[0].mxu0
  %v3521 = vpop.f32.mrb[0].mxu0
  %v3522 = vadd.f32 %v3284, %v3521
  %v3523 = vpop.f32.mrb[0].mxu0
  %3524 = vmatprep.mubr.bf16.mxu0 %v3380
  %3525 = vmatmul.mubr.bf16.gmra.mrb[0].mxu0 %v3255
  %v3526 = vpop.f32.mrb[0].mxu0
  %v3527 = vadd.f32 %v3284, %v3526
  %v3528 = vpop.f32.mrb[0].mxu0
  %v3529 = vpop.f32.mrb[0].mxu0
  %v3530 = vadd.f32 %v3284, %v3529
  %v3531 = vpop.f32.mrb[0].mxu0
  %3532 = vmatprep.mubr.bf16.mxu0 %v3383
  %3533 = vmatmul.mubr.bf16.gmra.mrb[0].mxu0 %v3257
  %v3534 = vpop.f32.mrb[0].mxu0
  %v3535 = vadd.f32 %v3284, %v3534
  %v3536 = vpop.f32.mrb[0].mxu0
  %v3537 = vpop.f32.mrb[0].mxu0
  %v3538 = vadd.f32 %v3284, %v3537
  %v3539 = vpop.f32.mrb[0].mxu0
  %3540 = vmatprep.mubr.bf16.mxu0 %v3386
  %3541 = vmatmul.mubr.bf16.gmra.mrb[0].mxu0 %v3259
  %v3542 = vpop.f32.mrb[0].mxu0
  %v3543 = vadd.f32 %v3284, %v3542
  %v3544 = vpop.f32.mrb[0].mxu0
  %v3545 = vpop.f32.mrb[0].mxu0
  %v3546 = vadd.f32 %v3284, %v3545
  %v3547 = vpop.f32.mrb[0].mxu0
  %3548 = vdwg.mxu0
  %v3549 = vmax.f32 %v3423, 0.0
  %v3550 = vmax.f32 %v3426, 0.0
  %v3551 = vmax.f32 %v3431, 0.0
  %v3552 = vmax.f32 %v3434, 0.0
  %v3553 = vmax.f32 %v3439, 0.0
  %v3554 = vmax.f32 %v3442, 0.0
  %v3555 = vmax.f32 %v3447, 0.0
  %v3556 = vmax.f32 %v3450, 0.0
  %v3557 = vmax.f32 %v3455, 0.0
  %v3558 = vmax.f32 %v3458, 0.0
  %v3559 = vmax.f32 %v3463, 0.0
  %v3560 = vmax.f32 %v3466, 0.0
  %v3561 = vmax.f32 %v3471, 0.0
  %v3562 = vmax.f32 %v3474, 0.0
  %v3563 = vmax.f32 %v3479, 0.0
  %v3564 = vmax.f32 %v3482, 0.0
  %v3565 = vmax.f32 %v3487, 0.0
  %v3566 = vmax.f32 %v3490, 0.0
  %v3567 = vmax.f32 %v3495, 0.0
  %v3568 = vmax.f32 %v3498, 0.0
  %v3569 = vmax.f32 %v3503, 0.0
  %v3570 = vmax.f32 %v3506, 0.0
  %v3571 = vmax.f32 %v3511, 0.0
  %v3572 = vmax.f32 %v3514, 0.0
  %v3573 = vmax.f32 %v3519, 0.0
  %v3574 = vmax.f32 %v3522, 0.0
  %v3575 = vmax.f32 %v3527, 0.0
  %v3576 = vmax.f32 %v3530, 0.0
  %v3577 = vmax.f32 %v3535, 0.0
  %v3578 = vmax.f32 %v3538, 0.0
  %v3579 = vmax.f32 %v3543, 0.0
  %v3580 = vmax.f32 %v3546, 0.0
  %v3581 = vpack.c.bf16 %v3550, %v3549
  %v3582 = vpack.c.bf16 %v3552, %v3551
  %v3583 = vpack.c.bf16 %v3554, %v3553
  %v3584 = vpack.c.bf16 %v3556, %v3555
  %v3585 = vpack.c.bf16 %v3558, %v3557
  %v3586 = vpack.c.bf16 %v3560, %v3559
  %v3587 = vpack.c.bf16 %v3562, %v3561
  %v3588 = vpack.c.bf16 %v3564, %v3563
  %v3589 = vpack.c.bf16 %v3566, %v3565
  %v3590 = vpack.c.bf16 %v3568, %v3567
  %v3591 = vpack.c.bf16 %v3570, %v3569
  %v3592 = vpack.c.bf16 %v3572, %v3571
  %v3593 = vpack.c.bf16 %v3574, %v3573
  %v3594 = vpack.c.bf16 %v3576, %v3575
  %v3595 = vpack.c.bf16 %v3578, %v3577
  %v3596 = vpack.c.bf16 %v3580, %v3579
  %v3597 = vld [vmem:[%s5] sm:$0xf]
  %v3598 = vld [vmem:[%s5 + $0x4] sm:$0xf]
  %v3599 = vld [vmem:[%s6] sm:$0x1]
  %v3601 = vlaneseq
  %v3602 = vshrl.u32 %v3601, 7
  %v3603 = vsub.s32 0, %v3602
  %v3604 = vrot.slane %v3599, %v3603
  %v3608 = vunpack.c.l.b16 %v3597
  %v3609 = vunpack.c.l.b16 %v3598
  %v3610 = vpack.c.b16 %v3609, %v3608
  %v3613 = vsel %vm1918, %v3581, 0
  %v3616 = vsel %vm1918, %v3582, 0
  %v3619 = vsel %vm1918, %v3583, 0
  %v3622 = vsel %vm1918, %v3584, 0
  %v3625 = vsel %vm1918, %v3585, 0
  %v3628 = vsel %vm1918, %v3586, 0
  %v3631 = vsel %vm1918, %v3587, 0
  %v3634 = vsel %vm1918, %v3588, 0
  %v3637 = vsel %vm1918, %v3589, 0
  %v3640 = vsel %vm1918, %v3590, 0
  %v3643 = vsel %vm1918, %v3591, 0
  %v3646 = vsel %vm1918, %v3592, 0
  %v3649 = vsel %vm1918, %v3593, 0
  %v3652 = vsel %vm1918, %v3594, 0
  %v3655 = vsel %vm1918, %v3595, 0
  %v3658 = vsel %vm1918, %v3596, 0
  %3660 = vmatprep.subr.bf16.mxu0 0
  %3661 = vmatpush1.bf16.msra.mxu0 %v3610
  %3662 = vmatprep.subr.bf16.mxu0 0
  %3663 = vmatpush1.bf16.msra.mxu0 0
  %3664 = vmatprep.subr.bf16.mxu0 0
  %3665 = vmatpush1.bf16.msra.mxu0 0
  %3666 = vmatprep.subr.bf16.mxu0 0
  %3667 = vmatpush1.bf16.msra.mxu0 0
  %3668 = vmatprep.subr.bf16.mxu0 0
  %3669 = vmatpush1.bf16.msra.mxu0 0
  %3670 = vmatprep.subr.bf16.mxu0 0
  %3671 = vmatpush1.bf16.msra.mxu0 0
  %3672 = vmatprep.subr.bf16.mxu0 0
  %3673 = vmatpush1.bf16.msra.mxu0 0
  %3674 = vmatprep.subr.bf16.mxu0 0
  %3675 = vmatpush1.bf16.msra.mxu0 0
  %3676 = vmatprep.subr.bf16.mxu0 0
  %3677 = vmatpush1.bf16.msra.mxu0 0
  %3678 = vmatprep.subr.bf16.mxu0 0
  %3679 = vmatpush1.bf16.msra.mxu0 0
  %3680 = vmatprep.subr.bf16.mxu0 0
  %3681 = vmatpush1.bf16.msra.mxu0 0
  %3682 = vmatprep.subr.bf16.mxu0 0
  %3683 = vmatpush1.bf16.msra.mxu0 0
  %3684 = vmatprep.subr.bf16.mxu0 0
  %3685 = vmatpush1.bf16.msra.mxu0 0
  %3686 = vmatprep.subr.bf16.mxu0 0
  %3687 = vmatpush1.bf16.msra.mxu0 0
  %3688 = vmatprep.subr.bf16.mxu0 0
  %3689 = vmatpush1.bf16.msra.mxu0 0
  %3690 = vmatprep.subr.bf16.mxu0 0
  %3691 = vmatpush1.bf16.msra.mxu0 0
  %3692 = vmatprep.mubr.bf16.mxu0 0
  %3693 = vmatmul.mubr.bf16.gmra.mrb[0].mxu0 %v3613
  %v3694 = vpop.f32.mrb[0].mxu0
  %v3695 = vadd.f32 %v3604, %v3694
  %v3696 = vpop.f32.mrb[0].mxu0
  %v3697 = vpop.f32.mrb[0].mxu0
  %v3698 = vadd.f32 %v3604, %v3697
  %v3699 = vpop.f32.mrb[0].mxu0
  %3700 = vmatprep.mubr.bf16.mxu0 0
  %3701 = vmatmul.mubr.bf16.gmra.mrb[0].mxu0 %v3616
  %v3702 = vpop.f32.mrb[0].mxu0
  %v3703 = vadd.f32 %v3604, %v3702
  %v3704 = vpop.f32.mrb[0].mxu0
  %v3705 = vpop.f32.mrb[0].mxu0
  %v3706 = vadd.f32 %v3604, %v3705
  %v3707 = vpop.f32.mrb[0].mxu0
  %3708 = vmatprep.mubr.bf16.mxu0 0
  %3709 = vmatmul.mubr.bf16.gmra.mrb[0].mxu0 %v3619
  %v3710 = vpop.f32.mrb[0].mxu0
  %v3711 = vadd.f32 %v3604, %v3710
  %v3712 = vpop.f32.mrb[0].mxu0
  %v3713 = vpop.f32.mrb[0].mxu0
  %v3714 = vadd.f32 %v3604, %v3713
  %v3715 = vpop.f32.mrb[0].mxu0
  %3716 = vmatprep.mubr.bf16.mxu0 0
  %3717 = vmatmul.mubr.bf16.gmra.mrb[0].mxu0 %v3622
  %v3718 = vpop.f32.mrb[0].mxu0
  %v3719 = vadd.f32 %v3604, %v3718
  %v3720 = vpop.f32.mrb[0].mxu0
  %v3721 = vpop.f32.mrb[0].mxu0
  %v3722 = vadd.f32 %v3604, %v3721
  %v3723 = vpop.f32.mrb[0].mxu0
  %3724 = vmatprep.mubr.bf16.mxu0 0
  %3725 = vmatmul.mubr.bf16.gmra.mrb[0].mxu0 %v3625
  %v3726 = vpop.f32.mrb[0].mxu0
  %v3727 = vadd.f32 %v3604, %v3726
  %v3728 = vpop.f32.mrb[0].mxu0
  %v3729 = vpop.f32.mrb[0].mxu0
  %v3730 = vadd.f32 %v3604, %v3729
  %v3731 = vpop.f32.mrb[0].mxu0
  %3732 = vmatprep.mubr.bf16.mxu0 0
  %3733 = vmatmul.mubr.bf16.gmra.mrb[0].mxu0 %v3628
  %v3734 = vpop.f32.mrb[0].mxu0
  %v3735 = vadd.f32 %v3604, %v3734
  %v3736 = vpop.f32.mrb[0].mxu0
  %v3737 = vpop.f32.mrb[0].mxu0
  %v3738 = vadd.f32 %v3604, %v3737
  %v3739 = vpop.f32.mrb[0].mxu0
  %3740 = vmatprep.mubr.bf16.mxu0 0
  %3741 = vmatmul.mubr.bf16.gmra.mrb[0].mxu0 %v3631
  %v3742 = vpop.f32.mrb[0].mxu0
  %v3743 = vadd.f32 %v3604, %v3742
  %v3744 = vpop.f32.mrb[0].mxu0
  %v3745 = vpop.f32.mrb[0].mxu0
  %v3746 = vadd.f32 %v3604, %v3745
  %v3747 = vpop.f32.mrb[0].mxu0
  %3748 = vmatprep.mubr.bf16.mxu0 0
  %3749 = vmatmul.mubr.bf16.gmra.mrb[0].mxu0 %v3634
  %v3750 = vpop.f32.mrb[0].mxu0
  %v3751 = vadd.f32 %v3604, %v3750
  %v3752 = vpop.f32.mrb[0].mxu0
  %v3753 = vpop.f32.mrb[0].mxu0
  %v3754 = vadd.f32 %v3604, %v3753
  %v3755 = vpop.f32.mrb[0].mxu0
  %3756 = vmatprep.mubr.bf16.mxu0 0
  %3757 = vmatmul.mubr.bf16.gmra.mrb[0].mxu0 %v3637
  %v3758 = vpop.f32.mrb[0].mxu0
  %v3759 = vadd.f32 %v3604, %v3758
  %v3760 = vpop.f32.mrb[0].mxu0
  %v3761 = vpop.f32.mrb[0].mxu0
  %v3762 = vadd.f32 %v3604, %v3761
  %v3763 = vpop.f32.mrb[0].mxu0
  %3764 = vmatprep.mubr.bf16.mxu0 0
  %3765 = vmatmul.mubr.bf16.gmra.mrb[0].mxu0 %v3640
  %v3766 = vpop.f32.mrb[0].mxu0
  %v3767 = vadd.f32 %v3604, %v3766
  %v3768 = vpop.f32.mrb[0].mxu0
  %v3769 = vpop.f32.mrb[0].mxu0
  %v3770 = vadd.f32 %v3604, %v3769
  %v3771 = vpop.f32.mrb[0].mxu0
  %3772 = vmatprep.mubr.bf16.mxu0 0
  %3773 = vmatmul.mubr.bf16.gmra.mrb[0].mxu0 %v3643
  %v3774 = vpop.f32.mrb[0].mxu0
  %v3775 = vadd.f32 %v3604, %v3774
  %v3776 = vpop.f32.mrb[0].mxu0
  %v3777 = vpop.f32.mrb[0].mxu0
  %v3778 = vadd.f32 %v3604, %v3777
  %v3779 = vpop.f32.mrb[0].mxu0
  %3780 = vmatprep.mubr.bf16.mxu0 0
  %3781 = vmatmul.mubr.bf16.gmra.mrb[0].mxu0 %v3646
  %v3782 = vpop.f32.mrb[0].mxu0
  %v3783 = vadd.f32 %v3604, %v3782
  %v3784 = vpop.f32.mrb[0].mxu0
  %v3785 = vpop.f32.mrb[0].mxu0
  %v3786 = vadd.f32 %v3604, %v3785
  %v3787 = vpop.f32.mrb[0].mxu0
  %3788 = vmatprep.mubr.bf16.mxu0 0
  %3789 = vmatmul.mubr.bf16.gmra.mrb[0].mxu0 %v3649
  %v3790 = vpop.f32.mrb[0].mxu0
  %v3791 = vadd.f32 %v3604, %v3790
  %v3792 = vpop.f32.mrb[0].mxu0
  %v3793 = vpop.f32.mrb[0].mxu0
  %v3794 = vadd.f32 %v3604, %v3793
  %v3795 = vpop.f32.mrb[0].mxu0
  %3796 = vmatprep.mubr.bf16.mxu0 0
  %3797 = vmatmul.mubr.bf16.gmra.mrb[0].mxu0 %v3652
  %v3798 = vpop.f32.mrb[0].mxu0
  %v3799 = vadd.f32 %v3604, %v3798
  %v3800 = vpop.f32.mrb[0].mxu0
  %v3801 = vpop.f32.mrb[0].mxu0
  %v3802 = vadd.f32 %v3604, %v3801
  %v3803 = vpop.f32.mrb[0].mxu0
  %3804 = vmatprep.mubr.bf16.mxu0 0
  %3805 = vmatmul.mubr.bf16.gmra.mrb[0].mxu0 %v3655
  %v3806 = vpop.f32.mrb[0].mxu0
  %v3807 = vadd.f32 %v3604, %v3806
  %v3808 = vpop.f32.mrb[0].mxu0
  %v3809 = vpop.f32.mrb[0].mxu0
  %v3810 = vadd.f32 %v3604, %v3809
  %v3811 = vpop.f32.mrb[0].mxu0
  %3812 = vmatprep.mubr.bf16.mxu0 0
  %3813 = vmatmul.mubr.bf16.gmra.mrb[0].mxu0 %v3658
  %v3814 = vpop.f32.mrb[0].mxu0
  %v3815 = vadd.f32 %v3604, %v3814
  %v3816 = vpop.f32.mrb[0].mxu0
  %v3817 = vpop.f32.mrb[0].mxu0
  %v3818 = vadd.f32 %v3604, %v3817
  %v3819 = vpop.f32.mrb[0].mxu0
  %3820 = vdwg.mxu0
  %3821 = vst.msk [vmem:[%s8] sm:$0xff] %vm1372, %v3695
  %3822 = vst.msk [vmem:[%s8 + $0x8] sm:$0xff] %vm1372, %v3698
  %3823 = vst.msk [vmem:[%s8 + $0x10] sm:$0xff] %vm1372, %v3703
  %3824 = vst.msk [vmem:[%s8 + $0x18] sm:$0xff] %vm1372, %v3706
  %3825 = vst.msk [vmem:[%s8 + $0x20] sm:$0xff] %vm1372, %v3711
  %3826 = vst.msk [vmem:[%s8 + $0x28] sm:$0xff] %vm1372, %v3714
  %3827 = vst.msk [vmem:[%s8 + $0x30] sm:$0xff] %vm1372, %v3719
  %3828 = vst.msk [vmem:[%s8 + $0x38] sm:$0xff] %vm1372, %v3722
  %3829 = vst.msk [vmem:[%s8 + $0x40] sm:$0xff] %vm1372, %v3727
  %3830 = vst.msk [vmem:[%s8 + $0x48] sm:$0xff] %vm1372, %v3730
  %3831 = vst.msk [vmem:[%s8 + $0x50] sm:$0xff] %vm1372, %v3735
  %3832 = vst.msk [vmem:[%s8 + $0x58] sm:$0xff] %vm1372, %v3738
  %3833 = vst.msk [vmem:[%s8 + $0x60] sm:$0xff] %vm1372, %v3743
  %3834 = vst.msk [vmem:[%s8 + $0x68] sm:$0xff] %vm1372, %v3746
  %3835 = vst.msk [vmem:[%s8 + $0x70] sm:$0xff] %vm1372, %v3751
  %3836 = vst.msk [vmem:[%s8 + $0x78] sm:$0xff] %vm1372, %v3754
  %3837 = vst.msk [vmem:[%s8 + $0x80] sm:$0xff] %vm1372, %v3759
  %3838 = vst.msk [vmem:[%s8 + $0x88] sm:$0xff] %vm1372, %v3762
  %3839 = vst.msk [vmem:[%s8 + $0x90] sm:$0xff] %vm1372, %v3767
  %3840 = vst.msk [vmem:[%s8 + $0x98] sm:$0xff] %vm1372, %v3770
  %3841 = vst.msk [vmem:[%s8 + $0xa0] sm:$0xff] %vm1372, %v3775
  %3842 = vst.msk [vmem:[%s8 + $0xa8] sm:$0xff] %vm1372, %v3778
  %3843 = vst.msk [vmem:[%s8 + $0xb0] sm:$0xff] %vm1372, %v3783
  %3844 = vst.msk [vmem:[%s8 + $0xb8] sm:$0xff] %vm1372, %v3786
  %3845 = vst.msk [vmem:[%s8 + $0xc0] sm:$0xff] %vm1372, %v3791
  %3846 = vst.msk [vmem:[%s8 + $0xc8] sm:$0xff] %vm1372, %v3794
  %3847 = vst.msk [vmem:[%s8 + $0xd0] sm:$0xff] %vm1372, %v3799
  %3848 = vst.msk [vmem:[%s8 + $0xd8] sm:$0xff] %vm1372, %v3802
  %3849 = vst.msk [vmem:[%s8 + $0xe0] sm:$0xff] %vm1372, %v3807
  %3850 = vst.msk [vmem:[%s8 + $0xe8] sm:$0xff] %vm1372, %v3810
  %3851 = vst.msk [vmem:[%s8 + $0xf0] sm:$0xff] %vm1372, %v3815
  %3852 = vst.msk [vmem:[%s8 + $0xf8] sm:$0xff] %vm1372, %v3818
  // Predicated region
  $region30: #{faster_rcnn_forward.2} parent=0 // pred_check
    _
  $region31: #{faster_rcnn_forward.2} parent=0 // pred_check_branch
    %3854 = sbr.rel (0) target = $region33
  $region32: #{faster_rcnn_forward.2} parent=0 // pred_region
    _
  $region33: #{faster_rcnn_forward.2} parent=0 // pred_fallthru
    _
  // Predicated region
  $region34: #{faster_rcnn_forward.2} parent=0 // pred_check
    _
  $region35: #{faster_rcnn_forward.2} parent=0 // pred_check_branch
    %3856 = sbr.rel (0) target = $region37
  $region36: #{faster_rcnn_forward.2} parent=0 // pred_region
    _
  $region37: #{faster_rcnn_forward.2} parent=0 // pred_fallthru
    _
  // Predicated region
  $region38: #{faster_rcnn_forward.2} parent=0 // pred_check
    _
  $region39: #{faster_rcnn_forward.2} parent=0 // pred_check_branch
    %3858 = sbr.rel (0) target = $region41
  $region40: #{faster_rcnn_forward.2} parent=0 // pred_region
    _
  $region41: #{faster_rcnn_forward.2} parent=0 // pred_fallthru
    _
  // Predicated region
  $region42: #{faster_rcnn_forward.2} parent=0 // pred_check
    _
  $region43: #{faster_rcnn_forward.2} parent=0 // pred_check_branch
    %3860 = sbr.rel (0) target = $region45
  $region44: #{faster_rcnn_forward.2} parent=0 // pred_region
    _
  $region45: #{faster_rcnn_forward.2} parent=0 // pred_fallthru
    _

// kernel: faster_rcnn_forward.3
$region0: #{faster_rcnn_forward.3}
  #allocation0 [shape = 'u32[]', space=smem, size = 0x4, offset = 0x4, fixed_abs, tag = 'smem constant byte address 0x4 - core index']
  #allocation1 [shape = 'u32[144,128]{1,0:T(1,128)}', space=vmem, size = 0x12000, scoped, tag = 'internal scratch']
  %s0 = inlined_call_operand.vmem [shape: bf16[32,784], index: 0, kind: input, shape index: {}]
  %s1 = inlined_call_operand.vmem [shape: bf16[784,32], index: 1, kind: input, shape index: {}]
  %s2 = inlined_call_operand.vmem [shape: f32[1,32], index: 2, kind: input, shape index: {}]
  %s3 = inlined_call_operand.vmem [shape: bf16[32,32], index: 3, kind: input, shape index: {}]
  %s4 = inlined_call_operand.vmem [shape: f32[1,32], index: 4, kind: input, shape index: {}]
  %s5 = inlined_call_operand.vmem [shape: bf16[32,25], index: 5, kind: input, shape index: {}]
  %s6 = inlined_call_operand.vmem [shape: f32[1,25], index: 6, kind: input, shape index: {}]
  %s7 = inlined_call_operand.vmem [shape: f32[32,25], index: 7, kind: output, shape index: {}]
  %s8 = sld [smem:[#allocation0]]
  $region38: #{faster_rcnn_forward.3} parent=0
    _
  %s10 = ssub.s32 1, %s8
  %s11 = scalar_select 0, %s10, %s8
  // Predicated region
  $region2: #{faster_rcnn_forward.3} parent=0 // pred_check
    _
  $region3: #{faster_rcnn_forward.3} parent=0 // pred_check_branch
    %13 = sbr.rel (0) target = $region5
  $region4: #{faster_rcnn_forward.3} parent=0 // pred_region
    _
  $region5: #{faster_rcnn_forward.3} parent=0 // pred_fallthru
    _
  // Predicated region
  $region6: #{faster_rcnn_forward.3} parent=0 // pred_check
    _
  $region7: #{faster_rcnn_forward.3} parent=0 // pred_check_branch
    %15 = sbr.rel (0) target = $region9
  $region8: #{faster_rcnn_forward.3} parent=0 // pred_region
    _
  $region9: #{faster_rcnn_forward.3} parent=0 // pred_fallthru
    _
  // Predicated region
  $region10: #{faster_rcnn_forward.3} parent=0 // pred_check
    _
  $region11: #{faster_rcnn_forward.3} parent=0 // pred_check_branch
    %17 = sbr.rel (0) target = $region13
  $region12: #{faster_rcnn_forward.3} parent=0 // pred_region
    _
  $region13: #{faster_rcnn_forward.3} parent=0 // pred_fallthru
    _
  // Predicated region
  $region14: #{faster_rcnn_forward.3} parent=0 // pred_check
    _
  $region15: #{faster_rcnn_forward.3} parent=0 // pred_check_branch
    %19 = sbr.rel (0) target = $region17
  $region16: #{faster_rcnn_forward.3} parent=0 // pred_region
    _
  $region17: #{faster_rcnn_forward.3} parent=0 // pred_fallthru
    _
  // Predicated region
  $region18: #{faster_rcnn_forward.3} parent=0 // pred_check
    _
  $region19: #{faster_rcnn_forward.3} parent=0 // pred_check_branch
    %21 = sbr.rel (0) target = $region21
  $region20: #{faster_rcnn_forward.3} parent=0 // pred_region
    _
  $region21: #{faster_rcnn_forward.3} parent=0 // pred_fallthru
    _
  // Predicated region
  $region22: #{faster_rcnn_forward.3} parent=0 // pred_check
    _
  $region23: #{faster_rcnn_forward.3} parent=0 // pred_check_branch
    %23 = sbr.rel (0) target = $region25
  $region24: #{faster_rcnn_forward.3} parent=0 // pred_region
    _
  $region25: #{faster_rcnn_forward.3} parent=0 // pred_fallthru
    _
  // Predicated region
  $region26: #{faster_rcnn_forward.3} parent=0 // pred_check
    _
  $region27: #{faster_rcnn_forward.3} parent=0 // pred_check_branch
    %25 = sbr.rel (0) target = $region29
  $region28: #{faster_rcnn_forward.3} parent=0 // pred_region
    _
  $region29: #{faster_rcnn_forward.3} parent=0 // pred_fallthru
    _
  %v27 = vld [vmem:[%s0] sm:$0xff]
  %v28 = vld [vmem:[%s0 + $0x8] sm:$0xff]
  %v29 = vld [vmem:[%s0 + $0x10] sm:$0xff]
  %v30 = vld [vmem:[%s0 + $0x18] sm:$0xf]
  %v31 = vld [vmem:[%s0 + $0x1c] sm:$0xff]
  %v32 = vld [vmem:[%s0 + $0x24] sm:$0xff]
  %v33 = vld [vmem:[%s0 + $0x2c] sm:$0xff]
  %v34 = vld [vmem:[%s0 + $0x34] sm:$0xf]
  %v35 = vld [vmem:[%s0 + $0x38] sm:$0xff]
  %v36 = vld [vmem:[%s0 + $0x40] sm:$0xff]
  %v37 = vld [vmem:[%s0 + $0x48] sm:$0xff]
  %v38 = vld [vmem:[%s0 + $0x50] sm:$0xf]
  %v39 = vld [vmem:[%s0 + $0x54] sm:$0xff]
  %v40 = vld [vmem:[%s0 + $0x5c] sm:$0xff]
  %v41 = vld [vmem:[%s0 + $0x64] sm:$0xff]
  %v42 = vld [vmem:[%s0 + $0x6c] sm:$0xf]
  %v43 = vld [vmem:[%s1] sm:$0xf]
  %v44 = vld [vmem:[%s1 + $0x4] sm:$0xf]
  %v45 = vld [vmem:[%s1 + $0x8] sm:$0xf]
  %v46 = vld [vmem:[%s1 + $0xc] sm:$0xf]
  %v47 = vld [vmem:[%s1 + $0x10] sm:$0xf]
  %v48 = vld [vmem:[%s1 + $0x14] sm:$0xf]
  %v49 = vld [vmem:[%s1 + $0x18] sm:$0xf]
  %v50 = vld [vmem:[%s1 + $0x1c] sm:$0xf]
  %v51 = vld [vmem:[%s1 + $0x20] sm:$0xf]
  %v52 = vld [vmem:[%s1 + $0x24] sm:$0xf]
  %v53 = vld [vmem:[%s1 + $0x28] sm:$0xf]
  %v54 = vld [vmem:[%s1 + $0x2c] sm:$0xf]
  %v55 = vld [vmem:[%s1 + $0x30] sm:$0xf]
  %v56 = vld [vmem:[%s1 + $0x34] sm:$0xf]
  %v57 = vld [vmem:[%s1 + $0x38] sm:$0xf]
  %v58 = vld [vmem:[%s1 + $0x3c] sm:$0xf]
  %v59 = vld [vmem:[%s1 + $0x40] sm:$0xf]
  %v60 = vld [vmem:[%s1 + $0x44] sm:$0xf]
  %v61 = vld [vmem:[%s1 + $0x48] sm:$0xf]
  %v62 = vld [vmem:[%s1 + $0x4c] sm:$0xf]
  %v63 = vld [vmem:[%s1 + $0x50] sm:$0xf]
  %v64 = vld [vmem:[%s1 + $0x54] sm:$0xf]
  %v65 = vld [vmem:[%s1 + $0x58] sm:$0xf]
  %v66 = vld [vmem:[%s1 + $0x5c] sm:$0xf]
  %v67 = vld [vmem:[%s1 + $0x60] sm:$0xf]
  %v68 = vld [vmem:[%s1 + $0x64] sm:$0xf]
  %v69 = vld [vmem:[%s1 + $0x68] sm:$0xf]
  %v70 = vld [vmem:[%s1 + $0x6c] sm:$0xf]
  %v71 = vld [vmem:[%s1 + $0x70] sm:$0xf]
  %v72 = vld [vmem:[%s1 + $0x74] sm:$0xf]
  %v73 = vld [vmem:[%s1 + $0x78] sm:$0xf]
  %v74 = vld [vmem:[%s1 + $0x7c] sm:$0xf]
  %v75 = vld [vmem:[%s1 + $0x80] sm:$0xf]
  %v76 = vld [vmem:[%s1 + $0x84] sm:$0xf]
  %v77 = vld [vmem:[%s1 + $0x88] sm:$0xf]
  %v78 = vld [vmem:[%s1 + $0x8c] sm:$0xf]
  %v79 = vld [vmem:[%s1 + $0x90] sm:$0xf]
  %v80 = vld [vmem:[%s1 + $0x94] sm:$0xf]
  %v81 = vld [vmem:[%s1 + $0x98] sm:$0xf]
  %v82 = vld [vmem:[%s1 + $0x9c] sm:$0xf]
  %v83 = vld [vmem:[%s1 + $0xa0] sm:$0xf]
  %v84 = vld [vmem:[%s1 + $0xa4] sm:$0xf]
  %v85 = vld [vmem:[%s1 + $0xa8] sm:$0xf]
  %v86 = vld [vmem:[%s1 + $0xac] sm:$0xf]
  %v87 = vld [vmem:[%s1 + $0xb0] sm:$0xf]
  %v88 = vld [vmem:[%s1 + $0xb4] sm:$0xf]
  %v89 = vld [vmem:[%s1 + $0xb8] sm:$0xf]
  %v90 = vld [vmem:[%s1 + $0xbc] sm:$0xf]
  %v91 = vld [vmem:[%s1 + $0xc0] sm:$0xf]
  %v92 = vld [vmem:[%s1 + $0xc4] sm:$0xf]
  %v93 = vld [vmem:[%s1 + $0xc8] sm:$0xf]
  %v94 = vld [vmem:[%s1 + $0xcc] sm:$0xf]
  %v95 = vld [vmem:[%s1 + $0xd0] sm:$0xf]
  %v96 = vld [vmem:[%s1 + $0xd4] sm:$0xf]
  %v97 = vld [vmem:[%s1 + $0xd8] sm:$0xf]
  %v98 = vld [vmem:[%s1 + $0xdc] sm:$0xf]
  %v99 = vld [vmem:[%s1 + $0xe0] sm:$0xf]
  %v100 = vld [vmem:[%s1 + $0xe4] sm:$0xf]
  %v101 = vld [vmem:[%s1 + $0xe8] sm:$0xf]
  %v102 = vld [vmem:[%s1 + $0xec] sm:$0xf]
  %v103 = vld [vmem:[%s1 + $0xf0] sm:$0xf]
  %v104 = vld [vmem:[%s1 + $0xf4] sm:$0xf]
  %v105 = vld [vmem:[%s1 + $0xf8] sm:$0xf]
  %v106 = vld [vmem:[%s1 + $0xfc] sm:$0xf]
  %v107 = vld [vmem:[%s1 + $0x100] sm:$0xf]
  %v108 = vld [vmem:[%s1 + $0x104] sm:$0xf]
  %v109 = vld [vmem:[%s1 + $0x108] sm:$0xf]
  %v110 = vld [vmem:[%s1 + $0x10c] sm:$0xf]
  %v111 = vld [vmem:[%s1 + $0x110] sm:$0xf]
  %v112 = vld [vmem:[%s1 + $0x114] sm:$0xf]
  %v113 = vld [vmem:[%s1 + $0x118] sm:$0xf]
  %v114 = vld [vmem:[%s1 + $0x11c] sm:$0xf]
  %v115 = vld [vmem:[%s1 + $0x120] sm:$0xf]
  %v116 = vld [vmem:[%s1 + $0x124] sm:$0xf]
  %v117 = vld [vmem:[%s1 + $0x128] sm:$0xf]
  %v118 = vld [vmem:[%s1 + $0x12c] sm:$0xf]
  %v119 = vld [vmem:[%s1 + $0x130] sm:$0xf]
  %v120 = vld [vmem:[%s1 + $0x134] sm:$0xf]
  %v121 = vld [vmem:[%s1 + $0x138] sm:$0xf]
  %v122 = vld [vmem:[%s1 + $0x13c] sm:$0xf]
  %v123 = vld [vmem:[%s1 + $0x140] sm:$0xf]
  %v124 = vld [vmem:[%s1 + $0x144] sm:$0xf]
  %v125 = vld [vmem:[%s1 + $0x148] sm:$0xf]
  %v126 = vld [vmem:[%s1 + $0x14c] sm:$0xf]
  %v127 = vld [vmem:[%s1 + $0x150] sm:$0xf]
  %v128 = vld [vmem:[%s1 + $0x154] sm:$0xf]
  %v129 = vld [vmem:[%s1 + $0x158] sm:$0xf]
  %v130 = vld [vmem:[%s1 + $0x15c] sm:$0xf]
  %v131 = vld [vmem:[%s1 + $0x160] sm:$0xf]
  %v132 = vld [vmem:[%s1 + $0x164] sm:$0xf]
  %v133 = vld [vmem:[%s1 + $0x168] sm:$0xf]
  %v134 = vld [vmem:[%s1 + $0x16c] sm:$0xf]
  %v135 = vld [vmem:[%s1 + $0x170] sm:$0xf]
  %v136 = vld [vmem:[%s1 + $0x174] sm:$0xf]
  %v137 = vld [vmem:[%s1 + $0x178] sm:$0xf]
  %v138 = vld [vmem:[%s1 + $0x17c] sm:$0xf]
  %v139 = vld [vmem:[%s1 + $0x180] sm:$0xf]
  %v140 = vld [vmem:[%s1 + $0x184] sm:$0xf]
  %v141 = vld [vmem:[%s2] sm:$0x1]
  %v143 = vlaneseq
  %v144 = vshrl.u32 %v143, 7
  %v145 = vsub.s32 0, %v144
  %v146 = vrot.slane %v141, %v145
  %v164 = vunpack.c.l.b16 %v27
  %v165 = vunpack.c.h.b16 %v27
  %v166 = vunpack.c.l.b16 %v28
  %v167 = vunpack.c.h.b16 %v28
  %v168 = vunpack.c.l.b16 %v29
  %v169 = vunpack.c.h.b16 %v29
  %v170 = vunpack.c.l.b16 %v30
  %v171 = vunpack.c.l.b16 %v31
  %v172 = vunpack.c.h.b16 %v31
  %v173 = vunpack.c.l.b16 %v32
  %v174 = vunpack.c.h.b16 %v32
  %v175 = vunpack.c.l.b16 %v33
  %v176 = vunpack.c.h.b16 %v33
  %v177 = vunpack.c.l.b16 %v34
  %v178 = vunpack.c.l.b16 %v35
  %v179 = vunpack.c.h.b16 %v35
  %v180 = vunpack.c.l.b16 %v36
  %v181 = vunpack.c.h.b16 %v36
  %v182 = vunpack.c.l.b16 %v37
  %v183 = vunpack.c.h.b16 %v37
  %v184 = vunpack.c.l.b16 %v38
  %v185 = vunpack.c.l.b16 %v39
  %v186 = vunpack.c.h.b16 %v39
  %v187 = vunpack.c.l.b16 %v40
  %v188 = vunpack.c.h.b16 %v40
  %v189 = vunpack.c.l.b16 %v41
  %v190 = vunpack.c.h.b16 %v41
  %v191 = vunpack.c.l.b16 %v42
  %v192 = vpack.c.b16 %v171, %v164
  %v193 = vpack.c.b16 %v172, %v165
  %v194 = vpack.c.b16 %v173, %v166
  %v195 = vpack.c.b16 %v174, %v167
  %v196 = vpack.c.b16 %v175, %v168
  %v197 = vpack.c.b16 %v176, %v169
  %v198 = vpack.c.b16 %v177, %v170
  %v199 = vpack.c.b16 %v185, %v178
  %v200 = vpack.c.b16 %v186, %v179
  %v201 = vpack.c.b16 %v187, %v180
  %v202 = vpack.c.b16 %v188, %v181
  %v203 = vpack.c.b16 %v189, %v182
  %v204 = vpack.c.b16 %v190, %v183
  %v205 = vpack.c.b16 %v191, %v184
  %v316 = vunpack.c.l.b16 %v43
  %v317 = vunpack.c.l.b16 %v44
  %v318 = vunpack.c.l.b16 %v45
  %v319 = vunpack.c.l.b16 %v46
  %v320 = vunpack.c.l.b16 %v47
  %v321 = vunpack.c.l.b16 %v48
  %v322 = vunpack.c.l.b16 %v49
  %v323 = vunpack.c.l.b16 %v50
  %v324 = vunpack.c.l.b16 %v51
  %v325 = vunpack.c.l.b16 %v52
  %v326 = vunpack.c.l.b16 %v53
  %v327 = vunpack.c.l.b16 %v54
  %v328 = vunpack.c.l.b16 %v55
  %v329 = vunpack.c.l.b16 %v56
  %v330 = vunpack.c.l.b16 %v57
  %v331 = vunpack.c.l.b16 %v58
  %v332 = vunpack.c.l.b16 %v59
  %v333 = vunpack.c.l.b16 %v60
  %v334 = vunpack.c.l.b16 %v61
  %v335 = vunpack.c.l.b16 %v62
  %v336 = vunpack.c.l.b16 %v63
  %v337 = vunpack.c.l.b16 %v64
  %v338 = vunpack.c.l.b16 %v65
  %v339 = vunpack.c.l.b16 %v66
  %v340 = vunpack.c.l.b16 %v67
  %v341 = vunpack.c.l.b16 %v68
  %v342 = vunpack.c.l.b16 %v69
  %v343 = vunpack.c.l.b16 %v70
  %v344 = vunpack.c.l.b16 %v71
  %v345 = vunpack.c.l.b16 %v72
  %v346 = vunpack.c.l.b16 %v73
  %v347 = vunpack.c.l.b16 %v74
  %v348 = vunpack.c.l.b16 %v75
  %v349 = vunpack.c.l.b16 %v76
  %v350 = vunpack.c.l.b16 %v77
  %v351 = vunpack.c.l.b16 %v78
  %v352 = vunpack.c.l.b16 %v79
  %v353 = vunpack.c.l.b16 %v80
  %v354 = vunpack.c.l.b16 %v81
  %v355 = vunpack.c.l.b16 %v82
  %v356 = vunpack.c.l.b16 %v83
  %v357 = vunpack.c.l.b16 %v84
  %v358 = vunpack.c.l.b16 %v85
  %v359 = vunpack.c.l.b16 %v86
  %v360 = vunpack.c.l.b16 %v87
  %v361 = vunpack.c.l.b16 %v88
  %v362 = vunpack.c.l.b16 %v89
  %v363 = vunpack.c.l.b16 %v90
  %v364 = vunpack.c.l.b16 %v91
  %v365 = vunpack.c.l.b16 %v92
  %v366 = vunpack.c.l.b16 %v93
  %v367 = vunpack.c.l.b16 %v94
  %v368 = vunpack.c.l.b16 %v95
  %v369 = vunpack.c.l.b16 %v96
  %v370 = vunpack.c.l.b16 %v97
  %v371 = vunpack.c.l.b16 %v98
  %v372 = vunpack.c.l.b16 %v99
  %v373 = vunpack.c.l.b16 %v100
  %v374 = vunpack.c.l.b16 %v101
  %v375 = vunpack.c.l.b16 %v102
  %v376 = vunpack.c.l.b16 %v103
  %v377 = vunpack.c.l.b16 %v104
  %v378 = vunpack.c.l.b16 %v105
  %v379 = vunpack.c.l.b16 %v106
  %v380 = vunpack.c.l.b16 %v107
  %v381 = vunpack.c.l.b16 %v108
  %v382 = vunpack.c.l.b16 %v109
  %v383 = vunpack.c.l.b16 %v110
  %v384 = vunpack.c.l.b16 %v111
  %v385 = vunpack.c.l.b16 %v112
  %v386 = vunpack.c.l.b16 %v113
  %v387 = vunpack.c.l.b16 %v114
  %v388 = vunpack.c.l.b16 %v115
  %v389 = vunpack.c.l.b16 %v116
  %v390 = vunpack.c.l.b16 %v117
  %v391 = vunpack.c.l.b16 %v118
  %v392 = vunpack.c.l.b16 %v119
  %v393 = vunpack.c.l.b16 %v120
  %v394 = vunpack.c.l.b16 %v121
  %v395 = vunpack.c.l.b16 %v122
  %v396 = vunpack.c.l.b16 %v123
  %v397 = vunpack.c.l.b16 %v124
  %v398 = vunpack.c.l.b16 %v125
  %v399 = vunpack.c.l.b16 %v126
  %v400 = vunpack.c.l.b16 %v127
  %v401 = vunpack.c.l.b16 %v128
  %v402 = vunpack.c.l.b16 %v129
  %v403 = vunpack.c.l.b16 %v130
  %v404 = vunpack.c.l.b16 %v131
  %v405 = vunpack.c.l.b16 %v132
  %v406 = vunpack.c.l.b16 %v133
  %v407 = vunpack.c.l.b16 %v134
  %v408 = vunpack.c.l.b16 %v135
  %v409 = vunpack.c.l.b16 %v136
  %v410 = vunpack.c.l.b16 %v137
  %v411 = vunpack.c.l.b16 %v138
  %v412 = vunpack.c.l.b16 %v139
  %v413 = vunpack.c.l.b16 %v140
  %v414 = vpack.c.b16 %v317, %v316
  %v415 = vpack.c.b16 %v319, %v318
  %v416 = vpack.c.b16 %v321, %v320
  %v417 = vpack.c.b16 %v323, %v322
  %v418 = vpack.c.b16 %v325, %v324
  %v419 = vpack.c.b16 %v327, %v326
  %v420 = vpack.c.b16 %v329, %v328
  %v421 = vpack.c.b16 %v331, %v330
  %v422 = vpack.c.b16 %v333, %v332
  %v423 = vpack.c.b16 %v335, %v334
  %v424 = vpack.c.b16 %v337, %v336
  %v425 = vpack.c.b16 %v339, %v338
  %v426 = vpack.c.b16 %v341, %v340
  %v427 = vpack.c.b16 %v343, %v342
  %v428 = vpack.c.b16 %v345, %v344
  %v429 = vpack.c.b16 %v347, %v346
  %v430 = vpack.c.b16 %v349, %v348
  %v431 = vpack.c.b16 %v351, %v350
  %v432 = vpack.c.b16 %v353, %v352
  %v433 = vpack.c.b16 %v355, %v354
  %v434 = vpack.c.b16 %v357, %v356
  %v435 = vpack.c.b16 %v359, %v358
  %v436 = vpack.c.b16 %v361, %v360
  %v437 = vpack.c.b16 %v363, %v362
  %v438 = vpack.c.b16 %v365, %v364
  %v439 = vpack.c.b16 %v367, %v366
  %v440 = vpack.c.b16 %v369, %v368
  %v441 = vpack.c.b16 %v371, %v370
  %v442 = vpack.c.b16 %v373, %v372
  %v443 = vpack.c.b16 %v375, %v374
  %v444 = vpack.c.b16 %v377, %v376
  %v445 = vpack.c.b16 %v379, %v378
  %v446 = vpack.c.b16 %v381, %v380
  %v447 = vpack.c.b16 %v383, %v382
  %v448 = vpack.c.b16 %v385, %v384
  %v449 = vpack.c.b16 %v387, %v386
  %v450 = vpack.c.b16 %v389, %v388
  %v451 = vpack.c.b16 %v391, %v390
  %v452 = vpack.c.b16 %v393, %v392
  %v453 = vpack.c.b16 %v395, %v394
  %v454 = vpack.c.b16 %v397, %v396
  %v455 = vpack.c.b16 %v399, %v398
  %v456 = vpack.c.b16 %v401, %v400
  %v457 = vpack.c.b16 %v403, %v402
  %v458 = vpack.c.b16 %v405, %v404
  %v459 = vpack.c.b16 %v407, %v406
  %v460 = vpack.c.b16 %v409, %v408
  %v461 = vpack.c.b16 %v411, %v410
  %v462 = vpack.c.b16 %v413, %v412
  %vm512 = vcmask 130048
  %v514 = vsel %vm512, %v198, 0
  %v517 = vsel %vm512, %v205, 0
  %519 = vmatprep.subr.bf16.mxu0 0
  %520 = vmatpush1.bf16.msra.mxu0 %v414
  %521 = vmatprep.subr.bf16.mxu0 0
  %522 = vmatpush1.bf16.msra.mxu0 %v415
  %523 = vmatprep.subr.bf16.mxu0 0
  %524 = vmatpush1.bf16.msra.mxu0 %v416
  %525 = vmatprep.subr.bf16.mxu0 0
  %526 = vmatpush1.bf16.msra.mxu0 %v417
  %527 = vmatprep.subr.bf16.mxu0 0
  %528 = vmatpush1.bf16.msra.mxu0 %v418
  %529 = vmatprep.subr.bf16.mxu0 0
  %530 = vmatpush1.bf16.msra.mxu0 %v419
  %531 = vmatprep.subr.bf16.mxu0 0
  %532 = vmatpush1.bf16.msra.mxu0 %v420
  %533 = vmatprep.subr.bf16.mxu0 0
  %534 = vmatpush1.bf16.msra.mxu0 %v421
  %535 = vmatprep.subr.bf16.mxu0 0
  %536 = vmatpush1.bf16.msra.mxu0 %v422
  %537 = vmatprep.subr.bf16.mxu0 0
  %538 = vmatpush1.bf16.msra.mxu0 %v423
  %539 = vmatprep.subr.bf16.mxu0 0
  %540 = vmatpush1.bf16.msra.mxu0 %v424
  %541 = vmatprep.subr.bf16.mxu0 0
  %542 = vmatpush1.bf16.msra.mxu0 %v425
  %543 = vmatprep.subr.bf16.mxu0 0
  %544 = vmatpush1.bf16.msra.mxu0 %v426
  %545 = vmatprep.subr.bf16.mxu0 0
  %546 = vmatpush1.bf16.msra.mxu0 %v427
  %547 = vmatprep.subr.bf16.mxu0 0
  %548 = vmatpush1.bf16.msra.mxu0 %v428
  %549 = vmatprep.subr.bf16.mxu0 0
  %550 = vmatpush1.bf16.msra.mxu0 %v429
  %551 = vmatprep.mubr.bf16.mxu0 %v193
  %552 = vmatmul.mubr.bf16.gmra.mrb[0].mxu0 %v192
  %v553 = vpop.f32.mrb[0].mxu0
  %v554 = vadd.f32 %v146, %v553
  %v555 = vpop.f32.mrb[0].mxu0
  %v556 = vpop.f32.mrb[0].mxu0
  %v557 = vadd.f32 %v146, %v556
  %v558 = vpop.f32.mrb[0].mxu0
  %559 = vmatprep.mubr.bf16.mxu0 %v200
  %560 = vmatmul.mubr.bf16.gmra.mrb[0].mxu0 %v199
  %v561 = vpop.f32.mrb[0].mxu0
  %v562 = vadd.f32 %v146, %v561
  %v563 = vpop.f32.mrb[0].mxu0
  %v564 = vpop.f32.mrb[0].mxu0
  %v565 = vadd.f32 %v146, %v564
  %v566 = vpop.f32.mrb[0].mxu0
  %567 = vdwg.mxu0
  %568 = vmatprep.subr.bf16.mxu0 0
  %569 = vmatpush1.bf16.msra.mxu0 %v430
  %570 = vmatprep.subr.bf16.mxu0 0
  %571 = vmatpush1.bf16.msra.mxu0 %v431
  %572 = vmatprep.subr.bf16.mxu0 0
  %573 = vmatpush1.bf16.msra.mxu0 %v432
  %574 = vmatprep.subr.bf16.mxu0 0
  %575 = vmatpush1.bf16.msra.mxu0 %v433
  %576 = vmatprep.subr.bf16.mxu0 0
  %577 = vmatpush1.bf16.msra.mxu0 %v434
  %578 = vmatprep.subr.bf16.mxu0 0
  %579 = vmatpush1.bf16.msra.mxu0 %v435
  %580 = vmatprep.subr.bf16.mxu0 0
  %581 = vmatpush1.bf16.msra.mxu0 %v436
  %582 = vmatprep.subr.bf16.mxu0 0
  %583 = vmatpush1.bf16.msra.mxu0 %v437
  %584 = vmatprep.subr.bf16.mxu0 0
  %585 = vmatpush1.bf16.msra.mxu0 %v438
  %586 = vmatprep.subr.bf16.mxu0 0
  %587 = vmatpush1.bf16.msra.mxu0 %v439
  %588 = vmatprep.subr.bf16.mxu0 0
  %589 = vmatpush1.bf16.msra.mxu0 %v440
  %590 = vmatprep.subr.bf16.mxu0 0
  %591 = vmatpush1.bf16.msra.mxu0 %v441
  %592 = vmatprep.subr.bf16.mxu0 0
  %593 = vmatpush1.bf16.msra.mxu0 %v442
  %594 = vmatprep.subr.bf16.mxu0 0
  %595 = vmatpush1.bf16.msra.mxu0 %v443
  %596 = vmatprep.subr.bf16.mxu0 0
  %597 = vmatpush1.bf16.msra.mxu0 %v444
  %598 = vmatprep.subr.bf16.mxu0 0
  %599 = vmatpush1.bf16.msra.mxu0 %v445
  %600 = vmatprep.mubr.bf16.mxu0 %v195
  %601 = vmatmul.mubr.bf16.gmra.mrb[0].mxu0 %v194
  %v602 = vpop.f32.mrb[0].mxu0
  %v603 = vadd.f32 %v554, %v602
  %v604 = vpop.f32.mrb[0].mxu0
  %v605 = vpop.f32.mrb[0].mxu0
  %v606 = vadd.f32 %v557, %v605
  %v607 = vpop.f32.mrb[0].mxu0
  %608 = vmatprep.mubr.bf16.mxu0 %v202
  %609 = vmatmul.mubr.bf16.gmra.mrb[0].mxu0 %v201
  %v610 = vpop.f32.mrb[0].mxu0
  %v611 = vadd.f32 %v562, %v610
  %v612 = vpop.f32.mrb[0].mxu0
  %v613 = vpop.f32.mrb[0].mxu0
  %v614 = vadd.f32 %v565, %v613
  %v615 = vpop.f32.mrb[0].mxu0
  %616 = vdwg.mxu0
  %617 = vmatprep.subr.bf16.mxu0 0
  %618 = vmatpush1.bf16.msra.mxu0 %v446
  %619 = vmatprep.subr.bf16.mxu0 0
  %620 = vmatpush1.bf16.msra.mxu0 %v447
  %621 = vmatprep.subr.bf16.mxu0 0
  %622 = vmatpush1.bf16.msra.mxu0 %v448
  %623 = vmatprep.subr.bf16.mxu0 0
  %624 = vmatpush1.bf16.msra.mxu0 %v449
  %625 = vmatprep.subr.bf16.mxu0 0
  %626 = vmatpush1.bf16.msra.mxu0 %v450
  %627 = vmatprep.subr.bf16.mxu0 0
  %628 = vmatpush1.bf16.msra.mxu0 %v451
  %629 = vmatprep.subr.bf16.mxu0 0
  %630 = vmatpush1.bf16.msra.mxu0 %v452
  %631 = vmatprep.subr.bf16.mxu0 0
  %632 = vmatpush1.bf16.msra.mxu0 %v453
  %633 = vmatprep.subr.bf16.mxu0 0
  %634 = vmatpush1.bf16.msra.mxu0 %v454
  %635 = vmatprep.subr.bf16.mxu0 0
  %636 = vmatpush1.bf16.msra.mxu0 %v455
  %637 = vmatprep.subr.bf16.mxu0 0
  %638 = vmatpush1.bf16.msra.mxu0 %v456
  %639 = vmatprep.subr.bf16.mxu0 0
  %640 = vmatpush1.bf16.msra.mxu0 %v457
  %641 = vmatprep.subr.bf16.mxu0 0
  %642 = vmatpush1.bf16.msra.mxu0 %v458
  %643 = vmatprep.subr.bf16.mxu0 0
  %644 = vmatpush1.bf16.msra.mxu0 %v459
  %645 = vmatprep.subr.bf16.mxu0 0
  %646 = vmatpush1.bf16.msra.mxu0 %v460
  %647 = vmatprep.subr.bf16.mxu0 0
  %648 = vmatpush1.bf16.msra.mxu0 %v461
  %649 = vmatprep.mubr.bf16.mxu0 %v197
  %650 = vmatmul.mubr.bf16.gmra.mrb[0].mxu0 %v196
  %v651 = vpop.f32.mrb[0].mxu0
  %v652 = vadd.f32 %v603, %v651
  %v653 = vpop.f32.mrb[0].mxu0
  %v654 = vpop.f32.mrb[0].mxu0
  %v655 = vadd.f32 %v606, %v654
  %v656 = vpop.f32.mrb[0].mxu0
  %657 = vmatprep.mubr.bf16.mxu0 %v204
  %658 = vmatmul.mubr.bf16.gmra.mrb[0].mxu0 %v203
  %v659 = vpop.f32.mrb[0].mxu0
  %v660 = vadd.f32 %v611, %v659
  %v661 = vpop.f32.mrb[0].mxu0
  %v662 = vpop.f32.mrb[0].mxu0
  %v663 = vadd.f32 %v614, %v662
  %v664 = vpop.f32.mrb[0].mxu0
  %665 = vdwg.mxu0
  %666 = vmatprep.subr.bf16.mxu0 0
  %667 = vmatpush1.bf16.msra.mxu0 %v462
  %668 = vmatprep.subr.bf16.mxu0 0
  %669 = vmatpush1.bf16.msra.mxu0 0
  %670 = vmatprep.subr.bf16.mxu0 0
  %671 = vmatpush1.bf16.msra.mxu0 0
  %672 = vmatprep.subr.bf16.mxu0 0
  %673 = vmatpush1.bf16.msra.mxu0 0
  %674 = vmatprep.subr.bf16.mxu0 0
  %675 = vmatpush1.bf16.msra.mxu0 0
  %676 = vmatprep.subr.bf16.mxu0 0
  %677 = vmatpush1.bf16.msra.mxu0 0
  %678 = vmatprep.subr.bf16.mxu0 0
  %679 = vmatpush1.bf16.msra.mxu0 0
  %680 = vmatprep.subr.bf16.mxu0 0
  %681 = vmatpush1.bf16.msra.mxu0 0
  %682 = vmatprep.subr.bf16.mxu0 0
  %683 = vmatpush1.bf16.msra.mxu0 0
  %684 = vmatprep.subr.bf16.mxu0 0
  %685 = vmatpush1.bf16.msra.mxu0 0
  %686 = vmatprep.subr.bf16.mxu0 0
  %687 = vmatpush1.bf16.msra.mxu0 0
  %688 = vmatprep.subr.bf16.mxu0 0
  %689 = vmatpush1.bf16.msra.mxu0 0
  %690 = vmatprep.subr.bf16.mxu0 0
  %691 = vmatpush1.bf16.msra.mxu0 0
  %692 = vmatprep.subr.bf16.mxu0 0
  %693 = vmatpush1.bf16.msra.mxu0 0
  %694 = vmatprep.subr.bf16.mxu0 0
  %695 = vmatpush1.bf16.msra.mxu0 0
  %696 = vmatprep.subr.bf16.mxu0 0
  %697 = vmatpush1.bf16.msra.mxu0 0
  %698 = vmatprep.mubr.bf16.mxu0 0
  %699 = vmatmul.mubr.bf16.gmra.mrb[0].mxu0 %v514
  %v700 = vpop.f32.mrb[0].mxu0
  %v701 = vadd.f32 %v652, %v700
  %v702 = vpop.f32.mrb[0].mxu0
  %v703 = vpop.f32.mrb[0].mxu0
  %v704 = vadd.f32 %v655, %v703
  %v705 = vpop.f32.mrb[0].mxu0
  %706 = vmatprep.mubr.bf16.mxu0 0
  %707 = vmatmul.mubr.bf16.gmra.mrb[0].mxu0 %v517
  %v708 = vpop.f32.mrb[0].mxu0
  %v709 = vadd.f32 %v660, %v708
  %v710 = vpop.f32.mrb[0].mxu0
  %v711 = vpop.f32.mrb[0].mxu0
  %v712 = vadd.f32 %v663, %v711
  %v713 = vpop.f32.mrb[0].mxu0
  %714 = vdwg.mxu0
  %v715 = vmax.f32 %v701, 0.0
  %v716 = vmax.f32 %v704, 0.0
  %v717 = vmax.f32 %v709, 0.0
  %v718 = vmax.f32 %v712, 0.0
  %v719 = vpack.c.bf16 %v716, %v715
  %v720 = vpack.c.bf16 %v718, %v717
  %v721 = vld [vmem:[%s3] sm:$0xf]
  %v722 = vld [vmem:[%s3 + $0x4] sm:$0xf]
  %v723 = vld [vmem:[%s3 + $0x8] sm:$0xf]
  %v724 = vld [vmem:[%s3 + $0xc] sm:$0xf]
  %v725 = vld [vmem:[%s4] sm:$0x1]
  %v727 = vlaneseq
  %v728 = vshrl.u32 %v727, 7
  %v729 = vsub.s32 0, %v728
  %v730 = vrot.slane %v725, %v729
  %v736 = vunpack.c.l.b16 %v721
  %v737 = vunpack.c.l.b16 %v722
  %v738 = vunpack.c.l.b16 %v723
  %v739 = vunpack.c.l.b16 %v724
  %v740 = vpack.c.b16 %v737, %v736
  %v741 = vpack.c.b16 %v739, %v738
  %vm744 = vcmask 261120
  %v746 = vsel %vm744, %v719, 0
  %v749 = vsel %vm744, %v720, 0
  %751 = vmatprep.subr.bf16.mxu0 0
  %752 = vmatpush1.bf16.msra.mxu0 %v740
  %753 = vmatprep.subr.bf16.mxu0 0
  %754 = vmatpush1.bf16.msra.mxu0 %v741
  %755 = vmatprep.subr.bf16.mxu0 0
  %756 = vmatpush1.bf16.msra.mxu0 0
  %757 = vmatprep.subr.bf16.mxu0 0
  %758 = vmatpush1.bf16.msra.mxu0 0
  %759 = vmatprep.subr.bf16.mxu0 0
  %760 = vmatpush1.bf16.msra.mxu0 0
  %761 = vmatprep.subr.bf16.mxu0 0
  %762 = vmatpush1.bf16.msra.mxu0 0
  %763 = vmatprep.subr.bf16.mxu0 0
  %764 = vmatpush1.bf16.msra.mxu0 0
  %765 = vmatprep.subr.bf16.mxu0 0
  %766 = vmatpush1.bf16.msra.mxu0 0
  %767 = vmatprep.subr.bf16.mxu0 0
  %768 = vmatpush1.bf16.msra.mxu0 0
  %769 = vmatprep.subr.bf16.mxu0 0
  %770 = vmatpush1.bf16.msra.mxu0 0
  %771 = vmatprep.subr.bf16.mxu0 0
  %772 = vmatpush1.bf16.msra.mxu0 0
  %773 = vmatprep.subr.bf16.mxu0 0
  %774 = vmatpush1.bf16.msra.mxu0 0
  %775 = vmatprep.subr.bf16.mxu0 0
  %776 = vmatpush1.bf16.msra.mxu0 0
  %777 = vmatprep.subr.bf16.mxu0 0
  %778 = vmatpush1.bf16.msra.mxu0 0
  %779 = vmatprep.subr.bf16.mxu0 0
  %780 = vmatpush1.bf16.msra.mxu0 0
  %781 = vmatprep.subr.bf16.mxu0 0
  %782 = vmatpush1.bf16.msra.mxu0 0
  %783 = vmatprep.mubr.bf16.mxu0 0
  %784 = vmatmul.mubr.bf16.gmra.mrb[0].mxu0 %v746
  %v785 = vpop.f32.mrb[0].mxu0
  %v786 = vadd.f32 %v730, %v785
  %v787 = vpop.f32.mrb[0].mxu0
  %v788 = vpop.f32.mrb[0].mxu0
  %v789 = vadd.f32 %v730, %v788
  %v790 = vpop.f32.mrb[0].mxu0
  %791 = vmatprep.mubr.bf16.mxu0 0
  %792 = vmatmul.mubr.bf16.gmra.mrb[0].mxu0 %v749
  %v793 = vpop.f32.mrb[0].mxu0
  %v794 = vadd.f32 %v730, %v793
  %v795 = vpop.f32.mrb[0].mxu0
  %v796 = vpop.f32.mrb[0].mxu0
  %v797 = vadd.f32 %v730, %v796
  %v798 = vpop.f32.mrb[0].mxu0
  %799 = vdwg.mxu0
  %v800 = vmax.f32 %v786, 0.0
  %v801 = vmax.f32 %v789, 0.0
  %v802 = vmax.f32 %v794, 0.0
  %v803 = vmax.f32 %v797, 0.0
  %v804 = vpack.c.bf16 %v801, %v800
  %v805 = vpack.c.bf16 %v803, %v802
  %v806 = vld [vmem:[%s5] sm:$0xf]
  %v807 = vld [vmem:[%s5 + $0x4] sm:$0xf]
  %v808 = vld [vmem:[%s5 + $0x8] sm:$0xf]
  %v809 = vld [vmem:[%s5 + $0xc] sm:$0xf]
  %v810 = vld [vmem:[%s6] sm:$0x1]
  %v812 = vlaneseq
  %v813 = vshrl.u32 %v812, 7
  %v814 = vsub.s32 0, %v813
  %v815 = vrot.slane %v810, %v814
  %v821 = vunpack.c.l.b16 %v806
  %v822 = vunpack.c.l.b16 %v807
  %v823 = vunpack.c.l.b16 %v808
  %v824 = vunpack.c.l.b16 %v809
  %v825 = vpack.c.b16 %v822, %v821
  %v826 = vpack.c.b16 %v824, %v823
  %v830 = vsel %vm744, %v804, 0
  %v833 = vsel %vm744, %v805, 0
  %835 = vmatprep.subr.bf16.mxu0 0
  %836 = vmatpush1.bf16.msra.mxu0 %v825
  %837 = vmatprep.subr.bf16.mxu0 0
  %838 = vmatpush1.bf16.msra.mxu0 %v826
  %839 = vmatprep.subr.bf16.mxu0 0
  %840 = vmatpush1.bf16.msra.mxu0 0
  %841 = vmatprep.subr.bf16.mxu0 0
  %842 = vmatpush1.bf16.msra.mxu0 0
  %843 = vmatprep.subr.bf16.mxu0 0
  %844 = vmatpush1.bf16.msra.mxu0 0
  %845 = vmatprep.subr.bf16.mxu0 0
  %846 = vmatpush1.bf16.msra.mxu0 0
  %847 = vmatprep.subr.bf16.mxu0 0
  %848 = vmatpush1.bf16.msra.mxu0 0
  %849 = vmatprep.subr.bf16.mxu0 0
  %850 = vmatpush1.bf16.msra.mxu0 0
  %851 = vmatprep.subr.bf16.mxu0 0
  %852 = vmatpush1.bf16.msra.mxu0 0
  %853 = vmatprep.subr.bf16.mxu0 0
  %854 = vmatpush1.bf16.msra.mxu0 0
  %855 = vmatprep.subr.bf16.mxu0 0
  %856 = vmatpush1.bf16.msra.mxu0 0
  %857 = vmatprep.subr.bf16.mxu0 0
  %858 = vmatpush1.bf16.msra.mxu0 0
  %859 = vmatprep.subr.bf16.mxu0 0
  %860 = vmatpush1.bf16.msra.mxu0 0
  %861 = vmatprep.subr.bf16.mxu0 0
  %862 = vmatpush1.bf16.msra.mxu0 0
  %863 = vmatprep.subr.bf16.mxu0 0
  %864 = vmatpush1.bf16.msra.mxu0 0
  %865 = vmatprep.subr.bf16.mxu0 0
  %866 = vmatpush1.bf16.msra.mxu0 0
  %867 = vmatprep.mubr.bf16.mxu0 0
  %868 = vmatmul.mubr.bf16.gmra.mrb[0].mxu0 %v830
  %v869 = vpop.f32.mrb[0].mxu0
  %v870 = vadd.f32 %v815, %v869
  %v871 = vpop.f32.mrb[0].mxu0
  %v872 = vpop.f32.mrb[0].mxu0
  %v873 = vadd.f32 %v815, %v872
  %v874 = vpop.f32.mrb[0].mxu0
  %875 = vmatprep.mubr.bf16.mxu0 0
  %876 = vmatmul.mubr.bf16.gmra.mrb[0].mxu0 %v833
  %v877 = vpop.f32.mrb[0].mxu0
  %v878 = vadd.f32 %v815, %v877
  %v879 = vpop.f32.mrb[0].mxu0
  %v880 = vpop.f32.mrb[0].mxu0
  %v881 = vadd.f32 %v815, %v880
  %v882 = vpop.f32.mrb[0].mxu0
  %883 = vdwg.mxu0
  %vm884 = vcmask 203776
  %885 = vst.msk [vmem:[%s7] sm:$0xff] %vm884, %v870
  %886 = vst.msk [vmem:[%s7 + $0x8] sm:$0xff] %vm884, %v873
  %887 = vst.msk [vmem:[%s7 + $0x10] sm:$0xff] %vm884, %v878
  %888 = vst.msk [vmem:[%s7 + $0x18] sm:$0xff] %vm884, %v881
  // Predicated region
  $region30: #{faster_rcnn_forward.3} parent=0 // pred_check
    _
  $region31: #{faster_rcnn_forward.3} parent=0 // pred_check_branch
    %890 = sbr.rel (0) target = $region33
  $region32: #{faster_rcnn_forward.3} parent=0 // pred_region
    _
  $region33: #{faster_rcnn_forward.3} parent=0 // pred_fallthru
    _
  // Predicated region
  $region34: #{faster_rcnn_forward.3} parent=0 // pred_check
    _
  $region35: #{faster_rcnn_forward.3} parent=0 // pred_check_branch
    %892 = sbr.rel (0) target = $region37
  $region36: #{faster_rcnn_forward.3} parent=0 // pred_region
    _
  $region37: #{faster_rcnn_forward.3} parent=0 // pred_fallthru
    _

</llo_original>
